<compile_context>
chip_gen: v7x
topology: tpu7x:2x2x1
jax: 0.10.0
libtpu: 0.0.40
codegen_flags: <defaults>
</compile_context>

<pallas_src>
import functools
import numpy as np
import jax
import jax.numpy as jnp
from jax.experimental import pallas as pl
from jax.experimental.pallas import tpu as pltpu


# ----------------------------- kernel helpers -----------------------------

def _layernorm(x, gamma, beta, eps=1e-5):
    mean = jnp.mean(x, axis=-1, keepdims=True)
    var = jnp.mean((x - mean) ** 2, axis=-1, keepdims=True)
    return (x - mean) * jax.lax.rsqrt(var + eps) * gamma + beta


def _erf(x):
    # Abramowitz & Stegun 7.1.26 rational approximation, |error| <= 1.5e-7.
    # Avoids relying on a lax.erf lowering rule inside Mosaic; uses only
    # exp (EUP) and VPU ops.
    a1, a2, a3, a4, a5 = (0.254829592, -0.284496736, 1.421413741,
                          -1.453152027, 1.061405429)
    p = 0.3275911
    ax = jnp.abs(x)
    t = 1.0 / (1.0 + p * ax)
    poly = ((((a5 * t + a4) * t + a3) * t + a2) * t + a1) * t
    y = 1.0 - poly * jnp.exp(-ax * ax)
    return jnp.where(x < 0, -y, y)


def _gelu_exact(x):
    # Matches torch.nn.GELU() (erf-based, non-approximate) to ~1e-7.
    return 0.5 * x * (1.0 + _erf(x * 0.7071067811865476))


def _pick_seq_tile(n):
    for t in (512, 256, 128):
        if n % t == 0:
            return t
    return n


# ------------------------------- the kernel -------------------------------

def block_ours_kernel(x_ref, wq_ref, wkv_ref, wproj3_ref,
                      bproj_ref, g1_ref, b1_ref, g2_ref, b2_ref,
                      w1_ref, bf1_ref, w2_ref, bf2_ref,
                      outc_ref, outs_ref, outm_ref,
                      q_scr, k_cache, v_cache,
                      *, num_heads, compute_dtype):
    qi = pl.program_id(1)
    tq = outc_ref.shape[1]
    N = x_ref.shape[1]
    C = x_ref.shape[2]
    hd = C // num_heads

    g1 = g1_ref[...]                                              # (1, C)
    b1 = b1_ref[...]

    # ---- once per batch element: norm1 + K/V projection for the full
    #      sequence, stored head-major in VMEM and reused by every Q tile ----
    @pl.when(qi == 0)
    def _():
        h_full = _layernorm(x_ref[0].astype(jnp.float32), g1, b1)
        kv = jnp.dot(h_full.astype(compute_dtype), wkv_ref[...],
                     preferred_element_type=jnp.float32)          # (N, 2C)
        for h in range(num_heads):                                # one-time relayout
            k_cache[h] = kv[:, h * hd:(h + 1) * hd].astype(k_cache.dtype)
            v_cache[h] = kv[:, C + h * hd:C + (h + 1) * hd].astype(v_cache.dtype)

    # ---- per query tile: slice residual rows, norm1 + Q projection ----
    row0 = pl.multiple_of(qi * tq, tq)
    x_q = x_ref[0, pl.ds(row0, tq), :].astype(jnp.float32)        # (TQ, C)
    hq = _layernorm(x_q, g1, b1)
    q2d = jnp.dot(hq.astype(compute_dtype), wq_ref[...],
                  preferred_element_type=jnp.float32)             # (TQ, C), scale folded in
    for h in range(num_heads):                                    # head-major layout
        q_scr[h] = q2d[:, h * hd:(h + 1) * hd].astype(q_scr.dtype)

    qh = q_scr[...]                                               # (H, TQ, hd)
    kh = k_cache[...]                                             # (H, N,  hd)
    vh = v_cache[...]                                             # (H, N,  hd)

    # ---- head-batched logits (scale already in qh) ----
    attn = jnp.einsum('hqd,hkd->hqk', qh, kh,
                      preferred_element_type=jnp.float32)         # (H, TQ, N)

    # ---- dual softmax: softmax(attn) and softmax(-attn), f32, EUP recip ----
    row_max = jnp.max(attn, axis=-1, keepdims=True)
    row_min = jnp.min(attn, axis=-1, keepdims=True)
    e_pos = jnp.exp(attn - row_max)                               # causal numerator
    e_neg = jnp.exp(row_min - attn)                               # spurious numerator
    p_c = e_pos * pl.reciprocal(jnp.sum(e_pos, axis=-1, keepdims=True), approx=True)
    p_s = e_neg * pl.reciprocal(jnp.sum(e_neg, axis=-1, keepdims=True), approx=True)

    # ---- fuse both branches into one PV matmul: (H, 2*TQ, N) x (H, N, hd) ----
    p_both = jnp.concatenate([p_c, p_s], axis=1).astype(compute_dtype)
    o_both = jnp.einsum('hqk,hkd->hqd', p_both, vh,
                        preferred_element_type=jnp.float32)       # (H, 2TQ, hd)

    # ---- shared output projection, head-batched then reduced over heads
    #      (== concat_h(o_h) @ Wproj, without a lane-axis concatenate) ----
    proj_h = jnp.einsum('hqd,hdc->hqc', o_both.astype(compute_dtype),
                        wproj3_ref[...],
                        preferred_element_type=jnp.float32)       # (H, 2TQ, C)
    proj_both = proj_h[0]
    for h in range(1, num_heads):
        proj_both = proj_both + proj_h[h]
    proj_both = proj_both + bproj_ref[...]                        # (2TQ, C)

    # ---- residuals: causal branch adds x, spurious branch does not ----
    resid = jnp.concatenate([x_q, jnp.zeros_like(x_q)], axis=0)
    y = resid + proj_both                                         # (2TQ, C)

    # ---- MLP on both branches in one stacked matmul pair ----
    yn = _layernorm(y, g2_ref[...], b2_ref[...])
    h1 = jnp.dot(yn.astype(compute_dtype), w1_ref[...],
                 preferred_element_type=jnp.float32) + bf1_ref[...]
    h1 = _gelu_exact(h1)                        # erf-exact GELU (matches nn.GELU())
    y = y + jnp.dot(h1.astype(compute_dtype), w2_ref[...],
                    preferred_element_type=jnp.float32) + bf2_ref[...]

    y_causal = y[:tq]
    y_spur = y[tq:]
    outc_ref[0] = y_causal.astype(outc_ref.dtype)
    outs_ref[0] = y_spur.astype(outs_ref.dtype)
    # x_mix is part of the module's contract; computed in-kernel to avoid a
    # second HBM read of outc/outs outside.
    outm_ref[0] = (y_causal + y_spur).astype(outm_ref.dtype)


# ------------------------------- wrapper ----------------------------------

def block_ours_pallas(x, params, num_heads, *, compute_dtype=jnp.float32,
                      seq_tile=None):
    B, N, C = x.shape
    Hm = params["w1"].shape[1]
    hd = C // num_heads
    scale = hd ** (-0.5)

    tq = seq_tile or _pick_seq_tile(N)
    assert N % tq == 0
    n_tiles = N // tq

    cd = compute_dtype
    # Fold the softmax scale into the Q columns of the qkv weight; split the
    # weight so K/V can be projected once per batch element.
    wqkv = params["wqkv"]
    wq = (wqkv[:, :C] * scale).astype(cd)
    wkv = wqkv[:, C:].astype(cd)
    wproj3 = params["wproj"].reshape(num_heads, hd, C).astype(cd)
    w1 = params["w1"].astype(cd)
    w2 = params["w2"].astype(cd)
    # Biases and layernorm params stay f32 (added after f32 accumulation).

    kernel = functools.partial(block_ours_kernel, num_heads=num_heads,
                               compute_dtype=cd)

    def tile_spec():
        return pl.BlockSpec((1, tq, C), lambda b, qi: (b, qi, 0))

    def const2d(shape):
        return pl.BlockSpec(shape, lambda b, qi: (0, 0))

    in_specs = [
        pl.BlockSpec((1, N, C), lambda b, qi: (b, 0, 0)),    # x: full sequence per batch elem
        const2d((C, C)),          # wq (scale folded in)
        const2d((C, 2 * C)),      # wkv
        pl.BlockSpec((num_heads, hd, C), lambda b, qi: (0, 0, 0)),  # wproj head-major
        const2d((1, C)),          # bproj
        const2d((1, C)),          # norm1 gamma
        const2d((1, C)),          # norm1 beta
        const2d((1, C)),          # norm2 gamma
        const2d((1, C)),          # norm2 beta
        const2d((C, Hm)),         # fc1 weight
        const2d((1, Hm)),         # fc1 bias
        const2d((Hm, C)),         # fc2 weight
        const2d((1, C)),          # fc2 bias
    ]
    out_specs = [tile_spec(), tile_spec(), tile_spec()]
    out_shape = [jax.ShapeDtypeStruct((B, N, C), x.dtype)] * 3

    scratch_shapes = [
        pltpu.VMEM((num_heads, tq, hd), cd),   # per-tile head-major Q
        pltpu.VMEM((num_heads, N, hd), cd),    # per-batch head-major K cache
        pltpu.VMEM((num_heads, N, hd), cd),    # per-batch head-major V cache
    ]
    # TODO(synk): for very long sequences, tile K/V too (flash-style online
    # softmax) instead of caching full-length K/V per batch element.

    return pl.pallas_call(
        kernel,
        grid=(B, n_tiles),
        in_specs=in_specs,
        out_specs=out_specs,
        out_shape=out_shape,
        scratch_shapes=scratch_shapes,
        compiler_params=pltpu.CompilerParams(
            dimension_semantics=("parallel", "arbitrary"),
            vmem_limit_bytes=64 * 1024 * 1024,
        ),
    )(x, wq, wkv, wproj3, params["bproj"], params["g1"], params["b1"],
      params["g2"], params["b2"], w1, params["bf1"], w2, params["bf2"])


# --------------------------- pure-JAX reference ----------------------------

def block_ours_ref(x, params, num_heads):
    B, N, C = x.shape
    hd = C // num_heads
    scale = hd ** (-0.5)

    def ln(y, g, b):
        mean = jnp.mean(y, axis=-1, keepdims=True)
        var = jnp.mean((y - mean) ** 2, axis=-1, keepdims=True)
        return (y - mean) / jnp.sqrt(var + 1e-5) * g + b

    h = ln(x, params["g1"][0], params["b1"][0])
    qkv = h @ params["wqkv"]                                       # (B, N, 3C)
    qkv = qkv.reshape(B, N, 3, num_heads, hd).transpose(2, 0, 3, 1, 4)
    q, k, v = qkv[0], qkv[1], qkv[2]                               # (B, H, N, hd)
    attn = jnp.einsum("bhqd,bhkd->bhqk", q, k) * scale
    p_c = jax.nn.softmax(attn, axis=-1)
    p_s = jax.nn.softmax(-attn, axis=-1)
    oc = jnp.einsum("bhqk,bhkd->bhqd", p_c, v).transpose(0, 2, 1, 3).reshape(B, N, C)
    os_ = jnp.einsum("bhqk,bhkd->bhqd", p_s, v).transpose(0, 2, 1, 3).reshape(B, N, C)
    oc = oc @ params["wproj"] + params["bproj"][0]
    os_ = os_ @ params["wproj"] + params["bproj"][0]

    x_causal = x + oc
    x_spurious = os_

    def mlp(y):
        yn = ln(y, params["g2"][0], params["b2"][0])
        h1 = jax.nn.gelu(yn @ params["w1"] + params["bf1"][0], approximate=False)
        return y + h1 @ params["w2"] + params["bf2"][0]

    x_causal = mlp(x_causal)
    x_spurious = mlp(x_spurious)
    return x_causal, x_spurious, x_causal + x_spurious


# --------------------------------- main ------------------------------------

if __name__ == "__main__":
    B, N, C = 2, 8, 32
    num_heads = 4
    mlp_ratio = 4.0
    Hm = int(C * mlp_ratio)

    key = jax.random.PRNGKey(0)
    keys = jax.random.split(key, 12)

    params = {
        "wqkv": 0.02 * jax.random.normal(keys[0], (C, 3 * C), jnp.float32),
        "wproj": 0.02 * jax.random.normal(keys[1], (C, C), jnp.float32),
        "bproj": 0.01 * jax.random.normal(keys[2], (1, C), jnp.float32),
        "g1": 1.0 + 0.1 * jax.random.normal(keys[3], (1, C), jnp.float32),
        "b1": 0.1 * jax.random.normal(keys[4], (1, C), jnp.float32),
        "g2": 1.0 + 0.1 * jax.random.normal(keys[5], (1, C), jnp.float32),
        "b2": 0.1 * jax.random.normal(keys[6], (1, C), jnp.float32),
        "w1": 0.02 * jax.random.normal(keys[7], (C, Hm), jnp.float32),
        "bf1": 0.01 * jax.random.normal(keys[8], (1, Hm), jnp.float32),
        "w2": 0.02 * jax.random.normal(keys[9], (Hm, C), jnp.float32),
        "bf2": 0.01 * jax.random.normal(keys[10], (1, C), jnp.float32),
    }
    x = jax.random.normal(keys[11], (B, N, C), jnp.float32)

    refs = block_ours_ref(x, params, num_heads)

    # f32 MXU path: strict parity with the PyTorch module (approx softmax
    # reciprocal and the 1.5e-7-accurate erf are the only non-exact ops).
    outs = block_ours_pallas(x, params, num_heads)
    outs = [jax.block_until_ready(o) for o in outs]
    for o, r in zip(outs, refs):
        np.testing.assert_allclose(np.asarray(o), np.asarray(r),
                                   rtol=3e-3, atol=3e-3)

    # bf16 MXU-input path (v6e/v7x throughput mode); f32 accumulation and
    # f32 layernorm/softmax, so it stays close to the f32 reference.
    outs_bf16 = block_ours_pallas(x, params, num_heads,
                                  compute_dtype=jnp.bfloat16)
    outs_bf16 = [jax.block_until_ready(o) for o in outs_bf16]
    for o, r in zip(outs_bf16, refs):
        np.testing.assert_allclose(np.asarray(o), np.asarray(r),
                                   rtol=5e-2, atol=5e-2)

    print("KERNEL_OK")
</pallas_src>

<mosaic_0001>
module attributes {stable_mosaic.version = 11 : i64} {
  func.func @block_ours_kernel(%arg0: i32, %arg1: i32, %arg2: memref<1x8x32xf32, #tpu.memory_space<vmem>>, %arg3: memref<32x32xf32, #tpu.memory_space<vmem>>, %arg4: memref<32x64xf32, #tpu.memory_space<vmem>>, %arg5: memref<4x8x32xf32, #tpu.memory_space<vmem>>, %arg6: memref<1x32xf32, #tpu.memory_space<vmem>>, %arg7: memref<1x32xf32, #tpu.memory_space<vmem>>, %arg8: memref<1x32xf32, #tpu.memory_space<vmem>>, %arg9: memref<1x32xf32, #tpu.memory_space<vmem>>, %arg10: memref<1x32xf32, #tpu.memory_space<vmem>>, %arg11: memref<32x128xf32, #tpu.memory_space<vmem>>, %arg12: memref<1x128xf32, #tpu.memory_space<vmem>>, %arg13: memref<128x32xf32, #tpu.memory_space<vmem>>, %arg14: memref<1x32xf32, #tpu.memory_space<vmem>>, %arg15: memref<1x8x32xf32, #tpu.memory_space<vmem>>, %arg16: memref<1x8x32xf32, #tpu.memory_space<vmem>>, %arg17: memref<1x8x32xf32, #tpu.memory_space<vmem>>, %arg18: memref<4x8x8xf32, #tpu.memory_space<vmem>>, %arg19: memref<4x8x8xf32, #tpu.memory_space<vmem>>, %arg20: memref<4x8x8xf32, #tpu.memory_space<vmem>>) attributes {dimension_semantics = [#tpu.dimension_semantics<parallel>, #tpu.dimension_semantics<arbitrary>], iteration_bounds = array<i64: 2, 1>, scalar_prefetch = 0 : i64, scratch_operands = 3 : i64, tpu.core_type = #tpu.core_type<tc>, window_params = [{transform_indices = @transform_0, window_bounds = array<i64: 1, 8, 32>}, {pipeline_mode = #tpu.pipeline_mode<synchronous>, transform_indices = @transform_1, window_bounds = array<i64: 32, 32>}, {pipeline_mode = #tpu.pipeline_mode<synchronous>, transform_indices = @transform_2, window_bounds = array<i64: 32, 64>}, {pipeline_mode = #tpu.pipeline_mode<synchronous>, transform_indices = @transform_3, window_bounds = array<i64: 4, 8, 32>}, {pipeline_mode = #tpu.pipeline_mode<synchronous>, transform_indices = @transform_4, window_bounds = array<i64: 1, 32>}, {pipeline_mode = #tpu.pipeline_mode<synchronous>, transform_indices = @transform_5, window_bounds = array<i64: 1, 32>}, {pipeline_mode = #tpu.pipeline_mode<synchronous>, transform_indices = @transform_6, window_bounds = array<i64: 1, 32>}, {pipeline_mode = #tpu.pipeline_mode<synchronous>, transform_indices = @transform_7, window_bounds = array<i64: 1, 32>}, {pipeline_mode = #tpu.pipeline_mode<synchronous>, transform_indices = @transform_8, window_bounds = array<i64: 1, 32>}, {pipeline_mode = #tpu.pipeline_mode<synchronous>, transform_indices = @transform_9, window_bounds = array<i64: 32, 128>}, {pipeline_mode = #tpu.pipeline_mode<synchronous>, transform_indices = @transform_10, window_bounds = array<i64: 1, 128>}, {pipeline_mode = #tpu.pipeline_mode<synchronous>, transform_indices = @transform_11, window_bounds = array<i64: 128, 32>}, {pipeline_mode = #tpu.pipeline_mode<synchronous>, transform_indices = @transform_12, window_bounds = array<i64: 1, 32>}, {transform_indices = @transform_13, window_bounds = array<i64: 1, 8, 32>}, {transform_indices = @transform_14, window_bounds = array<i64: 1, 8, 32>}, {transform_indices = @transform_15, window_bounds = array<i64: 1, 8, 32>}]} {
    %c0 = arith.constant 0 : index
    %c0_0 = arith.constant 0 : index
    %0 = vector.load %arg7[%c0, %c0_0] : memref<1x32xf32, #tpu.memory_space<vmem>>, vector<1x32xf32>
    %c0_1 = arith.constant 0 : index
    %c0_2 = arith.constant 0 : index
    %1 = vector.load %arg8[%c0_1, %c0_2] : memref<1x32xf32, #tpu.memory_space<vmem>>, vector<1x32xf32>
    %c0_i32 = arith.constant 0 : i32
    %2 = arith.cmpi eq, %arg1, %c0_i32 : i32
    %3 = arith.extui %2 : i1 to i32
    %c0_i32_3 = arith.constant 0 : i32
    %4 = arith.cmpi ne, %3, %c0_i32_3 : i32
    scf.if %4 {
      %c0_87 = arith.constant 0 : index
      %c0_88 = arith.constant 0 : index
      %c0_89 = arith.constant 0 : index
      %182 = vector.load %arg2[%c0_87, %c0_88, %c0_89] : memref<1x8x32xf32, #tpu.memory_space<vmem>>, vector<1x8x32xf32>
      %183 = vector.shape_cast %182 : vector<1x8x32xf32> to vector<8x32xf32>
      %cst_90 = arith.constant dense<0.000000e+00> : vector<8xf32>
      %184 = vector.multi_reduction <add>, %183, %cst_90 [1] : vector<8x32xf32> to vector<8xf32>
      %185 = vector.shape_cast %184 : vector<8xf32> to vector<8x1xf32>
      %cst_91 = arith.constant 3.200000e+01 : f32
      %186 = vector.broadcast %cst_91 : f32 to vector<8x1xf32>
      %187 = arith.divf %185, %186 : vector<8x1xf32>
      %188 = vector.broadcast %187 : vector<8x1xf32> to vector<8x32xf32>
      %189 = arith.subf %183, %188 : vector<8x32xf32>
      %190 = arith.mulf %189, %189 : vector<8x32xf32>
      %cst_92 = arith.constant dense<0.000000e+00> : vector<8xf32>
      %191 = vector.multi_reduction <add>, %190, %cst_92 [1] : vector<8x32xf32> to vector<8xf32>
      %192 = vector.shape_cast %191 : vector<8xf32> to vector<8x1xf32>
      %cst_93 = arith.constant 3.200000e+01 : f32
      %193 = vector.broadcast %cst_93 : f32 to vector<8x1xf32>
      %194 = arith.divf %192, %193 : vector<8x1xf32>
      %195 = vector.broadcast %187 : vector<8x1xf32> to vector<8x32xf32>
      %196 = arith.subf %183, %195 : vector<8x32xf32>
      %cst_94 = arith.constant 9.99999974E-6 : f32
      %197 = vector.broadcast %cst_94 : f32 to vector<8x1xf32>
      %198 = arith.addf %194, %197 : vector<8x1xf32>
      %199 = math.rsqrt %198 : vector<8x1xf32>
      %200 = vector.broadcast %199 : vector<8x1xf32> to vector<8x32xf32>
      %201 = arith.mulf %196, %200 : vector<8x32xf32>
      %202 = vector.broadcast %0 : vector<1x32xf32> to vector<8x32xf32>
      %203 = arith.mulf %201, %202 : vector<8x32xf32>
      %204 = vector.broadcast %1 : vector<1x32xf32> to vector<8x32xf32>
      %205 = arith.addf %203, %204 : vector<8x32xf32>
      %c0_95 = arith.constant 0 : index
      %c0_96 = arith.constant 0 : index
      %206 = vector.load %arg4[%c0_95, %c0_96] : memref<32x64xf32, #tpu.memory_space<vmem>>, vector<32x64xf32>
      %cst_97 = arith.constant dense<0.000000e+00> : vector<8x64xf32>
      %207 = tpu.matmul %205, %206, %cst_97 {dimension_numbers = #tpu.dot_dimension_numbers<[1], [0], [0], [1], [0, 0, 1, 1], [], []>} : vector<8x32xf32>, vector<32x64xf32>, vector<8x64xf32> -> vector<8x64xf32>
      %208 = vector.extract_strided_slice %207 {offsets = [0, 0], sizes = [8, 8], strides = [1, 1]} : vector<8x64xf32> to vector<8x8xf32>
      %c0_98 = arith.constant 0 : index
      %c0_99 = arith.constant 0 : index
      %c0_100 = arith.constant 0 : index
      %209 = vector.load %arg19[%c0_98, %c0_99, %c0_100] : memref<4x8x8xf32, #tpu.memory_space<vmem>>, vector<1x8x8xf32>
      %210 = vector.shape_cast %209 : vector<1x8x8xf32> to vector<8x8xf32>
      %211 = vector.shape_cast %208 : vector<8x8xf32> to vector<1x8x8xf32>
      tpu.vector_store %arg19[%c0_98, %c0_99, %c0_100], %211 {strides = array<i32>} : memref<4x8x8xf32, #tpu.memory_space<vmem>>, vector<1x8x8xf32>,
      %212 = vector.extract_strided_slice %207 {offsets = [0, 32], sizes = [8, 8], strides = [1, 1]} : vector<8x64xf32> to vector<8x8xf32>
      %c0_101 = arith.constant 0 : index
      %c0_102 = arith.constant 0 : index
      %c0_103 = arith.constant 0 : index
      %213 = vector.load %arg20[%c0_101, %c0_102, %c0_103] : memref<4x8x8xf32, #tpu.memory_space<vmem>>, vector<1x8x8xf32>
      %214 = vector.shape_cast %213 : vector<1x8x8xf32> to vector<8x8xf32>
      %215 = vector.shape_cast %212 : vector<8x8xf32> to vector<1x8x8xf32>
      tpu.vector_store %arg20[%c0_101, %c0_102, %c0_103], %215 {strides = array<i32>} : memref<4x8x8xf32, #tpu.memory_space<vmem>>, vector<1x8x8xf32>,
      %216 = vector.extract_strided_slice %207 {offsets = [0, 8], sizes = [8, 8], strides = [1, 1]} : vector<8x64xf32> to vector<8x8xf32>
      %c1_104 = arith.constant 1 : index
      %c0_105 = arith.constant 0 : index
      %c0_106 = arith.constant 0 : index
      %217 = vector.load %arg19[%c1_104, %c0_105, %c0_106] : memref<4x8x8xf32, #tpu.memory_space<vmem>>, vector<1x8x8xf32>
      %218 = vector.shape_cast %217 : vector<1x8x8xf32> to vector<8x8xf32>
      %219 = vector.shape_cast %216 : vector<8x8xf32> to vector<1x8x8xf32>
      tpu.vector_store %arg19[%c1_104, %c0_105, %c0_106], %219 {strides = array<i32>} : memref<4x8x8xf32, #tpu.memory_space<vmem>>, vector<1x8x8xf32>,
      %220 = vector.extract_strided_slice %207 {offsets = [0, 40], sizes = [8, 8], strides = [1, 1]} : vector<8x64xf32> to vector<8x8xf32>
      %c1_107 = arith.constant 1 : index
      %c0_108 = arith.constant 0 : index
      %c0_109 = arith.constant 0 : index
      %221 = vector.load %arg20[%c1_107, %c0_108, %c0_109] : memref<4x8x8xf32, #tpu.memory_space<vmem>>, vector<1x8x8xf32>
      %222 = vector.shape_cast %221 : vector<1x8x8xf32> to vector<8x8xf32>
      %223 = vector.shape_cast %220 : vector<8x8xf32> to vector<1x8x8xf32>
      tpu.vector_store %arg20[%c1_107, %c0_108, %c0_109], %223 {strides = array<i32>} : memref<4x8x8xf32, #tpu.memory_space<vmem>>, vector<1x8x8xf32>,
      %224 = vector.extract_strided_slice %207 {offsets = [0, 16], sizes = [8, 8], strides = [1, 1]} : vector<8x64xf32> to vector<8x8xf32>
      %c2_110 = arith.constant 2 : index
      %c0_111 = arith.constant 0 : index
      %c0_112 = arith.constant 0 : index
      %225 = vector.load %arg19[%c2_110, %c0_111, %c0_112] : memref<4x8x8xf32, #tpu.memory_space<vmem>>, vector<1x8x8xf32>
      %226 = vector.shape_cast %225 : vector<1x8x8xf32> to vector<8x8xf32>
      %227 = vector.shape_cast %224 : vector<8x8xf32> to vector<1x8x8xf32>
      tpu.vector_store %arg19[%c2_110, %c0_111, %c0_112], %227 {strides = array<i32>} : memref<4x8x8xf32, #tpu.memory_space<vmem>>, vector<1x8x8xf32>,
      %228 = vector.extract_strided_slice %207 {offsets = [0, 48], sizes = [8, 8], strides = [1, 1]} : vector<8x64xf32> to vector<8x8xf32>
      %c2_113 = arith.constant 2 : index
      %c0_114 = arith.constant 0 : index
      %c0_115 = arith.constant 0 : index
      %229 = vector.load %arg20[%c2_113, %c0_114, %c0_115] : memref<4x8x8xf32, #tpu.memory_space<vmem>>, vector<1x8x8xf32>
      %230 = vector.shape_cast %229 : vector<1x8x8xf32> to vector<8x8xf32>
      %231 = vector.shape_cast %228 : vector<8x8xf32> to vector<1x8x8xf32>
      tpu.vector_store %arg20[%c2_113, %c0_114, %c0_115], %231 {strides = array<i32>} : memref<4x8x8xf32, #tpu.memory_space<vmem>>, vector<1x8x8xf32>,
      %232 = vector.extract_strided_slice %207 {offsets = [0, 24], sizes = [8, 8], strides = [1, 1]} : vector<8x64xf32> to vector<8x8xf32>
      %c3_116 = arith.constant 3 : index
      %c0_117 = arith.constant 0 : index
      %c0_118 = arith.constant 0 : index
      %233 = vector.load %arg19[%c3_116, %c0_117, %c0_118] : memref<4x8x8xf32, #tpu.memory_space<vmem>>, vector<1x8x8xf32>
      %234 = vector.shape_cast %233 : vector<1x8x8xf32> to vector<8x8xf32>
      %235 = vector.shape_cast %232 : vector<8x8xf32> to vector<1x8x8xf32>
      tpu.vector_store %arg19[%c3_116, %c0_117, %c0_118], %235 {strides = array<i32>} : memref<4x8x8xf32, #tpu.memory_space<vmem>>, vector<1x8x8xf32>,
      %236 = vector.extract_strided_slice %207 {offsets = [0, 56], sizes = [8, 8], strides = [1, 1]} : vector<8x64xf32> to vector<8x8xf32>
      %c3_119 = arith.constant 3 : index
      %c0_120 = arith.constant 0 : index
      %c0_121 = arith.constant 0 : index
      %237 = vector.load %arg20[%c3_119, %c0_120, %c0_121] : memref<4x8x8xf32, #tpu.memory_space<vmem>>, vector<1x8x8xf32>
      %238 = vector.shape_cast %237 : vector<1x8x8xf32> to vector<8x8xf32>
      %239 = vector.shape_cast %236 : vector<8x8xf32> to vector<1x8x8xf32>
      tpu.vector_store %arg20[%c3_119, %c0_120, %c0_121], %239 {strides = array<i32>} : memref<4x8x8xf32, #tpu.memory_space<vmem>>, vector<1x8x8xf32>,
    } else {
    }
    %c8_i32 = arith.constant 8 : i32
    %5 = arith.muli %arg1, %c8_i32 : i32
    %6 = tpu.assume_multiple %5, 8 : i32
    %c0_4 = arith.constant 0 : index
    %7 = arith.index_cast %6 : i32 to index
    %c0_5 = arith.constant 0 : index
    %8 = vector.load %arg2[%c0_4, %7, %c0_5] : memref<1x8x32xf32, #tpu.memory_space<vmem>>, vector<1x8x32xf32>
    %9 = vector.shape_cast %8 : vector<1x8x32xf32> to vector<8x32xf32>
    %cst = arith.constant dense<0.000000e+00> : vector<8xf32>
    %10 = vector.multi_reduction <add>, %9, %cst [1] : vector<8x32xf32> to vector<8xf32>
    %11 = vector.shape_cast %10 : vector<8xf32> to vector<8x1xf32>
    %cst_6 = arith.constant 3.200000e+01 : f32
    %12 = vector.broadcast %cst_6 : f32 to vector<8x1xf32>
    %13 = arith.divf %11, %12 : vector<8x1xf32>
    %14 = vector.broadcast %13 : vector<8x1xf32> to vector<8x32xf32>
    %15 = arith.subf %9, %14 : vector<8x32xf32>
    %16 = arith.mulf %15, %15 : vector<8x32xf32>
    %cst_7 = arith.constant dense<0.000000e+00> : vector<8xf32>
    %17 = vector.multi_reduction <add>, %16, %cst_7 [1] : vector<8x32xf32> to vector<8xf32>
    %18 = vector.shape_cast %17 : vector<8xf32> to vector<8x1xf32>
    %cst_8 = arith.constant 3.200000e+01 : f32
    %19 = vector.broadcast %cst_8 : f32 to vector<8x1xf32>
    %20 = arith.divf %18, %19 : vector<8x1xf32>
    %21 = vector.broadcast %13 : vector<8x1xf32> to vector<8x32xf32>
    %22 = arith.subf %9, %21 : vector<8x32xf32>
    %cst_9 = arith.constant 9.99999974E-6 : f32
    %23 = vector.broadcast %cst_9 : f32 to vector<8x1xf32>
    %24 = arith.addf %20, %23 : vector<8x1xf32>
    %25 = math.rsqrt %24 : vector<8x1xf32>
    %26 = vector.broadcast %25 : vector<8x1xf32> to vector<8x32xf32>
    %27 = arith.mulf %22, %26 : vector<8x32xf32>
    %28 = vector.broadcast %0 : vector<1x32xf32> to vector<8x32xf32>
    %29 = arith.mulf %27, %28 : vector<8x32xf32>
    %30 = vector.broadcast %1 : vector<1x32xf32> to vector<8x32xf32>
    %31 = arith.addf %29, %30 : vector<8x32xf32>
    %c0_10 = arith.constant 0 : index
    %c0_11 = arith.constant 0 : index
    %32 = vector.load %arg3[%c0_10, %c0_11] : memref<32x32xf32, #tpu.memory_space<vmem>>, vector<32x32xf32>
    %cst_12 = arith.constant dense<0.000000e+00> : vector<8x32xf32>
    %33 = tpu.matmul %31, %32, %cst_12 {dimension_numbers = #tpu.dot_dimension_numbers<[1], [0], [0], [1], [0, 0, 1, 1], [], []>} : vector<8x32xf32>, vector<32x32xf32>, vector<8x32xf32> -> vector<8x32xf32>
    %34 = vector.extract_strided_slice %33 {offsets = [0, 0], sizes = [8, 8], strides = [1, 1]} : vector<8x32xf32> to vector<8x8xf32>
    %c0_13 = arith.constant 0 : index
    %c0_14 = arith.constant 0 : index
    %c0_15 = arith.constant 0 : index
    %35 = vector.load %arg18[%c0_13, %c0_14, %c0_15] : memref<4x8x8xf32, #tpu.memory_space<vmem>>, vector<1x8x8xf32>
    %36 = vector.shape_cast %35 : vector<1x8x8xf32> to vector<8x8xf32>
    %37 = vector.shape_cast %34 : vector<8x8xf32> to vector<1x8x8xf32>
    tpu.vector_store %arg18[%c0_13, %c0_14, %c0_15], %37 {strides = array<i32>} : memref<4x8x8xf32, #tpu.memory_space<vmem>>, vector<1x8x8xf32>,
    %38 = vector.extract_strided_slice %33 {offsets = [0, 8], sizes = [8, 8], strides = [1, 1]} : vector<8x32xf32> to vector<8x8xf32>
    %c1 = arith.constant 1 : index
    %c0_16 = arith.constant 0 : index
    %c0_17 = arith.constant 0 : index
    %39 = vector.load %arg18[%c1, %c0_16, %c0_17] : memref<4x8x8xf32, #tpu.memory_space<vmem>>, vector<1x8x8xf32>
    %40 = vector.shape_cast %39 : vector<1x8x8xf32> to vector<8x8xf32>
    %41 = vector.shape_cast %38 : vector<8x8xf32> to vector<1x8x8xf32>
    tpu.vector_store %arg18[%c1, %c0_16, %c0_17], %41 {strides = array<i32>} : memref<4x8x8xf32, #tpu.memory_space<vmem>>, vector<1x8x8xf32>,
    %42 = vector.extract_strided_slice %33 {offsets = [0, 16], sizes = [8, 8], strides = [1, 1]} : vector<8x32xf32> to vector<8x8xf32>
    %c2 = arith.constant 2 : index
    %c0_18 = arith.constant 0 : index
    %c0_19 = arith.constant 0 : index
    %43 = vector.load %arg18[%c2, %c0_18, %c0_19] : memref<4x8x8xf32, #tpu.memory_space<vmem>>, vector<1x8x8xf32>
    %44 = vector.shape_cast %43 : vector<1x8x8xf32> to vector<8x8xf32>
    %45 = vector.shape_cast %42 : vector<8x8xf32> to vector<1x8x8xf32>
    tpu.vector_store %arg18[%c2, %c0_18, %c0_19], %45 {strides = array<i32>} : memref<4x8x8xf32, #tpu.memory_space<vmem>>, vector<1x8x8xf32>,
    %46 = vector.extract_strided_slice %33 {offsets = [0, 24], sizes = [8, 8], strides = [1, 1]} : vector<8x32xf32> to vector<8x8xf32>
    %c3 = arith.constant 3 : index
    %c0_20 = arith.constant 0 : index
    %c0_21 = arith.constant 0 : index
    %47 = vector.load %arg18[%c3, %c0_20, %c0_21] : memref<4x8x8xf32, #tpu.memory_space<vmem>>, vector<1x8x8xf32>
    %48 = vector.shape_cast %47 : vector<1x8x8xf32> to vector<8x8xf32>
    %49 = vector.shape_cast %46 : vector<8x8xf32> to vector<1x8x8xf32>
    tpu.vector_store %arg18[%c3, %c0_20, %c0_21], %49 {strides = array<i32>} : memref<4x8x8xf32, #tpu.memory_space<vmem>>, vector<1x8x8xf32>,
    %c0_22 = arith.constant 0 : index
    %c0_23 = arith.constant 0 : index
    %c0_24 = arith.constant 0 : index
    %50 = vector.load %arg18[%c0_22, %c0_23, %c0_24] : memref<4x8x8xf32, #tpu.memory_space<vmem>>, vector<4x8x8xf32>
    %c0_25 = arith.constant 0 : index
    %c0_26 = arith.constant 0 : index
    %c0_27 = arith.constant 0 : index
    %51 = vector.load %arg19[%c0_25, %c0_26, %c0_27] : memref<4x8x8xf32, #tpu.memory_space<vmem>>, vector<4x8x8xf32>
    %c0_28 = arith.constant 0 : index
    %c0_29 = arith.constant 0 : index
    %c0_30 = arith.constant 0 : index
    %52 = vector.load %arg20[%c0_28, %c0_29, %c0_30] : memref<4x8x8xf32, #tpu.memory_space<vmem>>, vector<4x8x8xf32>
    "tpu.trace_start"() <{level = 10 : i32, message = "hqd,hkd->hqk"}> : () -> ()
    %cst_31 = arith.constant dense<0.000000e+00> : vector<4x8x8xf32>
    %53 = tpu.matmul %50, %51, %cst_31 {dimension_numbers = #tpu.dot_dimension_numbers<[2], [2], [1], [1], [0, 0, 0, 1, 1, 1], [0], [0]>} : vector<4x8x8xf32>, vector<4x8x8xf32>, vector<4x8x8xf32> -> vector<4x8x8xf32>
    "tpu.trace_stop"() : () -> ()
    %cst_32 = arith.constant dense<0xFF800000> : vector<4x8xf32>
    %54 = vector.multi_reduction <maximumf>, %53, %cst_32 [2] : vector<4x8x8xf32> to vector<4x8xf32>
    %55 = vector.shape_cast %54 : vector<4x8xf32> to vector<4x8x1xf32>
    %cst_33 = arith.constant dense<0x7F800000> : vector<4x8xf32>
    %56 = vector.multi_reduction <minimumf>, %53, %cst_33 [2] : vector<4x8x8xf32> to vector<4x8xf32>
    %57 = vector.shape_cast %56 : vector<4x8xf32> to vector<4x8x1xf32>
    %58 = vector.broadcast %55 : vector<4x8x1xf32> to vector<4x8x8xf32>
    %59 = arith.subf %53, %58 : vector<4x8x8xf32>
    %60 = math.exp %59 : vector<4x8x8xf32>
    %61 = vector.broadcast %57 : vector<4x8x1xf32> to vector<4x8x8xf32>
    %62 = arith.subf %61, %53 : vector<4x8x8xf32>
    %63 = math.exp %62 : vector<4x8x8xf32>
    %cst_34 = arith.constant dense<0.000000e+00> : vector<4x8xf32>
    %64 = vector.multi_reduction <add>, %60, %cst_34 [2] : vector<4x8x8xf32> to vector<4x8xf32>
    %65 = vector.shape_cast %64 : vector<4x8xf32> to vector<4x8x1xf32>
    %66 = tpu.reciprocal %65 {approx = true} : vector<4x8x1xf32> -> vector<4x8x1xf32>
    %67 = vector.broadcast %66 : vector<4x8x1xf32> to vector<4x8x8xf32>
    %68 = arith.mulf %60, %67 : vector<4x8x8xf32>
    %cst_35 = arith.constant dense<0.000000e+00> : vector<4x8xf32>
    %69 = vector.multi_reduction <add>, %63, %cst_35 [2] : vector<4x8x8xf32> to vector<4x8xf32>
    %70 = vector.shape_cast %69 : vector<4x8xf32> to vector<4x8x1xf32>
    %71 = tpu.reciprocal %70 {approx = true} : vector<4x8x1xf32> -> vector<4x8x1xf32>
    %72 = vector.broadcast %71 : vector<4x8x1xf32> to vector<4x8x8xf32>
    %73 = arith.mulf %63, %72 : vector<4x8x8xf32>
    %74 = tpu.concatenate %68, %73 in 1 : vector<4x8x8xf32>, vector<4x8x8xf32> -> vector<4x16x8xf32>
    "tpu.trace_start"() <{level = 10 : i32, message = "hqk,hkd->hqd"}> : () -> ()
    %cst_36 = arith.constant dense<0.000000e+00> : vector<4x16x8xf32>
    %75 = tpu.matmul %74, %52, %cst_36 {dimension_numbers = #tpu.dot_dimension_numbers<[2], [1], [1], [2], [0, 0, 0, 1, 1, 2], [0], [0]>} : vector<4x16x8xf32>, vector<4x8x8xf32>, vector<4x16x8xf32> -> vector<4x16x8xf32>
    "tpu.trace_stop"() : () -> ()
    %c0_37 = arith.constant 0 : index
    %c0_38 = arith.constant 0 : index
    %c0_39 = arith.constant 0 : index
    %76 = vector.load %arg5[%c0_37, %c0_38, %c0_39] : memref<4x8x32xf32, #tpu.memory_space<vmem>>, vector<4x8x32xf32>
    "tpu.trace_start"() <{level = 10 : i32, message = "hqd,hdc->hqc"}> : () -> ()
    %cst_40 = arith.constant dense<0.000000e+00> : vector<4x16x32xf32>
    %77 = tpu.matmul %75, %76, %cst_40 {dimension_numbers = #tpu.dot_dimension_numbers<[2], [1], [1], [2], [0, 0, 0, 1, 1, 2], [0], [0]>} : vector<4x16x8xf32>, vector<4x8x32xf32>, vector<4x16x32xf32> -> vector<4x16x32xf32>
    "tpu.trace_stop"() : () -> ()
    %78 = vector.extract_strided_slice %77 {offsets = [0, 0, 0], sizes = [1, 16, 32], strides = [1, 1, 1]} : vector<4x16x32xf32> to vector<1x16x32xf32>
    %79 = vector.shape_cast %78 : vector<1x16x32xf32> to vector<16x32xf32>
    %80 = vector.extract_strided_slice %77 {offsets = [1, 0, 0], sizes = [1, 16, 32], strides = [1, 1, 1]} : vector<4x16x32xf32> to vector<1x16x32xf32>
    %81 = vector.shape_cast %80 : vector<1x16x32xf32> to vector<16x32xf32>
    %82 = arith.addf %79, %81 : vector<16x32xf32>
    %83 = vector.extract_strided_slice %77 {offsets = [2, 0, 0], sizes = [1, 16, 32], strides = [1, 1, 1]} : vector<4x16x32xf32> to vector<1x16x32xf32>
    %84 = vector.shape_cast %83 : vector<1x16x32xf32> to vector<16x32xf32>
    %85 = arith.addf %82, %84 : vector<16x32xf32>
    %86 = vector.extract_strided_slice %77 {offsets = [3, 0, 0], sizes = [1, 16, 32], strides = [1, 1, 1]} : vector<4x16x32xf32> to vector<1x16x32xf32>
    %87 = vector.shape_cast %86 : vector<1x16x32xf32> to vector<16x32xf32>
    %88 = arith.addf %85, %87 : vector<16x32xf32>
    %c0_41 = arith.constant 0 : index
    %c0_42 = arith.constant 0 : index
    %89 = vector.load %arg6[%c0_41, %c0_42] : memref<1x32xf32, #tpu.memory_space<vmem>>, vector<1x32xf32>
    %90 = vector.broadcast %89 : vector<1x32xf32> to vector<16x32xf32>
    %91 = arith.addf %88, %90 : vector<16x32xf32>
    %cst_43 = arith.constant 0.000000e+00 : f32
    %92 = vector.broadcast %cst_43 : f32 to vector<8x32xf32>
    %93 = tpu.concatenate %9, %92 in 0 : vector<8x32xf32>, vector<8x32xf32> -> vector<16x32xf32>
    %94 = arith.addf %93, %91 : vector<16x32xf32>
    %c0_44 = arith.constant 0 : index
    %c0_45 = arith.constant 0 : index
    %95 = vector.load %arg9[%c0_44, %c0_45] : memref<1x32xf32, #tpu.memory_space<vmem>>, vector<1x32xf32>
    %c0_46 = arith.constant 0 : index
    %c0_47 = arith.constant 0 : index
    %96 = vector.load %arg10[%c0_46, %c0_47] : memref<1x32xf32, #tpu.memory_space<vmem>>, vector<1x32xf32>
    %cst_48 = arith.constant dense<0.000000e+00> : vector<16xf32>
    %97 = vector.multi_reduction <add>, %94, %cst_48 [1] : vector<16x32xf32> to vector<16xf32>
    %98 = vector.shape_cast %97 : vector<16xf32> to vector<16x1xf32>
    %cst_49 = arith.constant 3.200000e+01 : f32
    %99 = vector.broadcast %cst_49 : f32 to vector<16x1xf32>
    %100 = arith.divf %98, %99 : vector<16x1xf32>
    %101 = vector.broadcast %100 : vector<16x1xf32> to vector<16x32xf32>
    %102 = arith.subf %94, %101 : vector<16x32xf32>
    %103 = arith.mulf %102, %102 : vector<16x32xf32>
    %cst_50 = arith.constant dense<0.000000e+00> : vector<16xf32>
    %104 = vector.multi_reduction <add>, %103, %cst_50 [1] : vector<16x32xf32> to vector<16xf32>
    %105 = vector.shape_cast %104 : vector<16xf32> to vector<16x1xf32>
    %cst_51 = arith.constant 3.200000e+01 : f32
    %106 = vector.broadcast %cst_51 : f32 to vector<16x1xf32>
    %107 = arith.divf %105, %106 : vector<16x1xf32>
    %108 = vector.broadcast %100 : vector<16x1xf32> to vector<16x32xf32>
    %109 = arith.subf %94, %108 : vector<16x32xf32>
    %cst_52 = arith.constant 9.99999974E-6 : f32
    %110 = vector.broadcast %cst_52 : f32 to vector<16x1xf32>
    %111 = arith.addf %107, %110 : vector<16x1xf32>
    %112 = math.rsqrt %111 : vector<16x1xf32>
    %113 = vector.broadcast %112 : vector<16x1xf32> to vector<16x32xf32>
    %114 = arith.mulf %109, %113 : vector<16x32xf32>
    %115 = vector.broadcast %95 : vector<1x32xf32> to vector<16x32xf32>
    %116 = arith.mulf %114, %115 : vector<16x32xf32>
    %117 = vector.broadcast %96 : vector<1x32xf32> to vector<16x32xf32>
    %118 = arith.addf %116, %117 : vector<16x32xf32>
    %c0_53 = arith.constant 0 : index
    %c0_54 = arith.constant 0 : index
    %119 = vector.load %arg11[%c0_53, %c0_54] : memref<32x128xf32, #tpu.memory_space<vmem>>, vector<32x128xf32>
    %cst_55 = arith.constant dense<0.000000e+00> : vector<16x128xf32>
    %120 = tpu.matmul %118, %119, %cst_55 {dimension_numbers = #tpu.dot_dimension_numbers<[1], [0], [0], [1], [0, 0, 1, 1], [], []>} : vector<16x32xf32>, vector<32x128xf32>, vector<16x128xf32> -> vector<16x128xf32>
    %c0_56 = arith.constant 0 : index
    %c0_57 = arith.constant 0 : index
    %121 = vector.load %arg12[%c0_56, %c0_57] : memref<1x128xf32, #tpu.memory_space<vmem>>, vector<1x128xf32>
    %122 = vector.broadcast %121 : vector<1x128xf32> to vector<16x128xf32>
    %123 = arith.addf %120, %122 : vector<16x128xf32>
    %cst_58 = arith.constant 5.000000e-01 : f32
    %124 = vector.broadcast %cst_58 : f32 to vector<16x128xf32>
    %125 = arith.mulf %124, %123 : vector<16x128xf32>
    %cst_59 = arith.constant 0.707106769 : f32
    %126 = vector.broadcast %cst_59 : f32 to vector<16x128xf32>
    %127 = arith.mulf %123, %126 : vector<16x128xf32>
    %128 = math.absf %127 : vector<16x128xf32>
    %cst_60 = arith.constant 0.327591091 : f32
    %129 = vector.broadcast %cst_60 : f32 to vector<16x128xf32>
    %130 = arith.mulf %129, %128 : vector<16x128xf32>
    %cst_61 = arith.constant 1.000000e+00 : f32
    %131 = vector.broadcast %cst_61 : f32 to vector<16x128xf32>
    %132 = arith.addf %131, %130 : vector<16x128xf32>
    %cst_62 = arith.constant 1.000000e+00 : f32
    %133 = vector.broadcast %cst_62 : f32 to vector<16x128xf32>
    %134 = arith.divf %133, %132 : vector<16x128xf32>
    %cst_63 = arith.constant 1.06140542 : f32
    %135 = vector.broadcast %cst_63 : f32 to vector<16x128xf32>
    %136 = arith.mulf %135, %134 : vector<16x128xf32>
    %cst_64 = arith.constant -1.45315206 : f32
    %137 = vector.broadcast %cst_64 : f32 to vector<16x128xf32>
    %138 = arith.addf %136, %137 : vector<16x128xf32>
    %139 = arith.mulf %138, %134 : vector<16x128xf32>
    %cst_65 = arith.constant 1.42141378 : f32
    %140 = vector.broadcast %cst_65 : f32 to vector<16x128xf32>
    %141 = arith.addf %139, %140 : vector<16x128xf32>
    %142 = arith.mulf %141, %134 : vector<16x128xf32>
    %cst_66 = arith.constant -0.284496725 : f32
    %143 = vector.broadcast %cst_66 : f32 to vector<16x128xf32>
    %144 = arith.addf %142, %143 : vector<16x128xf32>
    %145 = arith.mulf %144, %134 : vector<16x128xf32>
    %cst_67 = arith.constant 0.254829586 : f32
    %146 = vector.broadcast %cst_67 : f32 to vector<16x128xf32>
    %147 = arith.addf %145, %146 : vector<16x128xf32>
    %148 = arith.mulf %147, %134 : vector<16x128xf32>
    %cst_68 = arith.constant 0.000000e+00 : f32
    %149 = vector.broadcast %cst_68 : f32 to vector<16x128xf32>
    %150 = arith.subf %149, %128 : vector<16x128xf32>
    %151 = arith.mulf %150, %128 : vector<16x128xf32>
    %152 = math.exp %151 : vector<16x128xf32>
    %153 = arith.mulf %148, %152 : vector<16x128xf32>
    %cst_69 = arith.constant 1.000000e+00 : f32
    %154 = vector.broadcast %cst_69 : f32 to vector<16x128xf32>
    %155 = arith.subf %154, %153 : vector<16x128xf32>
    %cst_70 = arith.constant 0.000000e+00 : f32
    %156 = vector.broadcast %cst_70 : f32 to vector<16x128xf32>
    %157 = arith.cmpf olt, %127, %156 : vector<16x128xf32>
    %cst_71 = arith.constant 0.000000e+00 : f32
    %158 = vector.broadcast %cst_71 : f32 to vector<16x128xf32>
    %159 = arith.subf %158, %155 : vector<16x128xf32>
    %160 = arith.select %157, %159, %155 : vector<16x128xi1>, vector<16x128xf32>
    %cst_72 = arith.constant 1.000000e+00 : f32
    %161 = vector.broadcast %cst_72 : f32 to vector<16x128xf32>
    %162 = arith.addf %161, %160 : vector<16x128xf32>
    %163 = arith.mulf %125, %162 : vector<16x128xf32>
    %c0_73 = arith.constant 0 : index
    %c0_74 = arith.constant 0 : index
    %164 = vector.load %arg13[%c0_73, %c0_74] : memref<128x32xf32, #tpu.memory_space<vmem>>, vector<128x32xf32>
    %cst_75 = arith.constant dense<0.000000e+00> : vector<16x32xf32>
    %165 = tpu.matmul %163, %164, %cst_75 {dimension_numbers = #tpu.dot_dimension_numbers<[1], [0], [0], [1], [0, 0, 1, 1], [], []>} : vector<16x128xf32>, vector<128x32xf32>, vector<16x32xf32> -> vector<16x32xf32>
    %166 = arith.addf %94, %165 : vector<16x32xf32>
    %c0_76 = arith.constant 0 : index
    %c0_77 = arith.constant 0 : index
    %167 = vector.load %arg14[%c0_76, %c0_77] : memref<1x32xf32, #tpu.memory_space<vmem>>, vector<1x32xf32>
    %168 = vector.broadcast %167 : vector<1x32xf32> to vector<16x32xf32>
    %169 = arith.addf %166, %168 : vector<16x32xf32>
    %170 = vector.extract_strided_slice %169 {offsets = [0, 0], sizes = [8, 32], strides = [1, 1]} : vector<16x32xf32> to vector<8x32xf32>
    %171 = vector.extract_strided_slice %169 {offsets = [8, 0], sizes = [8, 32], strides = [1, 1]} : vector<16x32xf32> to vector<8x32xf32>
    %c0_78 = arith.constant 0 : index
    %c0_79 = arith.constant 0 : index
    %c0_80 = arith.constant 0 : index
    %172 = vector.load %arg15[%c0_78, %c0_79, %c0_80] : memref<1x8x32xf32, #tpu.memory_space<vmem>>, vector<1x8x32xf32>
    %173 = vector.shape_cast %172 : vector<1x8x32xf32> to vector<8x32xf32>
    %174 = vector.shape_cast %170 : vector<8x32xf32> to vector<1x8x32xf32>
    tpu.vector_store %arg15[%c0_78, %c0_79, %c0_80], %174 {strides = array<i32>} : memref<1x8x32xf32, #tpu.memory_space<vmem>>, vector<1x8x32xf32>,
    %c0_81 = arith.constant 0 : index
    %c0_82 = arith.constant 0 : index
    %c0_83 = arith.constant 0 : index
    %175 = vector.load %arg16[%c0_81, %c0_82, %c0_83] : memref<1x8x32xf32, #tpu.memory_space<vmem>>, vector<1x8x32xf32>
    %176 = vector.shape_cast %175 : vector<1x8x32xf32> to vector<8x32xf32>
    %177 = vector.shape_cast %171 : vector<8x32xf32> to vector<1x8x32xf32>
    tpu.vector_store %arg16[%c0_81, %c0_82, %c0_83], %177 {strides = array<i32>} : memref<1x8x32xf32, #tpu.memory_space<vmem>>, vector<1x8x32xf32>,
    %178 = arith.addf %170, %171 : vector<8x32xf32>
    %c0_84 = arith.constant 0 : index
    %c0_85 = arith.constant 0 : index
    %c0_86 = arith.constant 0 : index
    %179 = vector.load %arg17[%c0_84, %c0_85, %c0_86] : memref<1x8x32xf32, #tpu.memory_space<vmem>>, vector<1x8x32xf32>
    %180 = vector.shape_cast %179 : vector<1x8x32xf32> to vector<8x32xf32>
    %181 = vector.shape_cast %178 : vector<8x32xf32> to vector<1x8x32xf32>
    tpu.vector_store %arg17[%c0_84, %c0_85, %c0_86], %181 {strides = array<i32>} : memref<1x8x32xf32, #tpu.memory_space<vmem>>, vector<1x8x32xf32>,
    return
  }
  func.func @transform_0(%arg0: i32, %arg1: i32) -> (i32, i32, i32) {
    %c0_i32 = arith.constant 0 : i32
    %c0_i32_0 = arith.constant 0 : i32
    %c0_i32_1 = arith.constant 0 : i32
    return %arg0, %c0_i32, %c0_i32_0 : i32, i32, i32
  }
  func.func @transform_1(%arg0: i32, %arg1: i32) -> (i32, i32) {
    %c0_i32 = arith.constant 0 : i32
    %c0_i32_0 = arith.constant 0 : i32
    %c0_i32_1 = arith.constant 0 : i32
    return %c0_i32, %c0_i32_0 : i32, i32
  }
  func.func @transform_2(%arg0: i32, %arg1: i32) -> (i32, i32) {
    %c0_i32 = arith.constant 0 : i32
    %c0_i32_0 = arith.constant 0 : i32
    %c0_i32_1 = arith.constant 0 : i32
    return %c0_i32, %c0_i32_0 : i32, i32
  }
  func.func @transform_3(%arg0: i32, %arg1: i32) -> (i32, i32, i32) {
    %c0_i32 = arith.constant 0 : i32
    %c0_i32_0 = arith.constant 0 : i32
    %c0_i32_1 = arith.constant 0 : i32
    %c0_i32_2 = arith.constant 0 : i32
    return %c0_i32, %c0_i32_0, %c0_i32_1 : i32, i32, i32
  }
  func.func @transform_4(%arg0: i32, %arg1: i32) -> (i32, i32) {
    %c0_i32 = arith.constant 0 : i32
    %c0_i32_0 = arith.constant 0 : i32
    %c0_i32_1 = arith.constant 0 : i32
    return %c0_i32, %c0_i32_0 : i32, i32
  }
  func.func @transform_5(%arg0: i32, %arg1: i32) -> (i32, i32) {
    %c0_i32 = arith.constant 0 : i32
    %c0_i32_0 = arith.constant 0 : i32
    %c0_i32_1 = arith.constant 0 : i32
    return %c0_i32, %c0_i32_0 : i32, i32
  }
  func.func @transform_6(%arg0: i32, %arg1: i32) -> (i32, i32) {
    %c0_i32 = arith.constant 0 : i32
    %c0_i32_0 = arith.constant 0 : i32
    %c0_i32_1 = arith.constant 0 : i32
    return %c0_i32, %c0_i32_0 : i32, i32
  }
  func.func @transform_7(%arg0: i32, %arg1: i32) -> (i32, i32) {
    %c0_i32 = arith.constant 0 : i32
    %c0_i32_0 = arith.constant 0 : i32
    %c0_i32_1 = arith.constant 0 : i32
    return %c0_i32, %c0_i32_0 : i32, i32
  }
  func.func @transform_8(%arg0: i32, %arg1: i32) -> (i32, i32) {
    %c0_i32 = arith.constant 0 : i32
    %c0_i32_0 = arith.constant 0 : i32
    %c0_i32_1 = arith.constant 0 : i32
    return %c0_i32, %c0_i32_0 : i32, i32
  }
  func.func @transform_9(%arg0: i32, %arg1: i32) -> (i32, i32) {
    %c0_i32 = arith.constant 0 : i32
    %c0_i32_0 = arith.constant 0 : i32
    %c0_i32_1 = arith.constant 0 : i32
    return %c0_i32, %c0_i32_0 : i32, i32
  }
  func.func @transform_10(%arg0: i32, %arg1: i32) -> (i32, i32) {
    %c0_i32 = arith.constant 0 : i32
    %c0_i32_0 = arith.constant 0 : i32
    %c0_i32_1 = arith.constant 0 : i32
    return %c0_i32, %c0_i32_0 : i32, i32
  }
  func.func @transform_11(%arg0: i32, %arg1: i32) -> (i32, i32) {
    %c0_i32 = arith.constant 0 : i32
    %c0_i32_0 = arith.constant 0 : i32
    %c0_i32_1 = arith.constant 0 : i32
    return %c0_i32, %c0_i32_0 : i32, i32
  }
  func.func @transform_12(%arg0: i32, %arg1: i32) -> (i32, i32) {
    %c0_i32 = arith.constant 0 : i32
    %c0_i32_0 = arith.constant 0 : i32
    %c0_i32_1 = arith.constant 0 : i32
    return %c0_i32, %c0_i32_0 : i32, i32
  }
  func.func @transform_13(%arg0: i32, %arg1: i32) -> (i32, i32, i32) {
    %c0_i32 = arith.constant 0 : i32
    %c0_i32_0 = arith.constant 0 : i32
    return %arg0, %arg1, %c0_i32 : i32, i32, i32
  }
  func.func @transform_14(%arg0: i32, %arg1: i32) -> (i32, i32, i32) {
    %c0_i32 = arith.constant 0 : i32
    %c0_i32_0 = arith.constant 0 : i32
    return %arg0, %arg1, %c0_i32 : i32, i32, i32
  }
  func.func @transform_15(%arg0: i32, %arg1: i32) -> (i32, i32, i32) {
    %c0_i32 = arith.constant 0 : i32
    %c0_i32_0 = arith.constant 0 : i32
    return %arg0, %arg1, %c0_i32 : i32, i32, i32
  }
}

</mosaic_0001>

<llo_original>
// kernel: tpu_custom_call.1
$region0: #{tpu_custom_call.1}
  #allocation0 [shape = 'u32[]', space=smem, size = 0x4, offset = 0x4, fixed_abs, tag = 'smem constant byte address 0x4 - core index']
  #allocation1 [shape = 'u32[144,128]{1,0:T(1,128)}', space=vmem, size = 0x12000, scoped, tag = 'internal scratch']
  #allocation2 [shape = 'f32[4,8,8]{2,1,0:T(8,128)}', space=vmem, size = 0x4000, scoped, tag = 'scratch operand']
  #allocation3 [shape = 'f32[4,8,8]{2,1,0:T(8,128)}', space=vmem, size = 0x4000, scoped, tag = 'scratch operand']
  #allocation4 [shape = 'f32[4,8,8]{2,1,0:T(8,128)}', space=vmem, size = 0x4000, scoped, tag = 'scratch operand']
  %s0 = inlined_call_operand.hbm [shape: f32[2,8,32], index: 0, kind: input, shape index: {}]
  %s1 = inlined_call_operand.hbm [shape: f32[32,32], index: 1, kind: input, shape index: {}]
  %s2 = inlined_call_operand.hbm [shape: f32[32,64], index: 2, kind: input, shape index: {}]
  %s3 = inlined_call_operand.hbm [shape: f32[4,8,32], index: 3, kind: input, shape index: {}]
  %s4 = inlined_call_operand.hbm [shape: f32[1,32], index: 4, kind: input, shape index: {}]
  %s5 = inlined_call_operand.hbm [shape: f32[1,32], index: 5, kind: input, shape index: {}]
  %s6 = inlined_call_operand.hbm [shape: f32[1,32], index: 6, kind: input, shape index: {}]
  %s7 = inlined_call_operand.hbm [shape: f32[1,32], index: 7, kind: input, shape index: {}]
  %s8 = inlined_call_operand.hbm [shape: f32[1,32], index: 8, kind: input, shape index: {}]
  %s9 = inlined_call_operand.hbm [shape: f32[32,128], index: 9, kind: input, shape index: {}]
  %s10 = inlined_call_operand.hbm [shape: f32[1,128], index: 10, kind: input, shape index: {}]
  %s11 = inlined_call_operand.hbm [shape: f32[128,32], index: 11, kind: input, shape index: {}]
  %s12 = inlined_call_operand.hbm [shape: f32[1,32], index: 12, kind: input, shape index: {}]
  %s13 = inlined_call_operand.hbm [shape: f32[2,8,32], index: 13, kind: output, shape index: {0}]
  %s14 = inlined_call_operand.hbm [shape: f32[2,8,32], index: 14, kind: output, shape index: {1}]
  %s15 = inlined_call_operand.hbm [shape: f32[2,8,32], index: 15, kind: output, shape index: {2}]
  %16 = xla_tuple %s13, %s14, %s15
  %s17 = sld [smem:[#allocation0]]
  $region157: #{tpu_custom_call.1} parent=0
    _
  %s19 = ssub.s32 1, %s17
  %s20 = scalar_select 0, %s19, %s17
  $region1: #{tpu_custom_call.1} parent=0
    #allocation5 [shape = 'u8[8192]{0}', space=vmem, size = 0x2000, scoped, tag = 'input window, operand 0']
    #allocation6 [shape = 's32[2]{0}', space=sflag, size = 0x8, scoped, tag = 'scoped memory for tpu_custom_call.1']
    #allocation7 [shape = 's32[2]{0}', space=sflag, size = 0x8, scoped, tag = 'scoped memory for tpu_custom_call.1']
    #allocation8 [shape = 'u8[16384]{0}', space=vmem, size = 0x4000, scoped, tag = 'input window, operand 1, single buffered']
    #allocation9 [shape = 's32[1]{0}', space=sflag, size = 0x4, scoped, tag = 'scoped memory for tpu_custom_call.1']
    #allocation10 [shape = 'u8[16384]{0}', space=vmem, size = 0x4000, scoped, tag = 'input window, operand 2, single buffered']
    #allocation11 [shape = 'u8[16384]{0}', space=vmem, size = 0x4000, scoped, tag = 'input window, operand 3, single buffered']
    #allocation12 [shape = 's32[1]{0}', space=sflag, size = 0x4, scoped, tag = 'scoped memory for tpu_custom_call.1']
    #allocation13 [shape = 'u8[512]{0}', space=vmem, size = 0x400, scoped, tag = 'input window, operand 4, single buffered']
    #allocation14 [shape = 'u8[512]{0}', space=vmem, size = 0x400, scoped, tag = 'input window, operand 5, single buffered']
    #allocation15 [shape = 's32[1]{0}', space=sflag, size = 0x4, scoped, tag = 'scoped memory for tpu_custom_call.1']
    #allocation16 [shape = 'u8[512]{0}', space=vmem, size = 0x400, scoped, tag = 'input window, operand 6, single buffered']
    #allocation17 [shape = 'u8[512]{0}', space=vmem, size = 0x400, scoped, tag = 'input window, operand 7, single buffered']
    #allocation18 [shape = 's32[1]{0}', space=sflag, size = 0x4, scoped, tag = 'scoped memory for tpu_custom_call.1']
    #allocation19 [shape = 'u8[512]{0}', space=vmem, size = 0x400, scoped, tag = 'input window, operand 8, single buffered']
    #allocation20 [shape = 'u8[16384]{0}', space=vmem, size = 0x4000, scoped, tag = 'input window, operand 9, single buffered']
    #allocation21 [shape = 's32[1]{0}', space=sflag, size = 0x4, scoped, tag = 'scoped memory for tpu_custom_call.1']
    #allocation22 [shape = 'u8[512]{0}', space=vmem, size = 0x400, scoped, tag = 'input window, operand 10, single buffered']
    #allocation23 [shape = 'u8[65536]{0}', space=vmem, size = 0x10000, scoped, tag = 'input window, operand 11, single buffered']
    #allocation24 [shape = 's32[1]{0}', space=sflag, size = 0x4, scoped, tag = 'scoped memory for tpu_custom_call.1']
    #allocation25 [shape = 'u8[512]{0}', space=vmem, size = 0x400, scoped, tag = 'input window, operand 12, single buffered']
    #allocation26 [shape = 'u8[8192]{0}', space=vmem, size = 0x2000, scoped, tag = 'output window, operand 0']
    #allocation27 [shape = 'u8[8192]{0}', space=vmem, size = 0x2000, scoped, tag = 'output window, operand 1']
    #allocation28 [shape = 's32[2]{0}', space=sflag, size = 0x8, scoped, tag = 'scoped memory for tpu_custom_call.1']
    #allocation29 [shape = 'u8[8192]{0}', space=vmem, size = 0x2000, scoped, tag = 'output window, operand 2']
    %21 = vsyncpa [#allocation6], 0
    %s22 = scalar_lea.sflag [#allocation6], 1
    %23 = vsyncpa %s22, 0
    %24 = vsyncpa [#allocation9], 0
    %25 = vsyncpa [#allocation12], 0
    %26 = vsyncpa [#allocation15], 0
    %27 = vsyncpa [#allocation18], 0
    %28 = vsyncpa [#allocation21], 0
    %29 = vsyncpa [#allocation24], 0
    %30 = vsyncpa [#allocation7], 0
    %s31 = scalar_lea.sflag [#allocation7], 1
    %32 = vsyncpa %s31, 0
    %33 = vsyncpa [#allocation28], 0
    %s34 = scalar_lea.sflag [#allocation28], 1
    %35 = vsyncpa %s34, 0
    loop: start=0, step=1, limit=4
    $region2: #{tpu_custom_call.1} parent=1 // loop_pre_header
      _
    $region3: #{tpu_custom_call.1} parent=1 // loop_header
      %s37 = sphi 0, %s41
      %p38 = scmp.ge.s32.totalorder %s37, 4
      %s44 = sphi 0, %s56
      %s45 = sphi 0, %s52
      %s46 = sphi 0, %s44
      %s47 = sphi 0, %s45
      %s48 = sphi 0, %s46
      %s49 = sphi 0, %s47
      %s59 = sphi 0, %s61
      %s62 = sphi 0, %s59
      %s63 = sphi 0, %s62
      %s79 = sphi 0, %s63
      %s83 = sphi 0, %s83
      %s85 = sphi 0, %s83
      %s86 = sphi 0, %s85
      %s100 = sphi 0, %s86
      %s104 = sphi 0, %s104
      %s106 = sphi 0, %s104
      %s107 = sphi 0, %s106
      %s121 = sphi 0, %s107
      %s125 = sphi 0, %s125
      %s127 = sphi 0, %s125
      %s128 = sphi 0, %s127
      %s142 = sphi 0, %s128
      %s146 = sphi 0, %s146
      %s148 = sphi 0, %s146
      %s149 = sphi 0, %s148
      %s163 = sphi 0, %s149
      %s167 = sphi 0, %s167
      %s169 = sphi 0, %s167
      %s170 = sphi 0, %s169
      %s184 = sphi 0, %s170
      %s188 = sphi 0, %s188
      %s190 = sphi 0, %s188
      %s191 = sphi 0, %s190
      %s205 = sphi 0, %s191
      %s209 = sphi 0, %s209
      %s211 = sphi 0, %s209
      %s212 = sphi 0, %s211
      %s226 = sphi 0, %s212
      %s230 = sphi 0, %s230
      %s232 = sphi 0, %s230
      %s233 = sphi 0, %s232
      %s247 = sphi 0, %s233
      %s251 = sphi 0, %s251
      %s253 = sphi 0, %s251
      %s254 = sphi 0, %s253
      %s268 = sphi 0, %s254
      %s272 = sphi 0, %s272
      %s274 = sphi 0, %s272
      %s275 = sphi 0, %s274
      %s289 = sphi 0, %s275
      %s293 = sphi 0, %s293
      %s295 = sphi 0, %s293
      %s296 = sphi 0, %s295
      %s310 = sphi 0, %s296
      %s314 = sphi 0, %s314
      %s316 = sphi 0, %s314
      %s317 = sphi 0, %s316
      %s331 = sphi 0, %s317
      %s339 = sphi 0, %s341
      %s342 = sphi 0, %s339
      %s343 = sphi 0, %s342
      %s359 = sphi 0, %s343
      %s367 = sphi 0, %s369
      %s370 = sphi 0, %s367
      %s371 = sphi 0, %s370
      %s387 = sphi 0, %s371
      %s395 = sphi 0, %s397
      %s398 = sphi 0, %s395
      %s399 = sphi 0, %s398
      %s415 = sphi 0, %s399
    $region4: #{tpu_custom_call.1} parent=1 // loop_header_branch
      %40 = sbr.rel (%p38) target = $region8
    $region5: #{tpu_custom_call.1} parent=1 // loop_body
      %s42 = ssub.s32 %s37, 1
      %s43 = ssub.s32 %s37, 2
      %s50 = sadd.s32 1, %s45
      %p51 = scmp.ge.s32.totalorder %s50, 1
      %s52 = scalar_select %p51, 0, %s50
      %s53 = sadd.s32 1, %s44
      %s54 = scalar_select %p51, %s53, %s44
      %p55 = scmp.ge.s32.totalorder %s54, 2
      %s56 = scalar_select %p55, 0, %s54
      %s57 = ssub.s32 %s44, %s56
      %p58 = scmp.eq.s32.totalorder %s57, 0
      %s60 = sadd.s32 %s59, 1
      %s61 = scalar_select %p58, %s59, %s60
      %p64 = pneg %p58
      %p65 = scmp.eq.s32.totalorder %s37, 1
      %p66 = por %p64, %p65
      %p67 = scmp.ne.s32.totalorder %s59, %s62
      %p68 = scmp.eq.s32.totalorder %s37, 0
      %p69 = por %p67, %p68
      %p70 = scmp.ne.s32.totalorder %s59, %s62
      %p71 = scmp.eq.s32.totalorder %s42, 1
      %p72 = por %p70, %p71
      %p73 = scmp.ne.s32.totalorder %s62, %s63
      %p74 = scmp.eq.s32.totalorder %s42, 0
      %p75 = por %p73, %p74
      %p76 = scmp.ne.s32.totalorder %s62, %s63
      %p77 = scmp.eq.s32.totalorder %s43, 1
      %p78 = por %p76, %p77
      %p80 = scmp.ne.s32.totalorder %s63, %s79
      %p81 = scmp.eq.s32.totalorder %s43, 0
      %p82 = por %p80, %p81
      %s84 = sadd.s32 %s83, 1
      %p87 = scmp.eq.s32.totalorder %s37, 1
      %p88 = scmp.ne.s32.totalorder %s83, %s85
      %p89 = scmp.eq.s32.totalorder %s37, 0
      %p90 = por %p88, %p89
      %p91 = scmp.ne.s32.totalorder %s83, %s85
      %p92 = scmp.eq.s32.totalorder %s42, 1
      %p93 = por %p91, %p92
      %p94 = scmp.ne.s32.totalorder %s85, %s86
      %p95 = scmp.eq.s32.totalorder %s42, 0
      %p96 = por %p94, %p95
      %p97 = scmp.ne.s32.totalorder %s85, %s86
      %p98 = scmp.eq.s32.totalorder %s43, 1
      %p99 = por %p97, %p98
      %p101 = scmp.ne.s32.totalorder %s86, %s100
      %p102 = scmp.eq.s32.totalorder %s43, 0
      %p103 = por %p101, %p102
      %s105 = sadd.s32 %s104, 1
      %p108 = scmp.eq.s32.totalorder %s37, 1
      %p109 = scmp.ne.s32.totalorder %s104, %s106
      %p110 = scmp.eq.s32.totalorder %s37, 0
      %p111 = por %p109, %p110
      %p112 = scmp.ne.s32.totalorder %s104, %s106
      %p113 = scmp.eq.s32.totalorder %s42, 1
      %p114 = por %p112, %p113
      %p115 = scmp.ne.s32.totalorder %s106, %s107
      %p116 = scmp.eq.s32.totalorder %s42, 0
      %p117 = por %p115, %p116
      %p118 = scmp.ne.s32.totalorder %s106, %s107
      %p119 = scmp.eq.s32.totalorder %s43, 1
      %p120 = por %p118, %p119
      %p122 = scmp.ne.s32.totalorder %s107, %s121
      %p123 = scmp.eq.s32.totalorder %s43, 0
      %p124 = por %p122, %p123
      %s126 = sadd.s32 %s125, 1
      %p129 = scmp.eq.s32.totalorder %s37, 1
      %p130 = scmp.ne.s32.totalorder %s125, %s127
      %p131 = scmp.eq.s32.totalorder %s37, 0
      %p132 = por %p130, %p131
      %p133 = scmp.ne.s32.totalorder %s125, %s127
      %p134 = scmp.eq.s32.totalorder %s42, 1
      %p135 = por %p133, %p134
      %p136 = scmp.ne.s32.totalorder %s127, %s128
      %p137 = scmp.eq.s32.totalorder %s42, 0
      %p138 = por %p136, %p137
      %p139 = scmp.ne.s32.totalorder %s127, %s128
      %p140 = scmp.eq.s32.totalorder %s43, 1
      %p141 = por %p139, %p140
      %p143 = scmp.ne.s32.totalorder %s128, %s142
      %p144 = scmp.eq.s32.totalorder %s43, 0
      %p145 = por %p143, %p144
      %s147 = sadd.s32 %s146, 1
      %p150 = scmp.eq.s32.totalorder %s37, 1
      %p151 = scmp.ne.s32.totalorder %s146, %s148
      %p152 = scmp.eq.s32.totalorder %s37, 0
      %p153 = por %p151, %p152
      %p154 = scmp.ne.s32.totalorder %s146, %s148
      %p155 = scmp.eq.s32.totalorder %s42, 1
      %p156 = por %p154, %p155
      %p157 = scmp.ne.s32.totalorder %s148, %s149
      %p158 = scmp.eq.s32.totalorder %s42, 0
      %p159 = por %p157, %p158
      %p160 = scmp.ne.s32.totalorder %s148, %s149
      %p161 = scmp.eq.s32.totalorder %s43, 1
      %p162 = por %p160, %p161
      %p164 = scmp.ne.s32.totalorder %s149, %s163
      %p165 = scmp.eq.s32.totalorder %s43, 0
      %p166 = por %p164, %p165
      %s168 = sadd.s32 %s167, 1
      %p171 = scmp.eq.s32.totalorder %s37, 1
      %p172 = scmp.ne.s32.totalorder %s167, %s169
      %p173 = scmp.eq.s32.totalorder %s37, 0
      %p174 = por %p172, %p173
      %p175 = scmp.ne.s32.totalorder %s167, %s169
      %p176 = scmp.eq.s32.totalorder %s42, 1
      %p177 = por %p175, %p176
      %p178 = scmp.ne.s32.totalorder %s169, %s170
      %p179 = scmp.eq.s32.totalorder %s42, 0
      %p180 = por %p178, %p179
      %p181 = scmp.ne.s32.totalorder %s169, %s170
      %p182 = scmp.eq.s32.totalorder %s43, 1
      %p183 = por %p181, %p182
      %p185 = scmp.ne.s32.totalorder %s170, %s184
      %p186 = scmp.eq.s32.totalorder %s43, 0
      %p187 = por %p185, %p186
      %s189 = sadd.s32 %s188, 1
      %p192 = scmp.eq.s32.totalorder %s37, 1
      %p193 = scmp.ne.s32.totalorder %s188, %s190
      %p194 = scmp.eq.s32.totalorder %s37, 0
      %p195 = por %p193, %p194
      %p196 = scmp.ne.s32.totalorder %s188, %s190
      %p197 = scmp.eq.s32.totalorder %s42, 1
      %p198 = por %p196, %p197
      %p199 = scmp.ne.s32.totalorder %s190, %s191
      %p200 = scmp.eq.s32.totalorder %s42, 0
      %p201 = por %p199, %p200
      %p202 = scmp.ne.s32.totalorder %s190, %s191
      %p203 = scmp.eq.s32.totalorder %s43, 1
      %p204 = por %p202, %p203
      %p206 = scmp.ne.s32.totalorder %s191, %s205
      %p207 = scmp.eq.s32.totalorder %s43, 0
      %p208 = por %p206, %p207
      %s210 = sadd.s32 %s209, 1
      %p213 = scmp.eq.s32.totalorder %s37, 1
      %p214 = scmp.ne.s32.totalorder %s209, %s211
      %p215 = scmp.eq.s32.totalorder %s37, 0
      %p216 = por %p214, %p215
      %p217 = scmp.ne.s32.totalorder %s209, %s211
      %p218 = scmp.eq.s32.totalorder %s42, 1
      %p219 = por %p217, %p218
      %p220 = scmp.ne.s32.totalorder %s211, %s212
      %p221 = scmp.eq.s32.totalorder %s42, 0
      %p222 = por %p220, %p221
      %p223 = scmp.ne.s32.totalorder %s211, %s212
      %p224 = scmp.eq.s32.totalorder %s43, 1
      %p225 = por %p223, %p224
      %p227 = scmp.ne.s32.totalorder %s212, %s226
      %p228 = scmp.eq.s32.totalorder %s43, 0
      %p229 = por %p227, %p228
      %s231 = sadd.s32 %s230, 1
      %p234 = scmp.eq.s32.totalorder %s37, 1
      %p235 = scmp.ne.s32.totalorder %s230, %s232
      %p236 = scmp.eq.s32.totalorder %s37, 0
      %p237 = por %p235, %p236
      %p238 = scmp.ne.s32.totalorder %s230, %s232
      %p239 = scmp.eq.s32.totalorder %s42, 1
      %p240 = por %p238, %p239
      %p241 = scmp.ne.s32.totalorder %s232, %s233
      %p242 = scmp.eq.s32.totalorder %s42, 0
      %p243 = por %p241, %p242
      %p244 = scmp.ne.s32.totalorder %s232, %s233
      %p245 = scmp.eq.s32.totalorder %s43, 1
      %p246 = por %p244, %p245
      %p248 = scmp.ne.s32.totalorder %s233, %s247
      %p249 = scmp.eq.s32.totalorder %s43, 0
      %p250 = por %p248, %p249
      %s252 = sadd.s32 %s251, 1
      %p255 = scmp.eq.s32.totalorder %s37, 1
      %p256 = scmp.ne.s32.totalorder %s251, %s253
      %p257 = scmp.eq.s32.totalorder %s37, 0
      %p258 = por %p256, %p257
      %p259 = scmp.ne.s32.totalorder %s251, %s253
      %p260 = scmp.eq.s32.totalorder %s42, 1
      %p261 = por %p259, %p260
      %p262 = scmp.ne.s32.totalorder %s253, %s254
      %p263 = scmp.eq.s32.totalorder %s42, 0
      %p264 = por %p262, %p263
      %p265 = scmp.ne.s32.totalorder %s253, %s254
      %p266 = scmp.eq.s32.totalorder %s43, 1
      %p267 = por %p265, %p266
      %p269 = scmp.ne.s32.totalorder %s254, %s268
      %p270 = scmp.eq.s32.totalorder %s43, 0
      %p271 = por %p269, %p270
      %s273 = sadd.s32 %s272, 1
      %p276 = scmp.eq.s32.totalorder %s37, 1
      %p277 = scmp.ne.s32.totalorder %s272, %s274
      %p278 = scmp.eq.s32.totalorder %s37, 0
      %p279 = por %p277, %p278
      %p280 = scmp.ne.s32.totalorder %s272, %s274
      %p281 = scmp.eq.s32.totalorder %s42, 1
      %p282 = por %p280, %p281
      %p283 = scmp.ne.s32.totalorder %s274, %s275
      %p284 = scmp.eq.s32.totalorder %s42, 0
      %p285 = por %p283, %p284
      %p286 = scmp.ne.s32.totalorder %s274, %s275
      %p287 = scmp.eq.s32.totalorder %s43, 1
      %p288 = por %p286, %p287
      %p290 = scmp.ne.s32.totalorder %s275, %s289
      %p291 = scmp.eq.s32.totalorder %s43, 0
      %p292 = por %p290, %p291
      %s294 = sadd.s32 %s293, 1
      %p297 = scmp.eq.s32.totalorder %s37, 1
      %p298 = scmp.ne.s32.totalorder %s293, %s295
      %p299 = scmp.eq.s32.totalorder %s37, 0
      %p300 = por %p298, %p299
      %p301 = scmp.ne.s32.totalorder %s293, %s295
      %p302 = scmp.eq.s32.totalorder %s42, 1
      %p303 = por %p301, %p302
      %p304 = scmp.ne.s32.totalorder %s295, %s296
      %p305 = scmp.eq.s32.totalorder %s42, 0
      %p306 = por %p304, %p305
      %p307 = scmp.ne.s32.totalorder %s295, %s296
      %p308 = scmp.eq.s32.totalorder %s43, 1
      %p309 = por %p307, %p308
      %p311 = scmp.ne.s32.totalorder %s296, %s310
      %p312 = scmp.eq.s32.totalorder %s43, 0
      %p313 = por %p311, %p312
      %s315 = sadd.s32 %s314, 1
      %p318 = scmp.eq.s32.totalorder %s37, 1
      %p319 = scmp.ne.s32.totalorder %s314, %s316
      %p320 = scmp.eq.s32.totalorder %s37, 0
      %p321 = por %p319, %p320
      %p322 = scmp.ne.s32.totalorder %s314, %s316
      %p323 = scmp.eq.s32.totalorder %s42, 1
      %p324 = por %p322, %p323
      %p325 = scmp.ne.s32.totalorder %s316, %s317
      %p326 = scmp.eq.s32.totalorder %s42, 0
      %p327 = por %p325, %p326
      %p328 = scmp.ne.s32.totalorder %s316, %s317
      %p329 = scmp.eq.s32.totalorder %s43, 1
      %p330 = por %p328, %p329
      %p332 = scmp.ne.s32.totalorder %s317, %s331
      %p333 = scmp.eq.s32.totalorder %s43, 0
      %p334 = por %p332, %p333
      %s335 = ssub.s32 %s44, %s56
      %s336 = ssub.s32 %s45, %s52
      %s337 = sor.u32 %s335, %s336
      %p338 = scmp.eq.s32.totalorder %s337, 0
      %s340 = sadd.s32 %s339, 1
      %s341 = scalar_select %p338, %s339, %s340
      %p344 = pneg %p338
      %p345 = scmp.eq.s32.totalorder %s37, 1
      %p346 = por %p344, %p345
      %p347 = scmp.ne.s32.totalorder %s339, %s342
      %p348 = scmp.eq.s32.totalorder %s37, 0
      %p349 = por %p347, %p348
      %p350 = scmp.ne.s32.totalorder %s339, %s342
      %p351 = scmp.eq.s32.totalorder %s42, 1
      %p352 = por %p350, %p351
      %p353 = scmp.ne.s32.totalorder %s342, %s343
      %p354 = scmp.eq.s32.totalorder %s42, 0
      %p355 = por %p353, %p354
      %p356 = scmp.ne.s32.totalorder %s342, %s343
      %p357 = scmp.eq.s32.totalorder %s43, 1
      %p358 = por %p356, %p357
      %p360 = scmp.ne.s32.totalorder %s343, %s359
      %p361 = scmp.eq.s32.totalorder %s43, 0
      %p362 = por %p360, %p361
      %s363 = ssub.s32 %s44, %s56
      %s364 = ssub.s32 %s45, %s52
      %s365 = sor.u32 %s363, %s364
      %p366 = scmp.eq.s32.totalorder %s365, 0
      %s368 = sadd.s32 %s367, 1
      %s369 = scalar_select %p366, %s367, %s368
      %p372 = pneg %p366
      %p373 = scmp.eq.s32.totalorder %s37, 1
      %p374 = por %p372, %p373
      %p375 = scmp.ne.s32.totalorder %s367, %s370
      %p376 = scmp.eq.s32.totalorder %s37, 0
      %p377 = por %p375, %p376
      %p378 = scmp.ne.s32.totalorder %s367, %s370
      %p379 = scmp.eq.s32.totalorder %s42, 1
      %p380 = por %p378, %p379
      %p381 = scmp.ne.s32.totalorder %s370, %s371
      %p382 = scmp.eq.s32.totalorder %s42, 0
      %p383 = por %p381, %p382
      %p384 = scmp.ne.s32.totalorder %s370, %s371
      %p385 = scmp.eq.s32.totalorder %s43, 1
      %p386 = por %p384, %p385
      %p388 = scmp.ne.s32.totalorder %s371, %s387
      %p389 = scmp.eq.s32.totalorder %s43, 0
      %p390 = por %p388, %p389
      %s391 = ssub.s32 %s44, %s56
      %s392 = ssub.s32 %s45, %s52
      %s393 = sor.u32 %s391, %s392
      %p394 = scmp.eq.s32.totalorder %s393, 0
      %s396 = sadd.s32 %s395, 1
      %s397 = scalar_select %p394, %s395, %s396
      %p400 = pneg %p394
      %p401 = scmp.eq.s32.totalorder %s37, 1
      %p402 = por %p400, %p401
      %p403 = scmp.ne.s32.totalorder %s395, %s398
      %p404 = scmp.eq.s32.totalorder %s37, 0
      %p405 = por %p403, %p404
      %p406 = scmp.ne.s32.totalorder %s395, %s398
      %p407 = scmp.eq.s32.totalorder %s42, 1
      %p408 = por %p406, %p407
      %p409 = scmp.ne.s32.totalorder %s398, %s399
      %p410 = scmp.eq.s32.totalorder %s42, 0
      %p411 = por %p409, %p410
      %p412 = scmp.ne.s32.totalorder %s398, %s399
      %p413 = scmp.eq.s32.totalorder %s43, 1
      %p414 = por %p412, %p413
      %p416 = scmp.ne.s32.totalorder %s399, %s415
      %p417 = scmp.eq.s32.totalorder %s43, 0
      %p418 = por %p416, %p417
      %p419 = scmp.le.s32.totalorder 1, %s37
      %p420 = scmp.lt.s32.totalorder %s37, 3
      %p421 = pnand %p419, %p420
      %p422 = pneg %p421
      // Predicated region
      $region9: #{tpu_custom_call.1} parent=5 // pred_check
        _
      $region10: #{tpu_custom_call.1} parent=5 // pred_check_branch
        %424 = sbr.rel (%p421) target = $region12
      $region11: #{tpu_custom_call.1} parent=5 // pred_region
        %s425 = ssub.s32 %s37, 1
        // Predicated region
        $region13: #{tpu_custom_call.1} parent=11 // pred_check
          %p426 = pneg %p96
        $region14: #{tpu_custom_call.1} parent=11 // pred_check_branch
          %428 = sbr.rel (%p426) target = $region16
        $region15: #{tpu_custom_call.1} parent=11 // pred_region
          %s430 = ssub.s32 512, 512
          %431 = vsyncadd [#allocation9], %s430
          %s432 = sshll.u32 [#allocation8], 4
          %s433 = int_to_ptr.vmem [resolvable:$true] %s432
          %438 = dma.hbm_to_vmem [thread:$0]  %s1, 512, %s433, [#allocation9], 128, 128, 8
        $region16: #{tpu_custom_call.1} parent=11 // pred_fallthru
          _
        // Predicated region
        $region17: #{tpu_custom_call.1} parent=11 // pred_check
          %p439 = pneg %p117
        $region18: #{tpu_custom_call.1} parent=11 // pred_check_branch
          %441 = sbr.rel (%p439) target = $region20
        $region19: #{tpu_custom_call.1} parent=11 // pred_region
          %s443 = ssub.s32 512, 512
          %444 = vsyncadd [#allocation9], %s443
          %s445 = sshll.u32 [#allocation10], 4
          %s446 = int_to_ptr.vmem [resolvable:$true] %s445
          %451 = dma.hbm_to_vmem [thread:$0]  %s2, 512, %s446, [#allocation9], 128, 128, 8
        $region20: #{tpu_custom_call.1} parent=11 // pred_fallthru
          _
        // Predicated region
        $region21: #{tpu_custom_call.1} parent=11 // pred_check
          %p452 = pneg %p138
        $region22: #{tpu_custom_call.1} parent=11 // pred_check_branch
          %454 = sbr.rel (%p452) target = $region24
        $region23: #{tpu_custom_call.1} parent=11 // pred_region
          %s456 = ssub.s32 512, 512
          %457 = vsyncadd [#allocation12], %s456
          %s458 = sshll.u32 [#allocation11], 4
          %s459 = int_to_ptr.vmem [resolvable:$true] %s458
          %464 = dma.hbm_to_vmem [thread:$0]  %s3, 512, %s459, [#allocation12], 128, 128, 8
        $region24: #{tpu_custom_call.1} parent=11 // pred_fallthru
          _
        // Predicated region
        $region25: #{tpu_custom_call.1} parent=11 // pred_check
          %p465 = pneg %p159
        $region26: #{tpu_custom_call.1} parent=11 // pred_check_branch
          %467 = sbr.rel (%p465) target = $region28
        $region27: #{tpu_custom_call.1} parent=11 // pred_region
          %s469 = ssub.s32 16, 16
          %470 = vsyncadd [#allocation12], %s469
          %s472 = sshll.u32 [#allocation13], 4
          %s473 = int_to_ptr.vmem [resolvable:$true] %s472
          %475 = dma.hbm_to_vmem [thread:$0]  %s4, 16, %s473, [#allocation12]
        $region28: #{tpu_custom_call.1} parent=11 // pred_fallthru
          _
        // Predicated region
        $region29: #{tpu_custom_call.1} parent=11 // pred_check
          %p476 = pneg %p180
        $region30: #{tpu_custom_call.1} parent=11 // pred_check_branch
          %478 = sbr.rel (%p476) target = $region32
        $region31: #{tpu_custom_call.1} parent=11 // pred_region
          %s480 = ssub.s32 16, 16
          %481 = vsyncadd [#allocation15], %s480
          %s483 = sshll.u32 [#allocation14], 4
          %s484 = int_to_ptr.vmem [resolvable:$true] %s483
          %486 = dma.hbm_to_vmem [thread:$0]  %s5, 16, %s484, [#allocation15]
        $region32: #{tpu_custom_call.1} parent=11 // pred_fallthru
          _
        // Predicated region
        $region33: #{tpu_custom_call.1} parent=11 // pred_check
          %p487 = pneg %p201
        $region34: #{tpu_custom_call.1} parent=11 // pred_check_branch
          %489 = sbr.rel (%p487) target = $region36
        $region35: #{tpu_custom_call.1} parent=11 // pred_region
          %s491 = ssub.s32 16, 16
          %492 = vsyncadd [#allocation15], %s491
          %s494 = sshll.u32 [#allocation16], 4
          %s495 = int_to_ptr.vmem [resolvable:$true] %s494
          %497 = dma.hbm_to_vmem [thread:$0]  %s6, 16, %s495, [#allocation15]
        $region36: #{tpu_custom_call.1} parent=11 // pred_fallthru
          _
        // Predicated region
        $region37: #{tpu_custom_call.1} parent=11 // pred_check
          %p498 = pneg %p222
        $region38: #{tpu_custom_call.1} parent=11 // pred_check_branch
          %500 = sbr.rel (%p498) target = $region40
        $region39: #{tpu_custom_call.1} parent=11 // pred_region
          %s502 = ssub.s32 16, 16
          %503 = vsyncadd [#allocation18], %s502
          %s505 = sshll.u32 [#allocation17], 4
          %s506 = int_to_ptr.vmem [resolvable:$true] %s505
          %508 = dma.hbm_to_vmem [thread:$0]  %s7, 16, %s506, [#allocation18]
        $region40: #{tpu_custom_call.1} parent=11 // pred_fallthru
          _
        // Predicated region
        $region41: #{tpu_custom_call.1} parent=11 // pred_check
          %p509 = pneg %p243
        $region42: #{tpu_custom_call.1} parent=11 // pred_check_branch
          %511 = sbr.rel (%p509) target = $region44
        $region43: #{tpu_custom_call.1} parent=11 // pred_region
          %s513 = ssub.s32 16, 16
          %514 = vsyncadd [#allocation18], %s513
          %s516 = sshll.u32 [#allocation19], 4
          %s517 = int_to_ptr.vmem [resolvable:$true] %s516
          %519 = dma.hbm_to_vmem [thread:$0]  %s8, 16, %s517, [#allocation18]
        $region44: #{tpu_custom_call.1} parent=11 // pred_fallthru
          _
        // Predicated region
        $region45: #{tpu_custom_call.1} parent=11 // pred_check
          %p520 = pneg %p264
        $region46: #{tpu_custom_call.1} parent=11 // pred_check_branch
          %522 = sbr.rel (%p520) target = $region48
        $region47: #{tpu_custom_call.1} parent=11 // pred_region
          %s524 = ssub.s32 512, 512
          %525 = vsyncadd [#allocation21], %s524
          %s526 = sshll.u32 [#allocation20], 4
          %s527 = int_to_ptr.vmem [resolvable:$true] %s526
          %532 = dma.hbm_to_vmem [thread:$0]  %s9, 512, %s527, [#allocation21], 128, 128, 8
        $region48: #{tpu_custom_call.1} parent=11 // pred_fallthru
          _
        // Predicated region
        $region49: #{tpu_custom_call.1} parent=11 // pred_check
          %p533 = pneg %p285
        $region50: #{tpu_custom_call.1} parent=11 // pred_check_branch
          %535 = sbr.rel (%p533) target = $region52
        $region51: #{tpu_custom_call.1} parent=11 // pred_region
          %s537 = ssub.s32 16, 16
          %538 = vsyncadd [#allocation21], %s537
          %s540 = sshll.u32 [#allocation22], 4
          %s541 = int_to_ptr.vmem [resolvable:$true] %s540
          %543 = dma.hbm_to_vmem [thread:$0]  %s10, 16, %s541, [#allocation21]
        $region52: #{tpu_custom_call.1} parent=11 // pred_fallthru
          _
        // Predicated region
        $region53: #{tpu_custom_call.1} parent=11 // pred_check
          %p544 = pneg %p306
        $region54: #{tpu_custom_call.1} parent=11 // pred_check_branch
          %546 = sbr.rel (%p544) target = $region56
        $region55: #{tpu_custom_call.1} parent=11 // pred_region
          %s548 = ssub.s32 2048, 2048
          %549 = vsyncadd [#allocation24], %s548
          %s550 = sshll.u32 [#allocation23], 4
          %s551 = int_to_ptr.vmem [resolvable:$true] %s550
          %556 = dma.hbm_to_vmem [thread:$0]  %s11, 2048, %s551, [#allocation24], 128, 128, 8
        $region56: #{tpu_custom_call.1} parent=11 // pred_fallthru
          _
        // Predicated region
        $region57: #{tpu_custom_call.1} parent=11 // pred_check
          %p557 = pneg %p327
        $region58: #{tpu_custom_call.1} parent=11 // pred_check_branch
          %559 = sbr.rel (%p557) target = $region60
        $region59: #{tpu_custom_call.1} parent=11 // pred_region
          %s561 = ssub.s32 16, 16
          %562 = vsyncadd [#allocation24], %s561
          %s564 = sshll.u32 [#allocation25], 4
          %s565 = int_to_ptr.vmem [resolvable:$true] %s564
          %567 = dma.hbm_to_vmem [thread:$0]  %s12, 16, %s565, [#allocation24]
        $region60: #{tpu_custom_call.1} parent=11 // pred_fallthru
          _
      $region12: #{tpu_custom_call.1} parent=5 // pred_fallthru
        _
      %p568 = scmp.lt.s32.totalorder %s37, 2
      // Predicated region
      $region61: #{tpu_custom_call.1} parent=5 // pred_check
        %p569 = pneg %p568
      $region62: #{tpu_custom_call.1} parent=5 // pred_check_branch
        %571 = sbr.rel (%p569) target = $region64
      $region63: #{tpu_custom_call.1} parent=5 // pred_region
        // Predicated region
        $region65: #{tpu_custom_call.1} parent=63 // pred_check
          %p572 = pneg %p69
        $region66: #{tpu_custom_call.1} parent=63 // pred_check_branch
          %574 = sbr.rel (%p572) target = $region68
        $region67: #{tpu_custom_call.1} parent=63 // pred_region
          %s575 = sand.u32 %s59, 1
          %s576 = scalar_lea.sflag [#allocation6], %s575
          %s577 = sand.u32 %s59, 1
          %s578 = smul.addr %s577, 8
          %s579 = scalar_lea.vmem [#allocation5], %s578
          %s581 = ssub.s32 128, 128
          %582 = vsyncadd %s576, %s581
          %s583 = smul.addr %s44, 128
          %s584 = scalar_lea.hbm %s0, %s583
          %s586 = sshll.u32 %s579, 4
          %s587 = int_to_ptr.vmem [resolvable:$true] %s586
          %589 = dma.hbm_to_vmem [thread:$0]  %s584, 128, %s587, %s576
        $region68: #{tpu_custom_call.1} parent=63 // pred_fallthru
          _
      $region64: #{tpu_custom_call.1} parent=5 // pred_fallthru
        _
      %p590 = scmp.le.s32.totalorder 1, %s37
      %p591 = scmp.lt.s32.totalorder %s37, 3
      %p592 = pnand %p590, %p591
      %p593 = pneg %p592
      // Predicated region
      $region69: #{tpu_custom_call.1} parent=5 // pred_check
        _
      $region70: #{tpu_custom_call.1} parent=5 // pred_check_branch
        %595 = sbr.rel (%p592) target = $region72
      $region71: #{tpu_custom_call.1} parent=5 // pred_region
        %s596 = ssub.s32 %s37, 1
        %s597 = sand.u32 %s62, 1
        %s598 = scalar_lea.sflag [#allocation6], %s597
        %s599 = sand.u32 %s62, 1
        %s600 = smul.addr %s599, 8
        %s601 = scalar_lea.vmem [#allocation5], %s600
        // Predicated region
        $region73: #{tpu_custom_call.1} parent=71 // pred_check
          %p602 = pneg %p75
        $region74: #{tpu_custom_call.1} parent=71 // pred_check_branch
          %604 = sbr.rel (%p602) target = $region76
        $region75: #{tpu_custom_call.1} parent=71 // pred_region
          %605 = dma.done %s598, 128
        $region76: #{tpu_custom_call.1} parent=71 // pred_fallthru
          _
        // Predicated region
        $region77: #{tpu_custom_call.1} parent=71 // pred_check
          %p606 = pneg %p96
        $region78: #{tpu_custom_call.1} parent=71 // pred_check_branch
          %608 = sbr.rel (%p606) target = $region80
        $region79: #{tpu_custom_call.1} parent=71 // pred_region
          %609 = dma.done [#allocation9], 512
        $region80: #{tpu_custom_call.1} parent=71 // pred_fallthru
          _
        // Predicated region
        $region81: #{tpu_custom_call.1} parent=71 // pred_check
          %p610 = pneg %p117
        $region82: #{tpu_custom_call.1} parent=71 // pred_check_branch
          %612 = sbr.rel (%p610) target = $region84
        $region83: #{tpu_custom_call.1} parent=71 // pred_region
          %613 = dma.done [#allocation9], 512
        $region84: #{tpu_custom_call.1} parent=71 // pred_fallthru
          _
        // Predicated region
        $region85: #{tpu_custom_call.1} parent=71 // pred_check
          %p614 = pneg %p138
        $region86: #{tpu_custom_call.1} parent=71 // pred_check_branch
          %616 = sbr.rel (%p614) target = $region88
        $region87: #{tpu_custom_call.1} parent=71 // pred_region
          %617 = dma.done [#allocation12], 512
        $region88: #{tpu_custom_call.1} parent=71 // pred_fallthru
          _
        // Predicated region
        $region89: #{tpu_custom_call.1} parent=71 // pred_check
          %p618 = pneg %p159
        $region90: #{tpu_custom_call.1} parent=71 // pred_check_branch
          %620 = sbr.rel (%p618) target = $region92
        $region91: #{tpu_custom_call.1} parent=71 // pred_region
          %621 = dma.done [#allocation12], 16
        $region92: #{tpu_custom_call.1} parent=71 // pred_fallthru
          _
        // Predicated region
        $region93: #{tpu_custom_call.1} parent=71 // pred_check
          %p622 = pneg %p180
        $region94: #{tpu_custom_call.1} parent=71 // pred_check_branch
          %624 = sbr.rel (%p622) target = $region96
        $region95: #{tpu_custom_call.1} parent=71 // pred_region
          %625 = dma.done [#allocation15], 16
        $region96: #{tpu_custom_call.1} parent=71 // pred_fallthru
          _
        // Predicated region
        $region97: #{tpu_custom_call.1} parent=71 // pred_check
          %p626 = pneg %p201
        $region98: #{tpu_custom_call.1} parent=71 // pred_check_branch
          %628 = sbr.rel (%p626) target = $region100
        $region99: #{tpu_custom_call.1} parent=71 // pred_region
          %629 = dma.done [#allocation15], 16
        $region100: #{tpu_custom_call.1} parent=71 // pred_fallthru
          _
        // Predicated region
        $region101: #{tpu_custom_call.1} parent=71 // pred_check
          %p630 = pneg %p222
        $region102: #{tpu_custom_call.1} parent=71 // pred_check_branch
          %632 = sbr.rel (%p630) target = $region104
        $region103: #{tpu_custom_call.1} parent=71 // pred_region
          %633 = dma.done [#allocation18], 16
        $region104: #{tpu_custom_call.1} parent=71 // pred_fallthru
          _
        // Predicated region
        $region105: #{tpu_custom_call.1} parent=71 // pred_check
          %p634 = pneg %p243
        $region106: #{tpu_custom_call.1} parent=71 // pred_check_branch
          %636 = sbr.rel (%p634) target = $region108
        $region107: #{tpu_custom_call.1} parent=71 // pred_region
          %637 = dma.done [#allocation18], 16
        $region108: #{tpu_custom_call.1} parent=71 // pred_fallthru
          _
        // Predicated region
        $region109: #{tpu_custom_call.1} parent=71 // pred_check
          %p638 = pneg %p264
        $region110: #{tpu_custom_call.1} parent=71 // pred_check_branch
          %640 = sbr.rel (%p638) target = $region112
        $region111: #{tpu_custom_call.1} parent=71 // pred_region
          %641 = dma.done [#allocation21], 512
        $region112: #{tpu_custom_call.1} parent=71 // pred_fallthru
          _
        // Predicated region
        $region113: #{tpu_custom_call.1} parent=71 // pred_check
          %p642 = pneg %p285
        $region114: #{tpu_custom_call.1} parent=71 // pred_check_branch
          %644 = sbr.rel (%p642) target = $region116
        $region115: #{tpu_custom_call.1} parent=71 // pred_region
          %645 = dma.done [#allocation21], 16
        $region116: #{tpu_custom_call.1} parent=71 // pred_fallthru
          _
        // Predicated region
        $region117: #{tpu_custom_call.1} parent=71 // pred_check
          %p646 = pneg %p306
        $region118: #{tpu_custom_call.1} parent=71 // pred_check_branch
          %648 = sbr.rel (%p646) target = $region120
        $region119: #{tpu_custom_call.1} parent=71 // pred_region
          %649 = dma.done [#allocation24], 2048
        $region120: #{tpu_custom_call.1} parent=71 // pred_fallthru
          _
        // Predicated region
        $region121: #{tpu_custom_call.1} parent=71 // pred_check
          %p650 = pneg %p327
        $region122: #{tpu_custom_call.1} parent=71 // pred_check_branch
          %652 = sbr.rel (%p650) target = $region124
        $region123: #{tpu_custom_call.1} parent=71 // pred_region
          %653 = dma.done [#allocation24], 16
        $region124: #{tpu_custom_call.1} parent=71 // pred_fallthru
          _
        %s654 = sand.u32 %s62, 1
        %s655 = scalar_lea.sflag [#allocation6], %s654
        %s656 = sand.u32 %s62, 1
        %s657 = smul.addr %s656, 8
        %s658 = scalar_lea.vmem [#allocation5], %s657
        %p659 = pneg %p75
        %p660 = pneg %p72
        %p661 = pneg %p96
        %p662 = pneg %p93
        %p663 = pneg %p117
        %p664 = pneg %p114
        %p665 = pneg %p138
        %p666 = pneg %p135
        %p667 = pneg %p159
        %p668 = pneg %p156
        %p669 = pneg %p180
        %p670 = pneg %p177
        %p671 = pneg %p201
        %p672 = pneg %p198
        %p673 = pneg %p222
        %p674 = pneg %p219
        %p675 = pneg %p243
        %p676 = pneg %p240
        %p677 = pneg %p264
        %p678 = pneg %p261
        %p679 = pneg %p285
        %p680 = pneg %p282
        %p681 = pneg %p306
        %p682 = pneg %p303
        %p683 = pneg %p327
        %p684 = pneg %p324
        %p685 = pneg %p355
        %p686 = pneg %p352
        %s687 = sand.u32 %s342, 1
        %s688 = scalar_lea.sflag [#allocation7], %s687
        %s689 = sand.u32 %s342, 1
        %s690 = smul.addr %s689, 8
        %s691 = scalar_lea.vmem [#allocation26], %s690
        %p692 = pneg %p383
        %p693 = pneg %p380
        %s694 = sand.u32 %s42, 1
        %s695 = scalar_lea.sflag [#allocation28], %s694
        %s696 = sand.u32 %s370, 1
        %s697 = smul.addr %s696, 8
        %s698 = scalar_lea.vmem [#allocation27], %s697
        %p699 = pneg %p411
        %p700 = pneg %p408
        %s701 = sand.u32 %s42, 1
        %s702 = scalar_lea.sflag [#allocation28], %s701
        %s703 = sand.u32 %s398, 1
        %s704 = smul.addr %s703, 8
        %s705 = scalar_lea.vmem [#allocation29], %s704
        %v706 = vld [vmem:[#allocation14] sm:$0x1]
        %v707 = vld [vmem:[#allocation16] sm:$0x1]
        %p708 = scmp.eq.s32.totalorder %s47, 0
        // Predicated region
        $region125: #{tpu_custom_call.1} parent=71 // pred_check
          %p709 = pneg %p708
        $region126: #{tpu_custom_call.1} parent=71 // pred_check_branch
          %711 = sbr.rel (%p709) target = $region128
        $region127: #{tpu_custom_call.1} parent=71 // pred_region
          %v712 = vld [vmem:[%s601] sm:$0xff]
          %vm713 = vcmask 261120
          %v714 = vsel %vm713, %v712, 0.0
          %715 = vadd.xlane.f32.xlu0 %v714
          %v716 = vpop.xlane.xlu0 %715
          %v717 = vrcp.pop 32.0
          %v718 = vmul.f32 %v716, %v717
          %v719 = vsub.f32 %v712, %v718
          %v720 = vmul.f32 %v719, %v719
          %v721 = vsel %vm713, %v720, 0.0
          %722 = vadd.xlane.f32.xlu0 %v721
          %v723 = vpop.xlane.xlu0 %722
          %v724 = vmul.f32 %v723, %v717
          %v725 = vadd.f32 %v724, 1e-05
          %v726 = vrsqrt.pop %v725
          %v727 = vmul.f32 %v719, %v726
          %v729 = vlaneseq
          %v730 = vshrl.u32 %v729, 7
          %v731 = vsub.s32 0, %v730
          %v732 = vrot.slane %v706, %v731
          %v734 = vmul.f32 %v727, %v732
          %v736 = vlaneseq
          %v737 = vshrl.u32 %v736, 7
          %v738 = vsub.s32 0, %v737
          %v739 = vrot.slane %v707, %v738
          %v741 = vadd.f32 %v734, %v739
          %v742 = vld [vmem:[#allocation10] sm:$0xff]
          %v743 = vld [vmem:[#allocation10 + $0x8] sm:$0xff]
          %v744 = vld [vmem:[#allocation10 + $0x10] sm:$0xff]
          %v745 = vld [vmem:[#allocation10 + $0x18] sm:$0xff]
          %v747 = vsel %vm713, %v741, 0
          %749 = vmatprep.subr.mxu0 0.0
          %750 = vmatpush1.msra.mxu0 %v742
          %751 = vmatprep.subr.mxu0 0.0
          %752 = vmatpush1.msra.mxu0 %v743
          %753 = vmatprep.subr.mxu0 0.0
          %754 = vmatpush1.msra.mxu0 %v744
          %755 = vmatprep.subr.mxu0 0.0
          %756 = vmatpush1.msra.mxu0 %v745
          %757 = vmatprep.subr.mxu0 0.0
          %758 = vmatpush1.msra.mxu0 0.0
          %759 = vmatprep.subr.mxu0 0.0
          %760 = vmatpush1.msra.mxu0 0.0
          %761 = vmatprep.subr.mxu0 0.0
          %762 = vmatpush1.msra.mxu0 0.0
          %763 = vmatprep.subr.mxu0 0.0
          %764 = vmatpush1.msra.mxu0 0.0
          %765 = vmatprep.subr.mxu0 0.0
          %766 = vmatpush1.msra.mxu0 0.0
          %767 = vmatprep.subr.mxu0 0.0
          %768 = vmatpush1.msra.mxu0 0.0
          %769 = vmatprep.subr.mxu0 0.0
          %770 = vmatpush1.msra.mxu0 0.0
          %771 = vmatprep.subr.mxu0 0.0
          %772 = vmatpush1.msra.mxu0 0.0
          %773 = vmatprep.subr.mxu0 0.0
          %774 = vmatpush1.msra.mxu0 0.0
          %775 = vmatprep.subr.mxu0 0.0
          %776 = vmatpush1.msra.mxu0 0.0
          %777 = vmatprep.subr.mxu0 0.0
          %778 = vmatpush1.msra.mxu0 0.0
          %779 = vmatprep.subr.mxu0 0.0
          %780 = vmatpush1.msra.mxu0 0.0
          %781 = vmatprep.subr.mxu0 0.0
          %782 = vmatpush1.msra.mxu0 0.0
          %783 = vmatprep.subr.mxu0 0.0
          %784 = vmatpush1.msra.mxu0 0.0
          %785 = vmatprep.subr.mxu0 0.0
          %786 = vmatpush1.msra.mxu0 0.0
          %787 = vmatprep.subr.mxu0 0.0
          %788 = vmatpush1.msra.mxu0 0.0
          %789 = vmatprep.subr.mxu0 0.0
          %790 = vmatpush1.msra.mxu0 0.0
          %791 = vmatprep.subr.mxu0 0.0
          %792 = vmatpush1.msra.mxu0 0.0
          %793 = vmatprep.subr.mxu0 0.0
          %794 = vmatpush1.msra.mxu0 0.0
          %795 = vmatprep.subr.mxu0 0.0
          %796 = vmatpush1.msra.mxu0 0.0
          %797 = vmatprep.subr.mxu0 0.0
          %798 = vmatpush1.msra.mxu0 0.0
          %799 = vmatprep.subr.mxu0 0.0
          %800 = vmatpush1.msra.mxu0 0.0
          %801 = vmatprep.subr.mxu0 0.0
          %802 = vmatpush1.msra.mxu0 0.0
          %803 = vmatprep.subr.mxu0 0.0
          %804 = vmatpush1.msra.mxu0 0.0
          %805 = vmatprep.subr.mxu0 0.0
          %806 = vmatpush1.msra.mxu0 0.0
          %807 = vmatprep.subr.mxu0 0.0
          %808 = vmatpush1.msra.mxu0 0.0
          %809 = vmatprep.subr.mxu0 0.0
          %810 = vmatpush1.msra.mxu0 0.0
          %811 = vmatprep.subr.mxu0 0.0
          %812 = vmatpush1.msra.mxu0 0.0
          %813 = vmatprep.mubr.f32.mxu0 0.0
          %814 = vmatmul.mubr.f32.gmra.mrb[0].mxu0 %v747
          %v815 = vpop.f32.mrb[0].mxu0
          %v816 = vadd.f32 0.0, %v815
          %v817 = vpop.f32.mrb[0].mxu0
          %818 = vdwg.mxu0
          %vm819 = vcmask 64512
          %820 = vst.msk [vmem:[#allocation3] sm:$0xff] %vm819, %v816
          %822 = vrot.lane.b32.xlu0 %v816, 96
          %v823 = vpop.permute.xlu0 %822
          %825 = vst.msk [vmem:[#allocation4] sm:$0xff] %vm819, %v823
          %826 = vrot.lane.b32.xlu0 %v816, 120
          %v827 = vpop.permute.xlu0 %826
          %s829 = scalar_lea.vmem [#allocation3], 8
          %830 = vst.msk [vmem:[%s829] sm:$0xff] %vm819, %v827
          %831 = vrot.lane.b32.xlu0 %v816, 88
          %v832 = vpop.permute.xlu0 %831
          %s834 = scalar_lea.vmem [#allocation4], 8
          %835 = vst.msk [vmem:[%s834] sm:$0xff] %vm819, %v832
          %836 = vrot.lane.b32.xlu0 %v816, 112
          %v837 = vpop.permute.xlu0 %836
          %s839 = scalar_lea.vmem [#allocation3], 16
          %840 = vst.msk [vmem:[%s839] sm:$0xff] %vm819, %v837
          %841 = vrot.lane.b32.xlu0 %v816, 80
          %v842 = vpop.permute.xlu0 %841
          %s844 = scalar_lea.vmem [#allocation4], 16
          %845 = vst.msk [vmem:[%s844] sm:$0xff] %vm819, %v842
          %846 = vrot.lane.b32.xlu0 %v816, 104
          %v847 = vpop.permute.xlu0 %846
          %s849 = scalar_lea.vmem [#allocation3], 24
          %850 = vst.msk [vmem:[%s849] sm:$0xff] %vm819, %v847
          %851 = vrot.lane.b32.xlu0 %v816, 72
          %v852 = vpop.permute.xlu0 %851
          %s854 = scalar_lea.vmem [#allocation4], 24
          %855 = vst.msk [vmem:[%s854] sm:$0xff] %vm819, %v852
        $region128: #{tpu_custom_call.1} parent=71 // pred_fallthru
          _
        %s856 = smul.u32 %s47, 8
        %s857 = scalar_lea.vmem %s601, %s856 [#allocation5]
        %v858 = vld [vmem:[%s857] sm:$0xff]
        %vm859 = vcmask 261120
        %v860 = vsel %vm859, %v858, 0.0
        %861 = vadd.xlane.f32.xlu0 %v860
        %v862 = vpop.xlane.xlu0 %861
        %v863 = vrcp.pop 32.0
        %v864 = vmul.f32 %v862, %v863
        %v865 = vsub.f32 %v858, %v864
        %v866 = vmul.f32 %v865, %v865
        %v867 = vsel %vm859, %v866, 0.0
        %868 = vadd.xlane.f32.xlu0 %v867
        %v869 = vpop.xlane.xlu0 %868
        %v870 = vmul.f32 %v869, %v863
        %v871 = vadd.f32 %v870, 1e-05
        %v872 = vrsqrt.pop %v871
        %v873 = vmul.f32 %v865, %v872
        %v875 = vlaneseq
        %v876 = vshrl.u32 %v875, 7
        %v877 = vsub.s32 0, %v876
        %v878 = vrot.slane %v706, %v877
        %v880 = vmul.f32 %v873, %v878
        %v882 = vlaneseq
        %v883 = vshrl.u32 %v882, 7
        %v884 = vsub.s32 0, %v883
        %v885 = vrot.slane %v707, %v884
        %v887 = vadd.f32 %v880, %v885
        %v888 = vld [vmem:[#allocation8] sm:$0xff]
        %v889 = vld [vmem:[#allocation8 + $0x8] sm:$0xff]
        %v890 = vld [vmem:[#allocation8 + $0x10] sm:$0xff]
        %v891 = vld [vmem:[#allocation8 + $0x18] sm:$0xff]
        %v893 = vsel %vm859, %v887, 0
        %895 = vmatprep.subr.mxu0 0.0
        %896 = vmatpush1.msra.mxu0 %v888
        %897 = vmatprep.subr.mxu0 0.0
        %898 = vmatpush1.msra.mxu0 %v889
        %899 = vmatprep.subr.mxu0 0.0
        %900 = vmatpush1.msra.mxu0 %v890
        %901 = vmatprep.subr.mxu0 0.0
        %902 = vmatpush1.msra.mxu0 %v891
        %903 = vmatprep.subr.mxu0 0.0
        %904 = vmatpush1.msra.mxu0 0.0
        %905 = vmatprep.subr.mxu0 0.0
        %906 = vmatpush1.msra.mxu0 0.0
        %907 = vmatprep.subr.mxu0 0.0
        %908 = vmatpush1.msra.mxu0 0.0
        %909 = vmatprep.subr.mxu0 0.0
        %910 = vmatpush1.msra.mxu0 0.0
        %911 = vmatprep.subr.mxu0 0.0
        %912 = vmatpush1.msra.mxu0 0.0
        %913 = vmatprep.subr.mxu0 0.0
        %914 = vmatpush1.msra.mxu0 0.0
        %915 = vmatprep.subr.mxu0 0.0
        %916 = vmatpush1.msra.mxu0 0.0
        %917 = vmatprep.subr.mxu0 0.0
        %918 = vmatpush1.msra.mxu0 0.0
        %919 = vmatprep.subr.mxu0 0.0
        %920 = vmatpush1.msra.mxu0 0.0
        %921 = vmatprep.subr.mxu0 0.0
        %922 = vmatpush1.msra.mxu0 0.0
        %923 = vmatprep.subr.mxu0 0.0
        %924 = vmatpush1.msra.mxu0 0.0
        %925 = vmatprep.subr.mxu0 0.0
        %926 = vmatpush1.msra.mxu0 0.0
        %927 = vmatprep.subr.mxu0 0.0
        %928 = vmatpush1.msra.mxu0 0.0
        %929 = vmatprep.subr.mxu0 0.0
        %930 = vmatpush1.msra.mxu0 0.0
        %931 = vmatprep.subr.mxu0 0.0
        %932 = vmatpush1.msra.mxu0 0.0
        %933 = vmatprep.subr.mxu0 0.0
        %934 = vmatpush1.msra.mxu0 0.0
        %935 = vmatprep.subr.mxu0 0.0
        %936 = vmatpush1.msra.mxu0 0.0
        %937 = vmatprep.subr.mxu0 0.0
        %938 = vmatpush1.msra.mxu0 0.0
        %939 = vmatprep.subr.mxu0 0.0
        %940 = vmatpush1.msra.mxu0 0.0
        %941 = vmatprep.subr.mxu0 0.0
        %942 = vmatpush1.msra.mxu0 0.0
        %943 = vmatprep.subr.mxu0 0.0
        %944 = vmatpush1.msra.mxu0 0.0
        %945 = vmatprep.subr.mxu0 0.0
        %946 = vmatpush1.msra.mxu0 0.0
        %947 = vmatprep.subr.mxu0 0.0
        %948 = vmatpush1.msra.mxu0 0.0
        %949 = vmatprep.subr.mxu0 0.0
        %950 = vmatpush1.msra.mxu0 0.0
        %951 = vmatprep.subr.mxu0 0.0
        %952 = vmatpush1.msra.mxu0 0.0
        %953 = vmatprep.subr.mxu0 0.0
        %954 = vmatpush1.msra.mxu0 0.0
        %955 = vmatprep.subr.mxu0 0.0
        %956 = vmatpush1.msra.mxu0 0.0
        %957 = vmatprep.subr.mxu0 0.0
        %958 = vmatpush1.msra.mxu0 0.0
        %959 = vmatprep.mubr.f32.mxu0 0.0
        %960 = vmatmul.mubr.f32.gmra.mrb[0].mxu0 %v893
        %v961 = vpop.f32.mrb[0].mxu0
        %v962 = vadd.f32 0.0, %v961
        %v963 = vpop.f32.mrb[0].mxu0
        %964 = vdwg.mxu0
        %vm965 = vcmask 64512
        %966 = vst.msk [vmem:[#allocation2] sm:$0xff] %vm965, %v962
        %968 = vrot.lane.b32.xlu0 %v962, 120
        %v969 = vpop.permute.xlu0 %968
        %s971 = scalar_lea.vmem [#allocation2], 8
        %972 = vst.msk [vmem:[%s971] sm:$0xff] %vm965, %v969
        %973 = vrot.lane.b32.xlu0 %v962, 112
        %v974 = vpop.permute.xlu0 %973
        %s976 = scalar_lea.vmem [#allocation2], 16
        %977 = vst.msk [vmem:[%s976] sm:$0xff] %vm965, %v974
        %978 = vrot.lane.b32.xlu0 %v962, 104
        %v979 = vpop.permute.xlu0 %978
        %s981 = scalar_lea.vmem [#allocation2], 24
        %982 = vst.msk [vmem:[%s981] sm:$0xff] %vm965, %v979
        %v983 = vld [vmem:[#allocation2] sm:$0xff]
        %v984 = vld [vmem:[#allocation2 + $0x8] sm:$0xff]
        %v985 = vld [vmem:[#allocation2 + $0x10] sm:$0xff]
        %v986 = vld [vmem:[#allocation2 + $0x18] sm:$0xff]
        %v987 = vld [vmem:[#allocation3] sm:$0xff]
        %v988 = vld [vmem:[#allocation3 + $0x8] sm:$0xff]
        %v989 = vld [vmem:[#allocation3 + $0x10] sm:$0xff]
        %v990 = vld [vmem:[#allocation3 + $0x18] sm:$0xff]
        %v991 = vld [vmem:[#allocation4] sm:$0xff]
        %v992 = vld [vmem:[#allocation4 + $0x8] sm:$0xff]
        %v993 = vld [vmem:[#allocation4 + $0x10] sm:$0xff]
        %v994 = vld [vmem:[#allocation4 + $0x18] sm:$0xff]
        %v996 = vsel %vm965, %v983, 0
        %v999 = vsel %vm965, %v987, 0
        %1001 = vmatprep.subr.mxu0 0.0
        %1002 = vmatpush1.xpose.msra.mxu0 %v999
        %1003 = vmatprep.subr.mxu0 0.0
        %1004 = vmatpush1.xpose.msra.mxu0 0.0
        %1005 = vmatprep.subr.mxu0 0.0
        %1006 = vmatpush1.xpose.msra.mxu0 0.0
        %1007 = vmatprep.subr.mxu0 0.0
        %1008 = vmatpush1.xpose.msra.mxu0 0.0
        %1009 = vmatprep.subr.mxu0 0.0
        %1010 = vmatpush1.xpose.msra.mxu0 0.0
        %1011 = vmatprep.subr.mxu0 0.0
        %1012 = vmatpush1.xpose.msra.mxu0 0.0
        %1013 = vmatprep.subr.mxu0 0.0
        %1014 = vmatpush1.xpose.msra.mxu0 0.0
        %1015 = vmatprep.subr.mxu0 0.0
        %1016 = vmatpush1.xpose.msra.mxu0 0.0
        %1017 = vmatprep.subr.mxu0 0.0
        %1018 = vmatpush1.xpose.msra.mxu0 0.0
        %1019 = vmatprep.subr.mxu0 0.0
        %1020 = vmatpush1.xpose.msra.mxu0 0.0
        %1021 = vmatprep.subr.mxu0 0.0
        %1022 = vmatpush1.xpose.msra.mxu0 0.0
        %1023 = vmatprep.subr.mxu0 0.0
        %1024 = vmatpush1.xpose.msra.mxu0 0.0
        %1025 = vmatprep.subr.mxu0 0.0
        %1026 = vmatpush1.xpose.msra.mxu0 0.0
        %1027 = vmatprep.subr.mxu0 0.0
        %1028 = vmatpush1.xpose.msra.mxu0 0.0
        %1029 = vmatprep.subr.mxu0 0.0
        %1030 = vmatpush1.xpose.msra.mxu0 0.0
        %1031 = vmatprep.subr.mxu0 0.0
        %1032 = vmatpush1.xpose.msra.mxu0 0.0
        %1033 = vmatprep.subr.mxu0 0.0
        %1034 = vmatpush1.xpose.msra.mxu0 0.0
        %1035 = vmatprep.subr.mxu0 0.0
        %1036 = vmatpush1.xpose.msra.mxu0 0.0
        %1037 = vmatprep.subr.mxu0 0.0
        %1038 = vmatpush1.xpose.msra.mxu0 0.0
        %1039 = vmatprep.subr.mxu0 0.0
        %1040 = vmatpush1.xpose.msra.mxu0 0.0
        %1041 = vmatprep.subr.mxu0 0.0
        %1042 = vmatpush1.xpose.msra.mxu0 0.0
        %1043 = vmatprep.subr.mxu0 0.0
        %1044 = vmatpush1.xpose.msra.mxu0 0.0
        %1045 = vmatprep.subr.mxu0 0.0
        %1046 = vmatpush1.xpose.msra.mxu0 0.0
        %1047 = vmatprep.subr.mxu0 0.0
        %1048 = vmatpush1.xpose.msra.mxu0 0.0
        %1049 = vmatprep.subr.mxu0 0.0
        %1050 = vmatpush1.xpose.msra.mxu0 0.0
        %1051 = vmatprep.subr.mxu0 0.0
        %1052 = vmatpush1.xpose.msra.mxu0 0.0
        %1053 = vmatprep.subr.mxu0 0.0
        %1054 = vmatpush1.xpose.msra.mxu0 0.0
        %1055 = vmatprep.subr.mxu0 0.0
        %1056 = vmatpush1.xpose.msra.mxu0 0.0
        %1057 = vmatprep.subr.mxu0 0.0
        %1058 = vmatpush1.xpose.msra.mxu0 0.0
        %1059 = vmatprep.subr.mxu0 0.0
        %1060 = vmatpush1.xpose.msra.mxu0 0.0
        %1061 = vmatprep.subr.mxu0 0.0
        %1062 = vmatpush1.xpose.msra.mxu0 0.0
        %1063 = vmatprep.subr.mxu0 0.0
        %1064 = vmatpush1.xpose.msra.mxu0 0.0
        %1065 = vmatprep.mubr.f32.mxu0 0.0
        %1066 = vmatmul.mubr.f32.gmra.mrb[0].mxu0 %v996
        %v1067 = vpop.f32.mrb[0].mxu0
        %v1068 = vadd.f32 0.0, %v1067
        %v1069 = vpop.f32.mrb[0].mxu0
        %1070 = vdwg.mxu0
        %v1072 = vsel %vm965, %v984, 0
        %v1075 = vsel %vm965, %v988, 0
        %1077 = vmatprep.subr.mxu0 0.0
        %1078 = vmatpush1.xpose.msra.mxu0 %v1075
        %1079 = vmatprep.subr.mxu0 0.0
        %1080 = vmatpush1.xpose.msra.mxu0 0.0
        %1081 = vmatprep.subr.mxu0 0.0
        %1082 = vmatpush1.xpose.msra.mxu0 0.0
        %1083 = vmatprep.subr.mxu0 0.0
        %1084 = vmatpush1.xpose.msra.mxu0 0.0
        %1085 = vmatprep.subr.mxu0 0.0
        %1086 = vmatpush1.xpose.msra.mxu0 0.0
        %1087 = vmatprep.subr.mxu0 0.0
        %1088 = vmatpush1.xpose.msra.mxu0 0.0
        %1089 = vmatprep.subr.mxu0 0.0
        %1090 = vmatpush1.xpose.msra.mxu0 0.0
        %1091 = vmatprep.subr.mxu0 0.0
        %1092 = vmatpush1.xpose.msra.mxu0 0.0
        %1093 = vmatprep.subr.mxu0 0.0
        %1094 = vmatpush1.xpose.msra.mxu0 0.0
        %1095 = vmatprep.subr.mxu0 0.0
        %1096 = vmatpush1.xpose.msra.mxu0 0.0
        %1097 = vmatprep.subr.mxu0 0.0
        %1098 = vmatpush1.xpose.msra.mxu0 0.0
        %1099 = vmatprep.subr.mxu0 0.0
        %1100 = vmatpush1.xpose.msra.mxu0 0.0
        %1101 = vmatprep.subr.mxu0 0.0
        %1102 = vmatpush1.xpose.msra.mxu0 0.0
        %1103 = vmatprep.subr.mxu0 0.0
        %1104 = vmatpush1.xpose.msra.mxu0 0.0
        %1105 = vmatprep.subr.mxu0 0.0
        %1106 = vmatpush1.xpose.msra.mxu0 0.0
        %1107 = vmatprep.subr.mxu0 0.0
        %1108 = vmatpush1.xpose.msra.mxu0 0.0
        %1109 = vmatprep.subr.mxu0 0.0
        %1110 = vmatpush1.xpose.msra.mxu0 0.0
        %1111 = vmatprep.subr.mxu0 0.0
        %1112 = vmatpush1.xpose.msra.mxu0 0.0
        %1113 = vmatprep.subr.mxu0 0.0
        %1114 = vmatpush1.xpose.msra.mxu0 0.0
        %1115 = vmatprep.subr.mxu0 0.0
        %1116 = vmatpush1.xpose.msra.mxu0 0.0
        %1117 = vmatprep.subr.mxu0 0.0
        %1118 = vmatpush1.xpose.msra.mxu0 0.0
        %1119 = vmatprep.subr.mxu0 0.0
        %1120 = vmatpush1.xpose.msra.mxu0 0.0
        %1121 = vmatprep.subr.mxu0 0.0
        %1122 = vmatpush1.xpose.msra.mxu0 0.0
        %1123 = vmatprep.subr.mxu0 0.0
        %1124 = vmatpush1.xpose.msra.mxu0 0.0
        %1125 = vmatprep.subr.mxu0 0.0
        %1126 = vmatpush1.xpose.msra.mxu0 0.0
        %1127 = vmatprep.subr.mxu0 0.0
        %1128 = vmatpush1.xpose.msra.mxu0 0.0
        %1129 = vmatprep.subr.mxu0 0.0
        %1130 = vmatpush1.xpose.msra.mxu0 0.0
        %1131 = vmatprep.subr.mxu0 0.0
        %1132 = vmatpush1.xpose.msra.mxu0 0.0
        %1133 = vmatprep.subr.mxu0 0.0
        %1134 = vmatpush1.xpose.msra.mxu0 0.0
        %1135 = vmatprep.subr.mxu0 0.0
        %1136 = vmatpush1.xpose.msra.mxu0 0.0
        %1137 = vmatprep.subr.mxu0 0.0
        %1138 = vmatpush1.xpose.msra.mxu0 0.0
        %1139 = vmatprep.subr.mxu0 0.0
        %1140 = vmatpush1.xpose.msra.mxu0 0.0
        %1141 = vmatprep.mubr.f32.mxu0 0.0
        %1142 = vmatmul.mubr.f32.gmra.mrb[0].mxu0 %v1072
        %v1143 = vpop.f32.mrb[0].mxu0
        %v1144 = vadd.f32 0.0, %v1143
        %v1145 = vpop.f32.mrb[0].mxu0
        %1146 = vdwg.mxu0
        %v1148 = vsel %vm965, %v985, 0
        %v1151 = vsel %vm965, %v989, 0
        %1153 = vmatprep.subr.mxu0 0.0
        %1154 = vmatpush1.xpose.msra.mxu0 %v1151
        %1155 = vmatprep.subr.mxu0 0.0
        %1156 = vmatpush1.xpose.msra.mxu0 0.0
        %1157 = vmatprep.subr.mxu0 0.0
        %1158 = vmatpush1.xpose.msra.mxu0 0.0
        %1159 = vmatprep.subr.mxu0 0.0
        %1160 = vmatpush1.xpose.msra.mxu0 0.0
        %1161 = vmatprep.subr.mxu0 0.0
        %1162 = vmatpush1.xpose.msra.mxu0 0.0
        %1163 = vmatprep.subr.mxu0 0.0
        %1164 = vmatpush1.xpose.msra.mxu0 0.0
        %1165 = vmatprep.subr.mxu0 0.0
        %1166 = vmatpush1.xpose.msra.mxu0 0.0
        %1167 = vmatprep.subr.mxu0 0.0
        %1168 = vmatpush1.xpose.msra.mxu0 0.0
        %1169 = vmatprep.subr.mxu0 0.0
        %1170 = vmatpush1.xpose.msra.mxu0 0.0
        %1171 = vmatprep.subr.mxu0 0.0
        %1172 = vmatpush1.xpose.msra.mxu0 0.0
        %1173 = vmatprep.subr.mxu0 0.0
        %1174 = vmatpush1.xpose.msra.mxu0 0.0
        %1175 = vmatprep.subr.mxu0 0.0
        %1176 = vmatpush1.xpose.msra.mxu0 0.0
        %1177 = vmatprep.subr.mxu0 0.0
        %1178 = vmatpush1.xpose.msra.mxu0 0.0
        %1179 = vmatprep.subr.mxu0 0.0
        %1180 = vmatpush1.xpose.msra.mxu0 0.0
        %1181 = vmatprep.subr.mxu0 0.0
        %1182 = vmatpush1.xpose.msra.mxu0 0.0
        %1183 = vmatprep.subr.mxu0 0.0
        %1184 = vmatpush1.xpose.msra.mxu0 0.0
        %1185 = vmatprep.subr.mxu0 0.0
        %1186 = vmatpush1.xpose.msra.mxu0 0.0
        %1187 = vmatprep.subr.mxu0 0.0
        %1188 = vmatpush1.xpose.msra.mxu0 0.0
        %1189 = vmatprep.subr.mxu0 0.0
        %1190 = vmatpush1.xpose.msra.mxu0 0.0
        %1191 = vmatprep.subr.mxu0 0.0
        %1192 = vmatpush1.xpose.msra.mxu0 0.0
        %1193 = vmatprep.subr.mxu0 0.0
        %1194 = vmatpush1.xpose.msra.mxu0 0.0
        %1195 = vmatprep.subr.mxu0 0.0
        %1196 = vmatpush1.xpose.msra.mxu0 0.0
        %1197 = vmatprep.subr.mxu0 0.0
        %1198 = vmatpush1.xpose.msra.mxu0 0.0
        %1199 = vmatprep.subr.mxu0 0.0
        %1200 = vmatpush1.xpose.msra.mxu0 0.0
        %1201 = vmatprep.subr.mxu0 0.0
        %1202 = vmatpush1.xpose.msra.mxu0 0.0
        %1203 = vmatprep.subr.mxu0 0.0
        %1204 = vmatpush1.xpose.msra.mxu0 0.0
        %1205 = vmatprep.subr.mxu0 0.0
        %1206 = vmatpush1.xpose.msra.mxu0 0.0
        %1207 = vmatprep.subr.mxu0 0.0
        %1208 = vmatpush1.xpose.msra.mxu0 0.0
        %1209 = vmatprep.subr.mxu0 0.0
        %1210 = vmatpush1.xpose.msra.mxu0 0.0
        %1211 = vmatprep.subr.mxu0 0.0
        %1212 = vmatpush1.xpose.msra.mxu0 0.0
        %1213 = vmatprep.subr.mxu0 0.0
        %1214 = vmatpush1.xpose.msra.mxu0 0.0
        %1215 = vmatprep.subr.mxu0 0.0
        %1216 = vmatpush1.xpose.msra.mxu0 0.0
        %1217 = vmatprep.mubr.f32.mxu0 0.0
        %1218 = vmatmul.mubr.f32.gmra.mrb[0].mxu0 %v1148
        %v1219 = vpop.f32.mrb[0].mxu0
        %v1220 = vadd.f32 0.0, %v1219
        %v1221 = vpop.f32.mrb[0].mxu0
        %1222 = vdwg.mxu0
        %v1224 = vsel %vm965, %v986, 0
        %v1227 = vsel %vm965, %v990, 0
        %1229 = vmatprep.subr.mxu0 0.0
        %1230 = vmatpush1.xpose.msra.mxu0 %v1227
        %1231 = vmatprep.subr.mxu0 0.0
        %1232 = vmatpush1.xpose.msra.mxu0 0.0
        %1233 = vmatprep.subr.mxu0 0.0
        %1234 = vmatpush1.xpose.msra.mxu0 0.0
        %1235 = vmatprep.subr.mxu0 0.0
        %1236 = vmatpush1.xpose.msra.mxu0 0.0
        %1237 = vmatprep.subr.mxu0 0.0
        %1238 = vmatpush1.xpose.msra.mxu0 0.0
        %1239 = vmatprep.subr.mxu0 0.0
        %1240 = vmatpush1.xpose.msra.mxu0 0.0
        %1241 = vmatprep.subr.mxu0 0.0
        %1242 = vmatpush1.xpose.msra.mxu0 0.0
        %1243 = vmatprep.subr.mxu0 0.0
        %1244 = vmatpush1.xpose.msra.mxu0 0.0
        %1245 = vmatprep.subr.mxu0 0.0
        %1246 = vmatpush1.xpose.msra.mxu0 0.0
        %1247 = vmatprep.subr.mxu0 0.0
        %1248 = vmatpush1.xpose.msra.mxu0 0.0
        %1249 = vmatprep.subr.mxu0 0.0
        %1250 = vmatpush1.xpose.msra.mxu0 0.0
        %1251 = vmatprep.subr.mxu0 0.0
        %1252 = vmatpush1.xpose.msra.mxu0 0.0
        %1253 = vmatprep.subr.mxu0 0.0
        %1254 = vmatpush1.xpose.msra.mxu0 0.0
        %1255 = vmatprep.subr.mxu0 0.0
        %1256 = vmatpush1.xpose.msra.mxu0 0.0
        %1257 = vmatprep.subr.mxu0 0.0
        %1258 = vmatpush1.xpose.msra.mxu0 0.0
        %1259 = vmatprep.subr.mxu0 0.0
        %1260 = vmatpush1.xpose.msra.mxu0 0.0
        %1261 = vmatprep.subr.mxu0 0.0
        %1262 = vmatpush1.xpose.msra.mxu0 0.0
        %1263 = vmatprep.subr.mxu0 0.0
        %1264 = vmatpush1.xpose.msra.mxu0 0.0
        %1265 = vmatprep.subr.mxu0 0.0
        %1266 = vmatpush1.xpose.msra.mxu0 0.0
        %1267 = vmatprep.subr.mxu0 0.0
        %1268 = vmatpush1.xpose.msra.mxu0 0.0
        %1269 = vmatprep.subr.mxu0 0.0
        %1270 = vmatpush1.xpose.msra.mxu0 0.0
        %1271 = vmatprep.subr.mxu0 0.0
        %1272 = vmatpush1.xpose.msra.mxu0 0.0
        %1273 = vmatprep.subr.mxu0 0.0
        %1274 = vmatpush1.xpose.msra.mxu0 0.0
        %1275 = vmatprep.subr.mxu0 0.0
        %1276 = vmatpush1.xpose.msra.mxu0 0.0
        %1277 = vmatprep.subr.mxu0 0.0
        %1278 = vmatpush1.xpose.msra.mxu0 0.0
        %1279 = vmatprep.subr.mxu0 0.0
        %1280 = vmatpush1.xpose.msra.mxu0 0.0
        %1281 = vmatprep.subr.mxu0 0.0
        %1282 = vmatpush1.xpose.msra.mxu0 0.0
        %1283 = vmatprep.subr.mxu0 0.0
        %1284 = vmatpush1.xpose.msra.mxu0 0.0
        %1285 = vmatprep.subr.mxu0 0.0
        %1286 = vmatpush1.xpose.msra.mxu0 0.0
        %1287 = vmatprep.subr.mxu0 0.0
        %1288 = vmatpush1.xpose.msra.mxu0 0.0
        %1289 = vmatprep.subr.mxu0 0.0
        %1290 = vmatpush1.xpose.msra.mxu0 0.0
        %1291 = vmatprep.subr.mxu0 0.0
        %1292 = vmatpush1.xpose.msra.mxu0 0.0
        %1293 = vmatprep.mubr.f32.mxu0 0.0
        %1294 = vmatmul.mubr.f32.gmra.mrb[0].mxu0 %v1224
        %v1295 = vpop.f32.mrb[0].mxu0
        %v1296 = vadd.f32 0.0, %v1295
        %v1297 = vpop.f32.mrb[0].mxu0
        %1298 = vdwg.mxu0
        %v1299 = vsel %vm965, %v1068, -inf
        %1300 = vmax.xlane.f32.xlu0 %v1299
        %v1301 = vpop.xlane.xlu0 %1300
        %v1302 = vsel %vm965, %v1144, -inf
        %1303 = vmax.xlane.f32.xlu0 %v1302
        %v1304 = vpop.xlane.xlu0 %1303
        %v1305 = vsel %vm965, %v1220, -inf
        %1306 = vmax.xlane.f32.xlu0 %v1305
        %v1307 = vpop.xlane.xlu0 %1306
        %v1308 = vsel %vm965, %v1296, -inf
        %1309 = vmax.xlane.f32.xlu0 %v1308
        %v1310 = vpop.xlane.xlu0 %1309
        %v1311 = vsel %vm965, %v1068, inf
        %1312 = vmin.xlane.f32.xlu0 %v1311
        %v1313 = vpop.xlane.xlu0 %1312
        %v1314 = vsel %vm965, %v1144, inf
        %1315 = vmin.xlane.f32.xlu0 %v1314
        %v1316 = vpop.xlane.xlu0 %1315
        %v1317 = vsel %vm965, %v1220, inf
        %1318 = vmin.xlane.f32.xlu0 %v1317
        %v1319 = vpop.xlane.xlu0 %1318
        %v1320 = vsel %vm965, %v1296, inf
        %1321 = vmin.xlane.f32.xlu0 %v1320
        %v1322 = vpop.xlane.xlu0 %1321
        %v1323 = vsub.f32 %v1068, %v1301
        %v1324 = vsub.f32 %v1144, %v1304
        %v1325 = vsub.f32 %v1220, %v1307
        %v1326 = vsub.f32 %v1296, %v1310
        %v1327 = vmul.f32 %v1323, 1.442695
        %v1328 = vpow.pop %v1327
        %v1329 = vmul.f32 %v1324, 1.442695
        %v1330 = vpow.pop %v1329
        %v1331 = vmul.f32 %v1325, 1.442695
        %v1332 = vpow.pop %v1331
        %v1333 = vmul.f32 %v1326, 1.442695
        %v1334 = vpow.pop %v1333
        %v1335 = vsub.f32 %v1313, %v1068
        %v1336 = vsub.f32 %v1316, %v1144
        %v1337 = vsub.f32 %v1319, %v1220
        %v1338 = vsub.f32 %v1322, %v1296
        %v1339 = vmul.f32 %v1335, 1.442695
        %v1340 = vpow.pop %v1339
        %v1341 = vmul.f32 %v1336, 1.442695
        %v1342 = vpow.pop %v1341
        %v1343 = vmul.f32 %v1337, 1.442695
        %v1344 = vpow.pop %v1343
        %v1345 = vmul.f32 %v1338, 1.442695
        %v1346 = vpow.pop %v1345
        %v1347 = vsel %vm965, %v1328, 0.0
        %1348 = vadd.xlane.f32.xlu0 %v1347
        %v1349 = vpop.xlane.xlu0 %1348
        %v1350 = vsel %vm965, %v1330, 0.0
        %1351 = vadd.xlane.f32.xlu0 %v1350
        %v1352 = vpop.xlane.xlu0 %1351
        %v1353 = vsel %vm965, %v1332, 0.0
        %1354 = vadd.xlane.f32.xlu0 %v1353
        %v1355 = vpop.xlane.xlu0 %1354
        %v1356 = vsel %vm965, %v1334, 0.0
        %1357 = vadd.xlane.f32.xlu0 %v1356
        %v1358 = vpop.xlane.xlu0 %1357
        %v1359 = vrcp.pop %v1349
        %v1360 = vrcp.pop %v1352
        %v1361 = vrcp.pop %v1355
        %v1362 = vrcp.pop %v1358
        %v1363 = vmul.f32 %v1328, %v1359
        %v1364 = vmul.f32 %v1330, %v1360
        %v1365 = vmul.f32 %v1332, %v1361
        %v1366 = vmul.f32 %v1334, %v1362
        %v1367 = vsel %vm965, %v1340, 0.0
        %1368 = vadd.xlane.f32.xlu0 %v1367
        %v1369 = vpop.xlane.xlu0 %1368
        %v1370 = vsel %vm965, %v1342, 0.0
        %1371 = vadd.xlane.f32.xlu0 %v1370
        %v1372 = vpop.xlane.xlu0 %1371
        %v1373 = vsel %vm965, %v1344, 0.0
        %1374 = vadd.xlane.f32.xlu0 %v1373
        %v1375 = vpop.xlane.xlu0 %1374
        %v1376 = vsel %vm965, %v1346, 0.0
        %1377 = vadd.xlane.f32.xlu0 %v1376
        %v1378 = vpop.xlane.xlu0 %1377
        %v1379 = vrcp.pop %v1369
        %v1380 = vrcp.pop %v1372
        %v1381 = vrcp.pop %v1375
        %v1382 = vrcp.pop %v1378
        %v1383 = vmul.f32 %v1340, %v1379
        %v1384 = vmul.f32 %v1342, %v1380
        %v1385 = vmul.f32 %v1344, %v1381
        %v1386 = vmul.f32 %v1346, %v1382
        %v1388 = vsel %vm965, %v1363, 0
        %v1391 = vsel %vm965, %v1383, 0
        %1393 = vmatprep.subr.mxu0 0.0
        %1394 = vmatpush1.msra.mxu0 %v991
        %1395 = vmatprep.subr.mxu0 0.0
        %1396 = vmatpush1.msra.mxu0 0.0
        %1397 = vmatprep.subr.mxu0 0.0
        %1398 = vmatpush1.msra.mxu0 0.0
        %1399 = vmatprep.subr.mxu0 0.0
        %1400 = vmatpush1.msra.mxu0 0.0
        %1401 = vmatprep.subr.mxu0 0.0
        %1402 = vmatpush1.msra.mxu0 0.0
        %1403 = vmatprep.subr.mxu0 0.0
        %1404 = vmatpush1.msra.mxu0 0.0
        %1405 = vmatprep.subr.mxu0 0.0
        %1406 = vmatpush1.msra.mxu0 0.0
        %1407 = vmatprep.subr.mxu0 0.0
        %1408 = vmatpush1.msra.mxu0 0.0
        %1409 = vmatprep.subr.mxu0 0.0
        %1410 = vmatpush1.msra.mxu0 0.0
        %1411 = vmatprep.subr.mxu0 0.0
        %1412 = vmatpush1.msra.mxu0 0.0
        %1413 = vmatprep.subr.mxu0 0.0
        %1414 = vmatpush1.msra.mxu0 0.0
        %1415 = vmatprep.subr.mxu0 0.0
        %1416 = vmatpush1.msra.mxu0 0.0
        %1417 = vmatprep.subr.mxu0 0.0
        %1418 = vmatpush1.msra.mxu0 0.0
        %1419 = vmatprep.subr.mxu0 0.0
        %1420 = vmatpush1.msra.mxu0 0.0
        %1421 = vmatprep.subr.mxu0 0.0
        %1422 = vmatpush1.msra.mxu0 0.0
        %1423 = vmatprep.subr.mxu0 0.0
        %1424 = vmatpush1.msra.mxu0 0.0
        %1425 = vmatprep.subr.mxu0 0.0
        %1426 = vmatpush1.msra.mxu0 0.0
        %1427 = vmatprep.subr.mxu0 0.0
        %1428 = vmatpush1.msra.mxu0 0.0
        %1429 = vmatprep.subr.mxu0 0.0
        %1430 = vmatpush1.msra.mxu0 0.0
        %1431 = vmatprep.subr.mxu0 0.0
        %1432 = vmatpush1.msra.mxu0 0.0
        %1433 = vmatprep.subr.mxu0 0.0
        %1434 = vmatpush1.msra.mxu0 0.0
        %1435 = vmatprep.subr.mxu0 0.0
        %1436 = vmatpush1.msra.mxu0 0.0
        %1437 = vmatprep.subr.mxu0 0.0
        %1438 = vmatpush1.msra.mxu0 0.0
        %1439 = vmatprep.subr.mxu0 0.0
        %1440 = vmatpush1.msra.mxu0 0.0
        %1441 = vmatprep.subr.mxu0 0.0
        %1442 = vmatpush1.msra.mxu0 0.0
        %1443 = vmatprep.subr.mxu0 0.0
        %1444 = vmatpush1.msra.mxu0 0.0
        %1445 = vmatprep.subr.mxu0 0.0
        %1446 = vmatpush1.msra.mxu0 0.0
        %1447 = vmatprep.subr.mxu0 0.0
        %1448 = vmatpush1.msra.mxu0 0.0
        %1449 = vmatprep.subr.mxu0 0.0
        %1450 = vmatpush1.msra.mxu0 0.0
        %1451 = vmatprep.subr.mxu0 0.0
        %1452 = vmatpush1.msra.mxu0 0.0
        %1453 = vmatprep.subr.mxu0 0.0
        %1454 = vmatpush1.msra.mxu0 0.0
        %1455 = vmatprep.subr.mxu0 0.0
        %1456 = vmatpush1.msra.mxu0 0.0
        %1457 = vmatprep.mubr.f32.mxu0 0.0
        %1458 = vmatmul.mubr.f32.gmra.mrb[0].mxu0 %v1388
        %v1459 = vpop.f32.mrb[0].mxu0
        %v1460 = vadd.f32 0.0, %v1459
        %v1461 = vpop.f32.mrb[0].mxu0
        %1462 = vmatprep.mubr.f32.mxu0 0.0
        %1463 = vmatmul.mubr.f32.gmra.mrb[0].mxu0 %v1391
        %v1464 = vpop.f32.mrb[0].mxu0
        %v1465 = vadd.f32 0.0, %v1464
        %v1466 = vpop.f32.mrb[0].mxu0
        %1467 = vdwg.mxu0
        %v1469 = vsel %vm965, %v1364, 0
        %v1472 = vsel %vm965, %v1384, 0
        %1474 = vmatprep.subr.mxu0 0.0
        %1475 = vmatpush1.msra.mxu0 %v992
        %1476 = vmatprep.subr.mxu0 0.0
        %1477 = vmatpush1.msra.mxu0 0.0
        %1478 = vmatprep.subr.mxu0 0.0
        %1479 = vmatpush1.msra.mxu0 0.0
        %1480 = vmatprep.subr.mxu0 0.0
        %1481 = vmatpush1.msra.mxu0 0.0
        %1482 = vmatprep.subr.mxu0 0.0
        %1483 = vmatpush1.msra.mxu0 0.0
        %1484 = vmatprep.subr.mxu0 0.0
        %1485 = vmatpush1.msra.mxu0 0.0
        %1486 = vmatprep.subr.mxu0 0.0
        %1487 = vmatpush1.msra.mxu0 0.0
        %1488 = vmatprep.subr.mxu0 0.0
        %1489 = vmatpush1.msra.mxu0 0.0
        %1490 = vmatprep.subr.mxu0 0.0
        %1491 = vmatpush1.msra.mxu0 0.0
        %1492 = vmatprep.subr.mxu0 0.0
        %1493 = vmatpush1.msra.mxu0 0.0
        %1494 = vmatprep.subr.mxu0 0.0
        %1495 = vmatpush1.msra.mxu0 0.0
        %1496 = vmatprep.subr.mxu0 0.0
        %1497 = vmatpush1.msra.mxu0 0.0
        %1498 = vmatprep.subr.mxu0 0.0
        %1499 = vmatpush1.msra.mxu0 0.0
        %1500 = vmatprep.subr.mxu0 0.0
        %1501 = vmatpush1.msra.mxu0 0.0
        %1502 = vmatprep.subr.mxu0 0.0
        %1503 = vmatpush1.msra.mxu0 0.0
        %1504 = vmatprep.subr.mxu0 0.0
        %1505 = vmatpush1.msra.mxu0 0.0
        %1506 = vmatprep.subr.mxu0 0.0
        %1507 = vmatpush1.msra.mxu0 0.0
        %1508 = vmatprep.subr.mxu0 0.0
        %1509 = vmatpush1.msra.mxu0 0.0
        %1510 = vmatprep.subr.mxu0 0.0
        %1511 = vmatpush1.msra.mxu0 0.0
        %1512 = vmatprep.subr.mxu0 0.0
        %1513 = vmatpush1.msra.mxu0 0.0
        %1514 = vmatprep.subr.mxu0 0.0
        %1515 = vmatpush1.msra.mxu0 0.0
        %1516 = vmatprep.subr.mxu0 0.0
        %1517 = vmatpush1.msra.mxu0 0.0
        %1518 = vmatprep.subr.mxu0 0.0
        %1519 = vmatpush1.msra.mxu0 0.0
        %1520 = vmatprep.subr.mxu0 0.0
        %1521 = vmatpush1.msra.mxu0 0.0
        %1522 = vmatprep.subr.mxu0 0.0
        %1523 = vmatpush1.msra.mxu0 0.0
        %1524 = vmatprep.subr.mxu0 0.0
        %1525 = vmatpush1.msra.mxu0 0.0
        %1526 = vmatprep.subr.mxu0 0.0
        %1527 = vmatpush1.msra.mxu0 0.0
        %1528 = vmatprep.subr.mxu0 0.0
        %1529 = vmatpush1.msra.mxu0 0.0
        %1530 = vmatprep.subr.mxu0 0.0
        %1531 = vmatpush1.msra.mxu0 0.0
        %1532 = vmatprep.subr.mxu0 0.0
        %1533 = vmatpush1.msra.mxu0 0.0
        %1534 = vmatprep.subr.mxu0 0.0
        %1535 = vmatpush1.msra.mxu0 0.0
        %1536 = vmatprep.subr.mxu0 0.0
        %1537 = vmatpush1.msra.mxu0 0.0
        %1538 = vmatprep.mubr.f32.mxu0 0.0
        %1539 = vmatmul.mubr.f32.gmra.mrb[0].mxu0 %v1469
        %v1540 = vpop.f32.mrb[0].mxu0
        %v1541 = vadd.f32 0.0, %v1540
        %v1542 = vpop.f32.mrb[0].mxu0
        %1543 = vmatprep.mubr.f32.mxu0 0.0
        %1544 = vmatmul.mubr.f32.gmra.mrb[0].mxu0 %v1472
        %v1545 = vpop.f32.mrb[0].mxu0
        %v1546 = vadd.f32 0.0, %v1545
        %v1547 = vpop.f32.mrb[0].mxu0
        %1548 = vdwg.mxu0
        %v1550 = vsel %vm965, %v1365, 0
        %v1553 = vsel %vm965, %v1385, 0
        %1555 = vmatprep.subr.mxu0 0.0
        %1556 = vmatpush1.msra.mxu0 %v993
        %1557 = vmatprep.subr.mxu0 0.0
        %1558 = vmatpush1.msra.mxu0 0.0
        %1559 = vmatprep.subr.mxu0 0.0
        %1560 = vmatpush1.msra.mxu0 0.0
        %1561 = vmatprep.subr.mxu0 0.0
        %1562 = vmatpush1.msra.mxu0 0.0
        %1563 = vmatprep.subr.mxu0 0.0
        %1564 = vmatpush1.msra.mxu0 0.0
        %1565 = vmatprep.subr.mxu0 0.0
        %1566 = vmatpush1.msra.mxu0 0.0
        %1567 = vmatprep.subr.mxu0 0.0
        %1568 = vmatpush1.msra.mxu0 0.0
        %1569 = vmatprep.subr.mxu0 0.0
        %1570 = vmatpush1.msra.mxu0 0.0
        %1571 = vmatprep.subr.mxu0 0.0
        %1572 = vmatpush1.msra.mxu0 0.0
        %1573 = vmatprep.subr.mxu0 0.0
        %1574 = vmatpush1.msra.mxu0 0.0
        %1575 = vmatprep.subr.mxu0 0.0
        %1576 = vmatpush1.msra.mxu0 0.0
        %1577 = vmatprep.subr.mxu0 0.0
        %1578 = vmatpush1.msra.mxu0 0.0
        %1579 = vmatprep.subr.mxu0 0.0
        %1580 = vmatpush1.msra.mxu0 0.0
        %1581 = vmatprep.subr.mxu0 0.0
        %1582 = vmatpush1.msra.mxu0 0.0
        %1583 = vmatprep.subr.mxu0 0.0
        %1584 = vmatpush1.msra.mxu0 0.0
        %1585 = vmatprep.subr.mxu0 0.0
        %1586 = vmatpush1.msra.mxu0 0.0
        %1587 = vmatprep.subr.mxu0 0.0
        %1588 = vmatpush1.msra.mxu0 0.0
        %1589 = vmatprep.subr.mxu0 0.0
        %1590 = vmatpush1.msra.mxu0 0.0
        %1591 = vmatprep.subr.mxu0 0.0
        %1592 = vmatpush1.msra.mxu0 0.0
        %1593 = vmatprep.subr.mxu0 0.0
        %1594 = vmatpush1.msra.mxu0 0.0
        %1595 = vmatprep.subr.mxu0 0.0
        %1596 = vmatpush1.msra.mxu0 0.0
        %1597 = vmatprep.subr.mxu0 0.0
        %1598 = vmatpush1.msra.mxu0 0.0
        %1599 = vmatprep.subr.mxu0 0.0
        %1600 = vmatpush1.msra.mxu0 0.0
        %1601 = vmatprep.subr.mxu0 0.0
        %1602 = vmatpush1.msra.mxu0 0.0
        %1603 = vmatprep.subr.mxu0 0.0
        %1604 = vmatpush1.msra.mxu0 0.0
        %1605 = vmatprep.subr.mxu0 0.0
        %1606 = vmatpush1.msra.mxu0 0.0
        %1607 = vmatprep.subr.mxu0 0.0
        %1608 = vmatpush1.msra.mxu0 0.0
        %1609 = vmatprep.subr.mxu0 0.0
        %1610 = vmatpush1.msra.mxu0 0.0
        %1611 = vmatprep.subr.mxu0 0.0
        %1612 = vmatpush1.msra.mxu0 0.0
        %1613 = vmatprep.subr.mxu0 0.0
        %1614 = vmatpush1.msra.mxu0 0.0
        %1615 = vmatprep.subr.mxu0 0.0
        %1616 = vmatpush1.msra.mxu0 0.0
        %1617 = vmatprep.subr.mxu0 0.0
        %1618 = vmatpush1.msra.mxu0 0.0
        %1619 = vmatprep.mubr.f32.mxu0 0.0
        %1620 = vmatmul.mubr.f32.gmra.mrb[0].mxu0 %v1550
        %v1621 = vpop.f32.mrb[0].mxu0
        %v1622 = vadd.f32 0.0, %v1621
        %v1623 = vpop.f32.mrb[0].mxu0
        %1624 = vmatprep.mubr.f32.mxu0 0.0
        %1625 = vmatmul.mubr.f32.gmra.mrb[0].mxu0 %v1553
        %v1626 = vpop.f32.mrb[0].mxu0
        %v1627 = vadd.f32 0.0, %v1626
        %v1628 = vpop.f32.mrb[0].mxu0
        %1629 = vdwg.mxu0
        %v1631 = vsel %vm965, %v1366, 0
        %v1634 = vsel %vm965, %v1386, 0
        %1636 = vmatprep.subr.mxu0 0.0
        %1637 = vmatpush1.msra.mxu0 %v994
        %1638 = vmatprep.subr.mxu0 0.0
        %1639 = vmatpush1.msra.mxu0 0.0
        %1640 = vmatprep.subr.mxu0 0.0
        %1641 = vmatpush1.msra.mxu0 0.0
        %1642 = vmatprep.subr.mxu0 0.0
        %1643 = vmatpush1.msra.mxu0 0.0
        %1644 = vmatprep.subr.mxu0 0.0
        %1645 = vmatpush1.msra.mxu0 0.0
        %1646 = vmatprep.subr.mxu0 0.0
        %1647 = vmatpush1.msra.mxu0 0.0
        %1648 = vmatprep.subr.mxu0 0.0
        %1649 = vmatpush1.msra.mxu0 0.0
        %1650 = vmatprep.subr.mxu0 0.0
        %1651 = vmatpush1.msra.mxu0 0.0
        %1652 = vmatprep.subr.mxu0 0.0
        %1653 = vmatpush1.msra.mxu0 0.0
        %1654 = vmatprep.subr.mxu0 0.0
        %1655 = vmatpush1.msra.mxu0 0.0
        %1656 = vmatprep.subr.mxu0 0.0
        %1657 = vmatpush1.msra.mxu0 0.0
        %1658 = vmatprep.subr.mxu0 0.0
        %1659 = vmatpush1.msra.mxu0 0.0
        %1660 = vmatprep.subr.mxu0 0.0
        %1661 = vmatpush1.msra.mxu0 0.0
        %1662 = vmatprep.subr.mxu0 0.0
        %1663 = vmatpush1.msra.mxu0 0.0
        %1664 = vmatprep.subr.mxu0 0.0
        %1665 = vmatpush1.msra.mxu0 0.0
        %1666 = vmatprep.subr.mxu0 0.0
        %1667 = vmatpush1.msra.mxu0 0.0
        %1668 = vmatprep.subr.mxu0 0.0
        %1669 = vmatpush1.msra.mxu0 0.0
        %1670 = vmatprep.subr.mxu0 0.0
        %1671 = vmatpush1.msra.mxu0 0.0
        %1672 = vmatprep.subr.mxu0 0.0
        %1673 = vmatpush1.msra.mxu0 0.0
        %1674 = vmatprep.subr.mxu0 0.0
        %1675 = vmatpush1.msra.mxu0 0.0
        %1676 = vmatprep.subr.mxu0 0.0
        %1677 = vmatpush1.msra.mxu0 0.0
        %1678 = vmatprep.subr.mxu0 0.0
        %1679 = vmatpush1.msra.mxu0 0.0
        %1680 = vmatprep.subr.mxu0 0.0
        %1681 = vmatpush1.msra.mxu0 0.0
        %1682 = vmatprep.subr.mxu0 0.0
        %1683 = vmatpush1.msra.mxu0 0.0
        %1684 = vmatprep.subr.mxu0 0.0
        %1685 = vmatpush1.msra.mxu0 0.0
        %1686 = vmatprep.subr.mxu0 0.0
        %1687 = vmatpush1.msra.mxu0 0.0
        %1688 = vmatprep.subr.mxu0 0.0
        %1689 = vmatpush1.msra.mxu0 0.0
        %1690 = vmatprep.subr.mxu0 0.0
        %1691 = vmatpush1.msra.mxu0 0.0
        %1692 = vmatprep.subr.mxu0 0.0
        %1693 = vmatpush1.msra.mxu0 0.0
        %1694 = vmatprep.subr.mxu0 0.0
        %1695 = vmatpush1.msra.mxu0 0.0
        %1696 = vmatprep.subr.mxu0 0.0
        %1697 = vmatpush1.msra.mxu0 0.0
        %1698 = vmatprep.subr.mxu0 0.0
        %1699 = vmatpush1.msra.mxu0 0.0
        %1700 = vmatprep.mubr.f32.mxu0 0.0
        %1701 = vmatmul.mubr.f32.gmra.mrb[0].mxu0 %v1631
        %v1702 = vpop.f32.mrb[0].mxu0
        %v1703 = vadd.f32 0.0, %v1702
        %v1704 = vpop.f32.mrb[0].mxu0
        %1705 = vmatprep.mubr.f32.mxu0 0.0
        %1706 = vmatmul.mubr.f32.gmra.mrb[0].mxu0 %v1634
        %v1707 = vpop.f32.mrb[0].mxu0
        %v1708 = vadd.f32 0.0, %v1707
        %v1709 = vpop.f32.mrb[0].mxu0
        %1710 = vdwg.mxu0
        %v1711 = vld [vmem:[#allocation11] sm:$0xff]
        %v1712 = vld [vmem:[#allocation11 + $0x8] sm:$0xff]
        %v1713 = vld [vmem:[#allocation11 + $0x10] sm:$0xff]
        %v1714 = vld [vmem:[#allocation11 + $0x18] sm:$0xff]
        %v1716 = vsel %vm965, %v1460, 0
        %v1719 = vsel %vm965, %v1465, 0
        %1721 = vmatprep.subr.mxu0 0.0
        %1722 = vmatpush1.msra.mxu0 %v1711
        %1723 = vmatprep.subr.mxu0 0.0
        %1724 = vmatpush1.msra.mxu0 0.0
        %1725 = vmatprep.subr.mxu0 0.0
        %1726 = vmatpush1.msra.mxu0 0.0
        %1727 = vmatprep.subr.mxu0 0.0
        %1728 = vmatpush1.msra.mxu0 0.0
        %1729 = vmatprep.subr.mxu0 0.0
        %1730 = vmatpush1.msra.mxu0 0.0
        %1731 = vmatprep.subr.mxu0 0.0
        %1732 = vmatpush1.msra.mxu0 0.0
        %1733 = vmatprep.subr.mxu0 0.0
        %1734 = vmatpush1.msra.mxu0 0.0
        %1735 = vmatprep.subr.mxu0 0.0
        %1736 = vmatpush1.msra.mxu0 0.0
        %1737 = vmatprep.subr.mxu0 0.0
        %1738 = vmatpush1.msra.mxu0 0.0
        %1739 = vmatprep.subr.mxu0 0.0
        %1740 = vmatpush1.msra.mxu0 0.0
        %1741 = vmatprep.subr.mxu0 0.0
        %1742 = vmatpush1.msra.mxu0 0.0
        %1743 = vmatprep.subr.mxu0 0.0
        %1744 = vmatpush1.msra.mxu0 0.0
        %1745 = vmatprep.subr.mxu0 0.0
        %1746 = vmatpush1.msra.mxu0 0.0
        %1747 = vmatprep.subr.mxu0 0.0
        %1748 = vmatpush1.msra.mxu0 0.0
        %1749 = vmatprep.subr.mxu0 0.0
        %1750 = vmatpush1.msra.mxu0 0.0
        %1751 = vmatprep.subr.mxu0 0.0
        %1752 = vmatpush1.msra.mxu0 0.0
        %1753 = vmatprep.subr.mxu0 0.0
        %1754 = vmatpush1.msra.mxu0 0.0
        %1755 = vmatprep.subr.mxu0 0.0
        %1756 = vmatpush1.msra.mxu0 0.0
        %1757 = vmatprep.subr.mxu0 0.0
        %1758 = vmatpush1.msra.mxu0 0.0
        %1759 = vmatprep.subr.mxu0 0.0
        %1760 = vmatpush1.msra.mxu0 0.0
        %1761 = vmatprep.subr.mxu0 0.0
        %1762 = vmatpush1.msra.mxu0 0.0
        %1763 = vmatprep.subr.mxu0 0.0
        %1764 = vmatpush1.msra.mxu0 0.0
        %1765 = vmatprep.subr.mxu0 0.0
        %1766 = vmatpush1.msra.mxu0 0.0
        %1767 = vmatprep.subr.mxu0 0.0
        %1768 = vmatpush1.msra.mxu0 0.0
        %1769 = vmatprep.subr.mxu0 0.0
        %1770 = vmatpush1.msra.mxu0 0.0
        %1771 = vmatprep.subr.mxu0 0.0
        %1772 = vmatpush1.msra.mxu0 0.0
        %1773 = vmatprep.subr.mxu0 0.0
        %1774 = vmatpush1.msra.mxu0 0.0
        %1775 = vmatprep.subr.mxu0 0.0
        %1776 = vmatpush1.msra.mxu0 0.0
        %1777 = vmatprep.subr.mxu0 0.0
        %1778 = vmatpush1.msra.mxu0 0.0
        %1779 = vmatprep.subr.mxu0 0.0
        %1780 = vmatpush1.msra.mxu0 0.0
        %1781 = vmatprep.subr.mxu0 0.0
        %1782 = vmatpush1.msra.mxu0 0.0
        %1783 = vmatprep.subr.mxu0 0.0
        %1784 = vmatpush1.msra.mxu0 0.0
        %1785 = vmatprep.mubr.f32.mxu0 0.0
        %1786 = vmatmul.mubr.f32.gmra.mrb[0].mxu0 %v1716
        %v1787 = vpop.f32.mrb[0].mxu0
        %v1788 = vadd.f32 0.0, %v1787
        %v1789 = vpop.f32.mrb[0].mxu0
        %1790 = vmatprep.mubr.f32.mxu0 0.0
        %1791 = vmatmul.mubr.f32.gmra.mrb[0].mxu0 %v1719
        %v1792 = vpop.f32.mrb[0].mxu0
        %v1793 = vadd.f32 0.0, %v1792
        %v1794 = vpop.f32.mrb[0].mxu0
        %1795 = vdwg.mxu0
        %v1797 = vsel %vm965, %v1541, 0
        %v1800 = vsel %vm965, %v1546, 0
        %1802 = vmatprep.subr.mxu0 0.0
        %1803 = vmatpush1.msra.mxu0 %v1712
        %1804 = vmatprep.subr.mxu0 0.0
        %1805 = vmatpush1.msra.mxu0 0.0
        %1806 = vmatprep.subr.mxu0 0.0
        %1807 = vmatpush1.msra.mxu0 0.0
        %1808 = vmatprep.subr.mxu0 0.0
        %1809 = vmatpush1.msra.mxu0 0.0
        %1810 = vmatprep.subr.mxu0 0.0
        %1811 = vmatpush1.msra.mxu0 0.0
        %1812 = vmatprep.subr.mxu0 0.0
        %1813 = vmatpush1.msra.mxu0 0.0
        %1814 = vmatprep.subr.mxu0 0.0
        %1815 = vmatpush1.msra.mxu0 0.0
        %1816 = vmatprep.subr.mxu0 0.0
        %1817 = vmatpush1.msra.mxu0 0.0
        %1818 = vmatprep.subr.mxu0 0.0
        %1819 = vmatpush1.msra.mxu0 0.0
        %1820 = vmatprep.subr.mxu0 0.0
        %1821 = vmatpush1.msra.mxu0 0.0
        %1822 = vmatprep.subr.mxu0 0.0
        %1823 = vmatpush1.msra.mxu0 0.0
        %1824 = vmatprep.subr.mxu0 0.0
        %1825 = vmatpush1.msra.mxu0 0.0
        %1826 = vmatprep.subr.mxu0 0.0
        %1827 = vmatpush1.msra.mxu0 0.0
        %1828 = vmatprep.subr.mxu0 0.0
        %1829 = vmatpush1.msra.mxu0 0.0
        %1830 = vmatprep.subr.mxu0 0.0
        %1831 = vmatpush1.msra.mxu0 0.0
        %1832 = vmatprep.subr.mxu0 0.0
        %1833 = vmatpush1.msra.mxu0 0.0
        %1834 = vmatprep.subr.mxu0 0.0
        %1835 = vmatpush1.msra.mxu0 0.0
        %1836 = vmatprep.subr.mxu0 0.0
        %1837 = vmatpush1.msra.mxu0 0.0
        %1838 = vmatprep.subr.mxu0 0.0
        %1839 = vmatpush1.msra.mxu0 0.0
        %1840 = vmatprep.subr.mxu0 0.0
        %1841 = vmatpush1.msra.mxu0 0.0
        %1842 = vmatprep.subr.mxu0 0.0
        %1843 = vmatpush1.msra.mxu0 0.0
        %1844 = vmatprep.subr.mxu0 0.0
        %1845 = vmatpush1.msra.mxu0 0.0
        %1846 = vmatprep.subr.mxu0 0.0
        %1847 = vmatpush1.msra.mxu0 0.0
        %1848 = vmatprep.subr.mxu0 0.0
        %1849 = vmatpush1.msra.mxu0 0.0
        %1850 = vmatprep.subr.mxu0 0.0
        %1851 = vmatpush1.msra.mxu0 0.0
        %1852 = vmatprep.subr.mxu0 0.0
        %1853 = vmatpush1.msra.mxu0 0.0
        %1854 = vmatprep.subr.mxu0 0.0
        %1855 = vmatpush1.msra.mxu0 0.0
        %1856 = vmatprep.subr.mxu0 0.0
        %1857 = vmatpush1.msra.mxu0 0.0
        %1858 = vmatprep.subr.mxu0 0.0
        %1859 = vmatpush1.msra.mxu0 0.0
        %1860 = vmatprep.subr.mxu0 0.0
        %1861 = vmatpush1.msra.mxu0 0.0
        %1862 = vmatprep.subr.mxu0 0.0
        %1863 = vmatpush1.msra.mxu0 0.0
        %1864 = vmatprep.subr.mxu0 0.0
        %1865 = vmatpush1.msra.mxu0 0.0
        %1866 = vmatprep.mubr.f32.mxu0 0.0
        %1867 = vmatmul.mubr.f32.gmra.mrb[0].mxu0 %v1797
        %v1868 = vpop.f32.mrb[0].mxu0
        %v1869 = vadd.f32 0.0, %v1868
        %v1870 = vpop.f32.mrb[0].mxu0
        %1871 = vmatprep.mubr.f32.mxu0 0.0
        %1872 = vmatmul.mubr.f32.gmra.mrb[0].mxu0 %v1800
        %v1873 = vpop.f32.mrb[0].mxu0
        %v1874 = vadd.f32 0.0, %v1873
        %v1875 = vpop.f32.mrb[0].mxu0
        %1876 = vdwg.mxu0
        %v1878 = vsel %vm965, %v1622, 0
        %v1881 = vsel %vm965, %v1627, 0
        %1883 = vmatprep.subr.mxu0 0.0
        %1884 = vmatpush1.msra.mxu0 %v1713
        %1885 = vmatprep.subr.mxu0 0.0
        %1886 = vmatpush1.msra.mxu0 0.0
        %1887 = vmatprep.subr.mxu0 0.0
        %1888 = vmatpush1.msra.mxu0 0.0
        %1889 = vmatprep.subr.mxu0 0.0
        %1890 = vmatpush1.msra.mxu0 0.0
        %1891 = vmatprep.subr.mxu0 0.0
        %1892 = vmatpush1.msra.mxu0 0.0
        %1893 = vmatprep.subr.mxu0 0.0
        %1894 = vmatpush1.msra.mxu0 0.0
        %1895 = vmatprep.subr.mxu0 0.0
        %1896 = vmatpush1.msra.mxu0 0.0
        %1897 = vmatprep.subr.mxu0 0.0
        %1898 = vmatpush1.msra.mxu0 0.0
        %1899 = vmatprep.subr.mxu0 0.0
        %1900 = vmatpush1.msra.mxu0 0.0
        %1901 = vmatprep.subr.mxu0 0.0
        %1902 = vmatpush1.msra.mxu0 0.0
        %1903 = vmatprep.subr.mxu0 0.0
        %1904 = vmatpush1.msra.mxu0 0.0
        %1905 = vmatprep.subr.mxu0 0.0
        %1906 = vmatpush1.msra.mxu0 0.0
        %1907 = vmatprep.subr.mxu0 0.0
        %1908 = vmatpush1.msra.mxu0 0.0
        %1909 = vmatprep.subr.mxu0 0.0
        %1910 = vmatpush1.msra.mxu0 0.0
        %1911 = vmatprep.subr.mxu0 0.0
        %1912 = vmatpush1.msra.mxu0 0.0
        %1913 = vmatprep.subr.mxu0 0.0
        %1914 = vmatpush1.msra.mxu0 0.0
        %1915 = vmatprep.subr.mxu0 0.0
        %1916 = vmatpush1.msra.mxu0 0.0
        %1917 = vmatprep.subr.mxu0 0.0
        %1918 = vmatpush1.msra.mxu0 0.0
        %1919 = vmatprep.subr.mxu0 0.0
        %1920 = vmatpush1.msra.mxu0 0.0
        %1921 = vmatprep.subr.mxu0 0.0
        %1922 = vmatpush1.msra.mxu0 0.0
        %1923 = vmatprep.subr.mxu0 0.0
        %1924 = vmatpush1.msra.mxu0 0.0
        %1925 = vmatprep.subr.mxu0 0.0
        %1926 = vmatpush1.msra.mxu0 0.0
        %1927 = vmatprep.subr.mxu0 0.0
        %1928 = vmatpush1.msra.mxu0 0.0
        %1929 = vmatprep.subr.mxu0 0.0
        %1930 = vmatpush1.msra.mxu0 0.0
        %1931 = vmatprep.subr.mxu0 0.0
        %1932 = vmatpush1.msra.mxu0 0.0
        %1933 = vmatprep.subr.mxu0 0.0
        %1934 = vmatpush1.msra.mxu0 0.0
        %1935 = vmatprep.subr.mxu0 0.0
        %1936 = vmatpush1.msra.mxu0 0.0
        %1937 = vmatprep.subr.mxu0 0.0
        %1938 = vmatpush1.msra.mxu0 0.0
        %1939 = vmatprep.subr.mxu0 0.0
        %1940 = vmatpush1.msra.mxu0 0.0
        %1941 = vmatprep.subr.mxu0 0.0
        %1942 = vmatpush1.msra.mxu0 0.0
        %1943 = vmatprep.subr.mxu0 0.0
        %1944 = vmatpush1.msra.mxu0 0.0
        %1945 = vmatprep.subr.mxu0 0.0
        %1946 = vmatpush1.msra.mxu0 0.0
        %1947 = vmatprep.mubr.f32.mxu0 0.0
        %1948 = vmatmul.mubr.f32.gmra.mrb[0].mxu0 %v1878
        %v1949 = vpop.f32.mrb[0].mxu0
        %v1950 = vadd.f32 0.0, %v1949
        %v1951 = vpop.f32.mrb[0].mxu0
        %1952 = vmatprep.mubr.f32.mxu0 0.0
        %1953 = vmatmul.mubr.f32.gmra.mrb[0].mxu0 %v1881
        %v1954 = vpop.f32.mrb[0].mxu0
        %v1955 = vadd.f32 0.0, %v1954
        %v1956 = vpop.f32.mrb[0].mxu0
        %1957 = vdwg.mxu0
        %v1959 = vsel %vm965, %v1703, 0
        %v1962 = vsel %vm965, %v1708, 0
        %1964 = vmatprep.subr.mxu0 0.0
        %1965 = vmatpush1.msra.mxu0 %v1714
        %1966 = vmatprep.subr.mxu0 0.0
        %1967 = vmatpush1.msra.mxu0 0.0
        %1968 = vmatprep.subr.mxu0 0.0
        %1969 = vmatpush1.msra.mxu0 0.0
        %1970 = vmatprep.subr.mxu0 0.0
        %1971 = vmatpush1.msra.mxu0 0.0
        %1972 = vmatprep.subr.mxu0 0.0
        %1973 = vmatpush1.msra.mxu0 0.0
        %1974 = vmatprep.subr.mxu0 0.0
        %1975 = vmatpush1.msra.mxu0 0.0
        %1976 = vmatprep.subr.mxu0 0.0
        %1977 = vmatpush1.msra.mxu0 0.0
        %1978 = vmatprep.subr.mxu0 0.0
        %1979 = vmatpush1.msra.mxu0 0.0
        %1980 = vmatprep.subr.mxu0 0.0
        %1981 = vmatpush1.msra.mxu0 0.0
        %1982 = vmatprep.subr.mxu0 0.0
        %1983 = vmatpush1.msra.mxu0 0.0
        %1984 = vmatprep.subr.mxu0 0.0
        %1985 = vmatpush1.msra.mxu0 0.0
        %1986 = vmatprep.subr.mxu0 0.0
        %1987 = vmatpush1.msra.mxu0 0.0
        %1988 = vmatprep.subr.mxu0 0.0
        %1989 = vmatpush1.msra.mxu0 0.0
        %1990 = vmatprep.subr.mxu0 0.0
        %1991 = vmatpush1.msra.mxu0 0.0
        %1992 = vmatprep.subr.mxu0 0.0
        %1993 = vmatpush1.msra.mxu0 0.0
        %1994 = vmatprep.subr.mxu0 0.0
        %1995 = vmatpush1.msra.mxu0 0.0
        %1996 = vmatprep.subr.mxu0 0.0
        %1997 = vmatpush1.msra.mxu0 0.0
        %1998 = vmatprep.subr.mxu0 0.0
        %1999 = vmatpush1.msra.mxu0 0.0
        %2000 = vmatprep.subr.mxu0 0.0
        %2001 = vmatpush1.msra.mxu0 0.0
        %2002 = vmatprep.subr.mxu0 0.0
        %2003 = vmatpush1.msra.mxu0 0.0
        %2004 = vmatprep.subr.mxu0 0.0
        %2005 = vmatpush1.msra.mxu0 0.0
        %2006 = vmatprep.subr.mxu0 0.0
        %2007 = vmatpush1.msra.mxu0 0.0
        %2008 = vmatprep.subr.mxu0 0.0
        %2009 = vmatpush1.msra.mxu0 0.0
        %2010 = vmatprep.subr.mxu0 0.0
        %2011 = vmatpush1.msra.mxu0 0.0
        %2012 = vmatprep.subr.mxu0 0.0
        %2013 = vmatpush1.msra.mxu0 0.0
        %2014 = vmatprep.subr.mxu0 0.0
        %2015 = vmatpush1.msra.mxu0 0.0
        %2016 = vmatprep.subr.mxu0 0.0
        %2017 = vmatpush1.msra.mxu0 0.0
        %2018 = vmatprep.subr.mxu0 0.0
        %2019 = vmatpush1.msra.mxu0 0.0
        %2020 = vmatprep.subr.mxu0 0.0
        %2021 = vmatpush1.msra.mxu0 0.0
        %2022 = vmatprep.subr.mxu0 0.0
        %2023 = vmatpush1.msra.mxu0 0.0
        %2024 = vmatprep.subr.mxu0 0.0
        %2025 = vmatpush1.msra.mxu0 0.0
        %2026 = vmatprep.subr.mxu0 0.0
        %2027 = vmatpush1.msra.mxu0 0.0
        %2028 = vmatprep.mubr.f32.mxu0 0.0
        %2029 = vmatmul.mubr.f32.gmra.mrb[0].mxu0 %v1959
        %v2030 = vpop.f32.mrb[0].mxu0
        %v2031 = vadd.f32 0.0, %v2030
        %v2032 = vpop.f32.mrb[0].mxu0
        %2033 = vmatprep.mubr.f32.mxu0 0.0
        %2034 = vmatmul.mubr.f32.gmra.mrb[0].mxu0 %v1962
        %v2035 = vpop.f32.mrb[0].mxu0
        %v2036 = vadd.f32 0.0, %v2035
        %v2037 = vpop.f32.mrb[0].mxu0
        %2038 = vdwg.mxu0
        %v2039 = vadd.f32 %v1788, %v1869
        %v2040 = vadd.f32 %v1793, %v1874
        %v2041 = vadd.f32 %v2039, %v1950
        %v2042 = vadd.f32 %v2040, %v1955
        %v2043 = vadd.f32 %v2041, %v2031
        %v2044 = vadd.f32 %v2042, %v2036
        %v2045 = vld [vmem:[#allocation13] sm:$0x1]
        %v2047 = vlaneseq
        %v2048 = vshrl.u32 %v2047, 7
        %v2049 = vsub.s32 0, %v2048
        %v2050 = vrot.slane %v2045, %v2049
        %v2052 = vadd.f32 %v2043, %v2050
        %v2053 = vadd.f32 %v2044, %v2050
        %v2054 = vadd.f32 %v858, %v2052
        %v2055 = vadd.f32 %v2053, 0.0
        %v2056 = vld [vmem:[#allocation17] sm:$0x1]
        %v2057 = vld [vmem:[#allocation19] sm:$0x1]
        %v2058 = vsel %vm859, %v2054, 0.0
        %2059 = vadd.xlane.f32.xlu0 %v2058
        %v2060 = vpop.xlane.xlu0 %2059
        %v2061 = vsel %vm859, %v2055, 0.0
        %2062 = vadd.xlane.f32.xlu0 %v2061
        %v2063 = vpop.xlane.xlu0 %2062
        %v2064 = vmul.f32 %v2060, %v863
        %v2065 = vmul.f32 %v2063, %v863
        %v2066 = vsub.f32 %v2054, %v2064
        %v2067 = vsub.f32 %v2055, %v2065
        %v2068 = vmul.f32 %v2066, %v2066
        %v2069 = vmul.f32 %v2067, %v2067
        %v2070 = vsel %vm859, %v2068, 0.0
        %2071 = vadd.xlane.f32.xlu0 %v2070
        %v2072 = vpop.xlane.xlu0 %2071
        %v2073 = vsel %vm859, %v2069, 0.0
        %2074 = vadd.xlane.f32.xlu0 %v2073
        %v2075 = vpop.xlane.xlu0 %2074
        %v2076 = vmul.f32 %v2072, %v863
        %v2077 = vmul.f32 %v2075, %v863
        %v2078 = vadd.f32 %v2076, 1e-05
        %v2079 = vadd.f32 %v2077, 1e-05
        %v2080 = vrsqrt.pop %v2078
        %v2081 = vrsqrt.pop %v2079
        %v2082 = vmul.f32 %v2066, %v2080
        %v2083 = vmul.f32 %v2067, %v2081
        %v2085 = vlaneseq
        %v2086 = vshrl.u32 %v2085, 7
        %v2087 = vsub.s32 0, %v2086
        %v2088 = vrot.slane %v2056, %v2087
        %v2090 = vmul.f32 %v2082, %v2088
        %v2091 = vmul.f32 %v2083, %v2088
        %v2093 = vlaneseq
        %v2094 = vshrl.u32 %v2093, 7
        %v2095 = vsub.s32 0, %v2094
        %v2096 = vrot.slane %v2057, %v2095
        %v2098 = vadd.f32 %v2090, %v2096
        %v2099 = vadd.f32 %v2091, %v2096
        %v2100 = vld [vmem:[#allocation20] sm:$0xff]
        %v2101 = vld [vmem:[#allocation20 + $0x8] sm:$0xff]
        %v2102 = vld [vmem:[#allocation20 + $0x10] sm:$0xff]
        %v2103 = vld [vmem:[#allocation20 + $0x18] sm:$0xff]
        %v2104 = vld [vmem:[#allocation22] sm:$0x1]
        %v2106 = vlaneseq
        %v2107 = vshrl.u32 %v2106, 7
        %v2108 = vsub.s32 0, %v2107
        %v2109 = vrot.slane %v2104, %v2108
        %v2112 = vsel %vm859, %v2098, 0
        %v2115 = vsel %vm859, %v2099, 0
        %2117 = vmatprep.subr.mxu0 0.0
        %2118 = vmatpush1.msra.mxu0 %v2100
        %2119 = vmatprep.subr.mxu0 0.0
        %2120 = vmatpush1.msra.mxu0 %v2101
        %2121 = vmatprep.subr.mxu0 0.0
        %2122 = vmatpush1.msra.mxu0 %v2102
        %2123 = vmatprep.subr.mxu0 0.0
        %2124 = vmatpush1.msra.mxu0 %v2103
        %2125 = vmatprep.subr.mxu0 0.0
        %2126 = vmatpush1.msra.mxu0 0.0
        %2127 = vmatprep.subr.mxu0 0.0
        %2128 = vmatpush1.msra.mxu0 0.0
        %2129 = vmatprep.subr.mxu0 0.0
        %2130 = vmatpush1.msra.mxu0 0.0
        %2131 = vmatprep.subr.mxu0 0.0
        %2132 = vmatpush1.msra.mxu0 0.0
        %2133 = vmatprep.subr.mxu0 0.0
        %2134 = vmatpush1.msra.mxu0 0.0
        %2135 = vmatprep.subr.mxu0 0.0
        %2136 = vmatpush1.msra.mxu0 0.0
        %2137 = vmatprep.subr.mxu0 0.0
        %2138 = vmatpush1.msra.mxu0 0.0
        %2139 = vmatprep.subr.mxu0 0.0
        %2140 = vmatpush1.msra.mxu0 0.0
        %2141 = vmatprep.subr.mxu0 0.0
        %2142 = vmatpush1.msra.mxu0 0.0
        %2143 = vmatprep.subr.mxu0 0.0
        %2144 = vmatpush1.msra.mxu0 0.0
        %2145 = vmatprep.subr.mxu0 0.0
        %2146 = vmatpush1.msra.mxu0 0.0
        %2147 = vmatprep.subr.mxu0 0.0
        %2148 = vmatpush1.msra.mxu0 0.0
        %2149 = vmatprep.subr.mxu0 0.0
        %2150 = vmatpush1.msra.mxu0 0.0
        %2151 = vmatprep.subr.mxu0 0.0
        %2152 = vmatpush1.msra.mxu0 0.0
        %2153 = vmatprep.subr.mxu0 0.0
        %2154 = vmatpush1.msra.mxu0 0.0
        %2155 = vmatprep.subr.mxu0 0.0
        %2156 = vmatpush1.msra.mxu0 0.0
        %2157 = vmatprep.subr.mxu0 0.0
        %2158 = vmatpush1.msra.mxu0 0.0
        %2159 = vmatprep.subr.mxu0 0.0
        %2160 = vmatpush1.msra.mxu0 0.0
        %2161 = vmatprep.subr.mxu0 0.0
        %2162 = vmatpush1.msra.mxu0 0.0
        %2163 = vmatprep.subr.mxu0 0.0
        %2164 = vmatpush1.msra.mxu0 0.0
        %2165 = vmatprep.subr.mxu0 0.0
        %2166 = vmatpush1.msra.mxu0 0.0
        %2167 = vmatprep.subr.mxu0 0.0
        %2168 = vmatpush1.msra.mxu0 0.0
        %2169 = vmatprep.subr.mxu0 0.0
        %2170 = vmatpush1.msra.mxu0 0.0
        %2171 = vmatprep.subr.mxu0 0.0
        %2172 = vmatpush1.msra.mxu0 0.0
        %2173 = vmatprep.subr.mxu0 0.0
        %2174 = vmatpush1.msra.mxu0 0.0
        %2175 = vmatprep.subr.mxu0 0.0
        %2176 = vmatpush1.msra.mxu0 0.0
        %2177 = vmatprep.subr.mxu0 0.0
        %2178 = vmatpush1.msra.mxu0 0.0
        %2179 = vmatprep.subr.mxu0 0.0
        %2180 = vmatpush1.msra.mxu0 0.0
        %2181 = vmatprep.mubr.f32.mxu0 0.0
        %2182 = vmatmul.mubr.f32.gmra.mrb[0].mxu0 %v2112
        %v2183 = vpop.f32.mrb[0].mxu0
        %v2184 = vadd.f32 %v2109, %v2183
        %v2185 = vpop.f32.mrb[0].mxu0
        %2186 = vmatprep.mubr.f32.mxu0 0.0
        %2187 = vmatmul.mubr.f32.gmra.mrb[0].mxu0 %v2115
        %v2188 = vpop.f32.mrb[0].mxu0
        %v2189 = vadd.f32 %v2109, %v2188
        %v2190 = vpop.f32.mrb[0].mxu0
        %2191 = vdwg.mxu0
        %v2192 = vmul.f32 %v2184, 0.5
        %v2193 = vmul.f32 %v2189, 0.5
        %v2194 = vmul.f32 %v2184, 0.70710677
        %v2195 = vmul.f32 %v2189, 0.70710677
        %v2196 = vand.u32 2147483647, %v2194
        %v2197 = vand.u32 2147483647, %v2195
        %v2198 = vmul.f32 %v2196, 0.3275911
        %v2199 = vmul.f32 %v2197, 0.3275911
        %v2200 = vadd.f32 %v2198, 1.0
        %v2201 = vadd.f32 %v2199, 1.0
        %v2202 = vrcp.pop %v2200
        %v2203 = vmul.f32 1.0, %v2202
        %v2204 = vrcp.pop %v2201
        %v2205 = vmul.f32 1.0, %v2204
        %v2206 = vmul.f32 %v2203, 1.0614054
        %v2207 = vmul.f32 %v2205, 1.0614054
        %v2208 = vadd.f32 %v2206, -1.4531521
        %v2209 = vadd.f32 %v2207, -1.4531521
        %v2210 = vmul.f32 %v2208, %v2203
        %v2211 = vmul.f32 %v2209, %v2205
        %v2212 = vadd.f32 %v2210, 1.4214138
        %v2213 = vadd.f32 %v2211, 1.4214138
        %v2214 = vmul.f32 %v2212, %v2203
        %v2215 = vmul.f32 %v2213, %v2205
        %v2216 = vadd.f32 %v2214, -0.28449672
        %v2217 = vadd.f32 %v2215, -0.28449672
        %v2218 = vmul.f32 %v2216, %v2203
        %v2219 = vmul.f32 %v2217, %v2205
        %v2220 = vadd.f32 %v2218, 0.2548296
        %v2221 = vadd.f32 %v2219, 0.2548296
        %v2222 = vmul.f32 %v2220, %v2203
        %v2223 = vmul.f32 %v2221, %v2205
        %v2224 = vsub.f32 0.0, %v2196
        %v2225 = vsub.f32 0.0, %v2197
        %v2226 = vmul.f32 %v2224, %v2196
        %v2227 = vmul.f32 %v2225, %v2197
        %v2228 = vmul.f32 %v2226, 1.442695
        %v2229 = vpow.pop %v2228
        %v2230 = vmul.f32 %v2227, 1.442695
        %v2231 = vpow.pop %v2230
        %v2232 = vmul.f32 %v2222, %v2229
        %v2233 = vmul.f32 %v2223, %v2231
        %v2234 = vsub.f32 1.0, %v2232
        %v2235 = vsub.f32 1.0, %v2233
        %vm2236 = vcmp.lt.f32.partialorder %v2194, 0.0
        %vm2237 = vcmp.lt.f32.partialorder %v2195, 0.0
        %v2238 = vsub.f32 0.0, %v2234
        %v2239 = vsub.f32 0.0, %v2235
        %v2240 = vsel %vm2236, %v2238, %v2234
        %v2241 = vsel %vm2237, %v2239, %v2235
        %v2242 = vadd.f32 %v2240, 1.0
        %v2243 = vadd.f32 %v2241, 1.0
        %v2244 = vmul.f32 %v2192, %v2242
        %v2245 = vmul.f32 %v2193, %v2243
        %v2246 = vld [vmem:[#allocation23] sm:$0xff]
        %v2247 = vld [vmem:[#allocation23 + $0x8] sm:$0xff]
        %v2248 = vld [vmem:[#allocation23 + $0x10] sm:$0xff]
        %v2249 = vld [vmem:[#allocation23 + $0x18] sm:$0xff]
        %v2250 = vld [vmem:[#allocation23 + $0x20] sm:$0xff]
        %v2251 = vld [vmem:[#allocation23 + $0x28] sm:$0xff]
        %v2252 = vld [vmem:[#allocation23 + $0x30] sm:$0xff]
        %v2253 = vld [vmem:[#allocation23 + $0x38] sm:$0xff]
        %v2254 = vld [vmem:[#allocation23 + $0x40] sm:$0xff]
        %v2255 = vld [vmem:[#allocation23 + $0x48] sm:$0xff]
        %v2256 = vld [vmem:[#allocation23 + $0x50] sm:$0xff]
        %v2257 = vld [vmem:[#allocation23 + $0x58] sm:$0xff]
        %v2258 = vld [vmem:[#allocation23 + $0x60] sm:$0xff]
        %v2259 = vld [vmem:[#allocation23 + $0x68] sm:$0xff]
        %v2260 = vld [vmem:[#allocation23 + $0x70] sm:$0xff]
        %v2261 = vld [vmem:[#allocation23 + $0x78] sm:$0xff]
        %2262 = vmatprep.subr.mxu0 0.0
        %2263 = vmatpush1.msra.mxu0 %v2246
        %2264 = vmatprep.subr.mxu0 0.0
        %2265 = vmatpush1.msra.mxu0 %v2247
        %2266 = vmatprep.subr.mxu0 0.0
        %2267 = vmatpush1.msra.mxu0 %v2248
        %2268 = vmatprep.subr.mxu0 0.0
        %2269 = vmatpush1.msra.mxu0 %v2249
        %2270 = vmatprep.subr.mxu0 0.0
        %2271 = vmatpush1.msra.mxu0 %v2250
        %2272 = vmatprep.subr.mxu0 0.0
        %2273 = vmatpush1.msra.mxu0 %v2251
        %2274 = vmatprep.subr.mxu0 0.0
        %2275 = vmatpush1.msra.mxu0 %v2252
        %2276 = vmatprep.subr.mxu0 0.0
        %2277 = vmatpush1.msra.mxu0 %v2253
        %2278 = vmatprep.subr.mxu0 0.0
        %2279 = vmatpush1.msra.mxu0 %v2254
        %2280 = vmatprep.subr.mxu0 0.0
        %2281 = vmatpush1.msra.mxu0 %v2255
        %2282 = vmatprep.subr.mxu0 0.0
        %2283 = vmatpush1.msra.mxu0 %v2256
        %2284 = vmatprep.subr.mxu0 0.0
        %2285 = vmatpush1.msra.mxu0 %v2257
        %2286 = vmatprep.subr.mxu0 0.0
        %2287 = vmatpush1.msra.mxu0 %v2258
        %2288 = vmatprep.subr.mxu0 0.0
        %2289 = vmatpush1.msra.mxu0 %v2259
        %2290 = vmatprep.subr.mxu0 0.0
        %2291 = vmatpush1.msra.mxu0 %v2260
        %2292 = vmatprep.subr.mxu0 0.0
        %2293 = vmatpush1.msra.mxu0 %v2261
        %2294 = vmatprep.subr.mxu0 0.0
        %2295 = vmatpush1.msra.mxu0 0.0
        %2296 = vmatprep.subr.mxu0 0.0
        %2297 = vmatpush1.msra.mxu0 0.0
        %2298 = vmatprep.subr.mxu0 0.0
        %2299 = vmatpush1.msra.mxu0 0.0
        %2300 = vmatprep.subr.mxu0 0.0
        %2301 = vmatpush1.msra.mxu0 0.0
        %2302 = vmatprep.subr.mxu0 0.0
        %2303 = vmatpush1.msra.mxu0 0.0
        %2304 = vmatprep.subr.mxu0 0.0
        %2305 = vmatpush1.msra.mxu0 0.0
        %2306 = vmatprep.subr.mxu0 0.0
        %2307 = vmatpush1.msra.mxu0 0.0
        %2308 = vmatprep.subr.mxu0 0.0
        %2309 = vmatpush1.msra.mxu0 0.0
        %2310 = vmatprep.subr.mxu0 0.0
        %2311 = vmatpush1.msra.mxu0 0.0
        %2312 = vmatprep.subr.mxu0 0.0
        %2313 = vmatpush1.msra.mxu0 0.0
        %2314 = vmatprep.subr.mxu0 0.0
        %2315 = vmatpush1.msra.mxu0 0.0
        %2316 = vmatprep.subr.mxu0 0.0
        %2317 = vmatpush1.msra.mxu0 0.0
        %2318 = vmatprep.subr.mxu0 0.0
        %2319 = vmatpush1.msra.mxu0 0.0
        %2320 = vmatprep.subr.mxu0 0.0
        %2321 = vmatpush1.msra.mxu0 0.0
        %2322 = vmatprep.subr.mxu0 0.0
        %2323 = vmatpush1.msra.mxu0 0.0
        %2324 = vmatprep.subr.mxu0 0.0
        %2325 = vmatpush1.msra.mxu0 0.0
        %2326 = vmatprep.mubr.f32.mxu0 0.0
        %2327 = vmatmul.mubr.f32.gmra.mrb[0].mxu0 %v2244
        %v2328 = vpop.f32.mrb[0].mxu0
        %v2329 = vadd.f32 0.0, %v2328
        %v2330 = vpop.f32.mrb[0].mxu0
        %2331 = vmatprep.mubr.f32.mxu0 0.0
        %2332 = vmatmul.mubr.f32.gmra.mrb[0].mxu0 %v2245
        %v2333 = vpop.f32.mrb[0].mxu0
        %v2334 = vadd.f32 0.0, %v2333
        %v2335 = vpop.f32.mrb[0].mxu0
        %2336 = vdwg.mxu0
        %v2337 = vadd.f32 %v2054, %v2329
        %v2338 = vadd.f32 %v2055, %v2334
        %v2339 = vld [vmem:[#allocation25] sm:$0x1]
        %v2341 = vlaneseq
        %v2342 = vshrl.u32 %v2341, 7
        %v2343 = vsub.s32 0, %v2342
        %v2344 = vrot.slane %v2339, %v2343
        %v2346 = vadd.f32 %v2337, %v2344
        %v2347 = vadd.f32 %v2338, %v2344
        %2348 = vst.msk [vmem:[%s691] sm:$0xff] %vm859, %v2346
        %2349 = vst.msk [vmem:[%s698] sm:$0xff] %vm859, %v2347
        %v2350 = vadd.f32 %v2346, %v2347
        %2351 = vst.msk [vmem:[%s705] sm:$0xff] %vm859, %v2350
        %s2352 = sand.u32 %s342, 1
        %s2353 = scalar_lea.sflag [#allocation7], %s2352
        %s2354 = sand.u32 %s342, 1
        %s2355 = smul.addr %s2354, 8
        %s2356 = scalar_lea.vmem [#allocation26], %s2355
        %s2357 = sand.u32 %s42, 1
        %s2358 = scalar_lea.sflag [#allocation28], %s2357
        %s2359 = sand.u32 %s370, 1
        %s2360 = smul.addr %s2359, 8
        %s2361 = scalar_lea.vmem [#allocation27], %s2360
        %s2362 = sand.u32 %s42, 1
        %s2363 = scalar_lea.sflag [#allocation28], %s2362
        %s2364 = sand.u32 %s398, 1
        %s2365 = smul.addr %s2364, 8
        %s2366 = scalar_lea.vmem [#allocation29], %s2365
        // Predicated region
        $region129: #{tpu_custom_call.1} parent=71 // pred_check
          %p2367 = pneg %p352
        $region130: #{tpu_custom_call.1} parent=71 // pred_check_branch
          %2369 = sbr.rel (%p2367) target = $region132
        $region131: #{tpu_custom_call.1} parent=71 // pred_region
          %s2371 = ssub.s32 128, 128
          %2372 = vsyncadd %s2353, %s2371
          %s2373 = sadd.s32 %s47, %s46
          %s2374 = smul.addr %s2373, 128
          %s2375 = scalar_lea.hbm %s13, %s2374
          %s2377 = sshll.u32 %s2356, 4
          %s2378 = int_to_ptr.vmem [resolvable:$true] %s2377
          %2380 = dma.vmem_to_hbm [thread:$0]  %s2378, 128, %s2375, %s2353
        $region132: #{tpu_custom_call.1} parent=71 // pred_fallthru
          _
        // Predicated region
        $region133: #{tpu_custom_call.1} parent=71 // pred_check
          %p2381 = pneg %p380
        $region134: #{tpu_custom_call.1} parent=71 // pred_check_branch
          %2383 = sbr.rel (%p2381) target = $region136
        $region135: #{tpu_custom_call.1} parent=71 // pred_region
          %s2385 = ssub.s32 128, 128
          %2386 = vsyncadd %s2358, %s2385
          %s2387 = sadd.s32 %s47, %s46
          %s2388 = smul.addr %s2387, 128
          %s2389 = scalar_lea.hbm %s14, %s2388
          %s2391 = sshll.u32 %s2361, 4
          %s2392 = int_to_ptr.vmem [resolvable:$true] %s2391
          %2394 = dma.vmem_to_hbm [thread:$0]  %s2392, 128, %s2389, %s2358
        $region136: #{tpu_custom_call.1} parent=71 // pred_fallthru
          _
        // Predicated region
        $region137: #{tpu_custom_call.1} parent=71 // pred_check
          %p2395 = pneg %p408
        $region138: #{tpu_custom_call.1} parent=71 // pred_check_branch
          %2397 = sbr.rel (%p2395) target = $region140
        $region139: #{tpu_custom_call.1} parent=71 // pred_region
          %s2399 = ssub.s32 128, 128
          %2400 = vsyncadd %s2363, %s2399
          %s2401 = sadd.s32 %s47, %s46
          %s2402 = smul.addr %s2401, 128
          %s2403 = scalar_lea.hbm %s15, %s2402
          %s2405 = sshll.u32 %s2366, 4
          %s2406 = int_to_ptr.vmem [resolvable:$true] %s2405
          %2408 = dma.vmem_to_hbm [thread:$0]  %s2406, 128, %s2403, %s2363
        $region140: #{tpu_custom_call.1} parent=71 // pred_fallthru
          _
      $region72: #{tpu_custom_call.1} parent=5 // pred_fallthru
        _
      %p2409 = scmp.le.s32.totalorder 2, %s37
      // Predicated region
      $region141: #{tpu_custom_call.1} parent=5 // pred_check
        %p2410 = pneg %p2409
      $region142: #{tpu_custom_call.1} parent=5 // pred_check_branch
        %2412 = sbr.rel (%p2410) target = $region144
      $region143: #{tpu_custom_call.1} parent=5 // pred_region
        %s2413 = ssub.s32 %s37, 2
        // Predicated region
        $region145: #{tpu_custom_call.1} parent=143 // pred_check
          %p2414 = pneg %p358
        $region146: #{tpu_custom_call.1} parent=143 // pred_check_branch
          %2416 = sbr.rel (%p2414) target = $region148
        $region147: #{tpu_custom_call.1} parent=143 // pred_region
          %s2417 = sand.u32 %s343, 1
          %s2418 = scalar_lea.sflag [#allocation7], %s2417
          %s2419 = sand.u32 %s343, 1
          %s2420 = smul.addr %s2419, 8
          %s2421 = scalar_lea.vmem [#allocation26], %s2420
          %2422 = dma.done %s2418, 128
        $region148: #{tpu_custom_call.1} parent=143 // pred_fallthru
          _
        // Predicated region
        $region149: #{tpu_custom_call.1} parent=143 // pred_check
          %p2423 = pneg %p386
        $region150: #{tpu_custom_call.1} parent=143 // pred_check_branch
          %2425 = sbr.rel (%p2423) target = $region152
        $region151: #{tpu_custom_call.1} parent=143 // pred_region
          %s2426 = sand.u32 %s43, 1
          %s2427 = scalar_lea.sflag [#allocation28], %s2426
          %s2428 = sand.u32 %s371, 1
          %s2429 = smul.addr %s2428, 8
          %s2430 = scalar_lea.vmem [#allocation27], %s2429
          %2431 = dma.done %s2427, 128
        $region152: #{tpu_custom_call.1} parent=143 // pred_fallthru
          _
        // Predicated region
        $region153: #{tpu_custom_call.1} parent=143 // pred_check
          %p2432 = pneg %p414
        $region154: #{tpu_custom_call.1} parent=143 // pred_check_branch
          %2434 = sbr.rel (%p2432) target = $region156
        $region155: #{tpu_custom_call.1} parent=143 // pred_region
          %s2435 = sand.u32 %s43, 1
          %s2436 = scalar_lea.sflag [#allocation28], %s2435
          %s2437 = sand.u32 %s399, 1
          %s2438 = smul.addr %s2437, 8
          %s2439 = scalar_lea.vmem [#allocation29], %s2438
          %2440 = dma.done %s2436, 128
        $region156: #{tpu_custom_call.1} parent=143 // pred_fallthru
          _
      $region144: #{tpu_custom_call.1} parent=5 // pred_fallthru
        _
    $region6: #{tpu_custom_call.1} parent=1 // loop_footer
      %s41 = sadd.s32 1, %s37
    $region7: #{tpu_custom_call.1} parent=1 // loop_footer_branch
      %36 = sbr.rel target = $region3
    $region8: #{tpu_custom_call.1} parent=1 // loop_exit
      _
    %2441 = vsyncpa [#allocation6], 1
    %s2442 = scalar_lea.sflag [#allocation6], 1
    %2443 = vsyncpa %s2442, 1
    %2444 = vsyncpa [#allocation9], 1
    %2445 = vsyncpa [#allocation12], 1
    %2446 = vsyncpa [#allocation15], 1
    %2447 = vsyncpa [#allocation18], 1
    %2448 = vsyncpa [#allocation21], 1
    %2449 = vsyncpa [#allocation24], 1
    %2450 = vsyncpa [#allocation7], 1
    %s2451 = scalar_lea.sflag [#allocation7], 1
    %2452 = vsyncpa %s2451, 1
    %2453 = vsyncpa [#allocation28], 1
    %s2454 = scalar_lea.sflag [#allocation28], 1
    %2455 = vsyncpa %s2454, 1

</llo_original>
